<compile_context>
chip_gen: v5e
topology: v5e:2x2
jax: 0.10.0
libtpu: 0.0.40
codegen_flags: <defaults>
</compile_context>

<pallas_src>
import jax
import jax.numpy as jnp
from jax.experimental import pallas as pl
from jax.experimental.pallas import tpu as pltpu

LEAKY_SLOPE = 0.1
BN_EPS = 1e-5


def _leaky(x):
    return jnp.where(x > 0, x, LEAKY_SLOPE * x)


# --------------------------------------------------------------------------
# Tiling helpers.
# --------------------------------------------------------------------------
def _pick_tile_h(H, W):
    """Row-tile height for the fuse kernel: a multiple of 4 dividing H whose
    flattened low-res block stays (8,128)-aligned; prefers >=2 grid steps."""
    w4 = W // 4
    valid = [th for th in range(4, H + 1, 4)
             if H % th == 0 and (th == H or ((th // 4) * w4) % 8 == 0)]
    if not valid:
        return H
    for th in valid:
        if H // th >= 2 and th * W >= 128:
            return th
    return valid[-1]


def _pick_tile_rows(H):
    """Row-tile height for the 3x3 expand conv (divides H, >=2 grid steps)."""
    for th in (32, 16, 8, 4, 2, 1):
        if H % th == 0 and H // th >= 2:
            return th
    return H


def _upsample_matrix(th, w, r):
    """[th*w, (th//r)*(w//r)] 0/1 matrix: nearest-neighbour rx upsample of a
    row-major-flattened (th//r, w//r) tile to a flattened (th, w) tile."""
    hh = jnp.arange(th * w) // w
    ww = jnp.arange(th * w) % w
    src = (hh // r) * (w // r) + (ww // r)
    cols = jnp.arange((th // r) * (w // r))
    return (src[:, None] == cols[None, :]).astype(jnp.float32)


# --------------------------------------------------------------------------
# Kernel 1: fused compress -> in-VMEM nearest upsample -> weight branches ->
#           weight_levels -> softmax -> weighted fusion.
# Grid: (N, H // TH), both axes parallel.
# --------------------------------------------------------------------------
def _fuse_kernel(x0_ref, x1_ref, x2_ref, u0_ref, u1_ref,
                 wc0_ref, bc0_ref, wc1_ref, bc1_ref,
                 wblk_ref, bblk_ref, wwl_ref, bwl_ref, o_ref):
    f32 = jnp.float32

    def mmbf(a, w_ref):  # bf16 MXU inputs, f32 accumulation
        return jnp.dot(a.astype(jnp.bfloat16), w_ref[...],
                       preferred_element_type=f32)

    # compress_level_{0,1}: 1x1 conv (BN scale folded into weights) + leaky,
    # at LOW resolution.
    l0s = _leaky(mmbf(x0_ref[0], wc0_ref) + bc0_ref[...])       # [T4, C]
    l1s = _leaky(mmbf(x1_ref[0], wc1_ref) + bc1_ref[...])       # [T2, C]
    l2 = x2_ref[0]                                              # [T,  C]

    # Nearest 4x / 2x upsample, entirely in VMEM, as an exact 0/1 selection
    # matmul (no HBM round trip, no sublane-interleave relayouts).
    l0 = jnp.dot(u0_ref[...], l0s, preferred_element_type=f32)  # [T, C]
    l1 = jnp.dot(u1_ref[...], l1s, preferred_element_type=f32)  # [T, C]

    # weight_level_{0,1,2} collapsed into one block-diagonal matmul,
    # then weight_levels (1x1 conv with bias).
    xcat = jnp.concatenate([l0, l1, l2], axis=-1)               # [T, 3C]
    v = _leaky(mmbf(xcat, wblk_ref) + bblk_ref[...])            # [T, 3*cc]
    logits = (jnp.dot(v, wwl_ref[...], preferred_element_type=f32)
              + bwl_ref[...])                                   # [T, 3]

    # softmax over the 3 level logits (reciprocal on the EUP slot).
    m = jnp.max(logits, axis=-1, keepdims=True)
    e = jnp.exp(logits - m)
    sm = e * pl.reciprocal(jnp.sum(e, axis=-1, keepdims=True), approx=True)

    fused = l0 * sm[:, 0:1] + l1 * sm[:, 1:2] + l2 * sm[:, 2:3]
    o_ref[...] = fused.reshape(o_ref.shape).astype(o_ref.dtype)


def asff_fuse_compress(x0, x1, x2, p):
    """x0: [N,H/4,W/4,512], x1: [N,H/2,W/2,256], x2: [N,H,W,128] (NHWC, f32).
    Returns fused feature map [N,H,W,128]."""
    N, H, W, C = x2.shape
    _, H4, W4, C0 = x0.shape
    _, H2, W2, C1 = x1.shape
    assert (H4, W4) == (H // 4, W // 4) and (H2, W2) == (H // 2, W // 2)
    assert H % 4 == 0 and W % 8 == 0 and W % 4 == 0

    TH = _pick_tile_h(H, W)
    T, T4, T2 = TH * W, (TH // 4) * W4, (TH // 2) * W2
    S, S4, S2 = H * W, H4 * W4, H2 * W2
    cc = p["w_w0"].shape[1]

    # Flatten spatial dims (row-major) so row tiles map 1:1 across scales.
    x0f = x0.reshape(N, S4, C0)
    x1f = x1.reshape(N, S2, C1)
    x2f = x2.reshape(N, S, C)
    u0 = _upsample_matrix(TH, W, 4)                              # [T, T4]
    u1 = _upsample_matrix(TH, W, 2)                              # [T, T2]

    # Fold BN scale into conv weights; pre-cast weights to bf16.
    wc0 = (p["w_c0"] * p["s_c0"][None, :]).astype(jnp.bfloat16)  # [512,128]
    wc1 = (p["w_c1"] * p["s_c1"][None, :]).astype(jnp.bfloat16)  # [256,128]
    bc0 = p["b_c0"].reshape(1, C)
    bc1 = p["b_c1"].reshape(1, C)
    wblk = jnp.zeros((3 * C, 3 * cc), jnp.float32)
    wblk = wblk.at[0:C, 0:cc].set(p["w_w0"] * p["s_w0"][None, :])
    wblk = wblk.at[C:2 * C, cc:2 * cc].set(p["w_w1"] * p["s_w1"][None, :])
    wblk = wblk.at[2 * C:, 2 * cc:].set(p["w_w2"] * p["s_w2"][None, :])
    wblk = wblk.astype(jnp.bfloat16)                             # [384, 48]
    bblk = jnp.concatenate([p["b_w0"], p["b_w1"], p["b_w2"]]).reshape(1, 3 * cc)
    wwl = p["w_wl"]                                              # [48, 3]
    bwl = p["b_wl"].reshape(1, 3)

    grid = (N, H // TH)
    in_specs = [
        pl.BlockSpec((1, T4, C0), lambda n, i: (n, i, 0)),
        pl.BlockSpec((1, T2, C1), lambda n, i: (n, i, 0)),
        pl.BlockSpec((1, T, C), lambda n, i: (n, i, 0)),
        pl.BlockSpec((T, T4), lambda n, i: (0, 0)),
        pl.BlockSpec((T, T2), lambda n, i: (0, 0)),
        pl.BlockSpec((C0, C), lambda n, i: (0, 0)),
        pl.BlockSpec((1, C), lambda n, i: (0, 0)),
        pl.BlockSpec((C1, C), lambda n, i: (0, 0)),
        pl.BlockSpec((1, C), lambda n, i: (0, 0)),
        pl.BlockSpec((3 * C, 3 * cc), lambda n, i: (0, 0)),
        pl.BlockSpec((1, 3 * cc), lambda n, i: (0, 0)),
        pl.BlockSpec((3 * cc, 3), lambda n, i: (0, 0)),
        pl.BlockSpec((1, 3), lambda n, i: (0, 0)),
    ]
    out = pl.pallas_call(
        _fuse_kernel,
        out_shape=jax.ShapeDtypeStruct((N, S, C), jnp.float32),
        grid=grid,
        in_specs=in_specs,
        out_specs=pl.BlockSpec((1, T, C), lambda n, i: (n, i, 0)),
        compiler_params=pltpu.CompilerParams(
            dimension_semantics=("parallel", "parallel"),
            vmem_limit_bytes=32 * 1024 * 1024),
    )(x0f, x1f, x2f, u0, u1, wc0, bc0, wc1, bc1, wblk, bblk, wwl, bwl)
    return out.reshape(N, H, W, C)


# --------------------------------------------------------------------------
# Kernel 2: 3x3 stride-1 "expand" conv + folded BN + LeakyReLU.
# The 1-pixel SAME padding is folded into the kernel: a lane-concatenated
# 3-tap band [H+2, W, 3C] (halo rows/cols zeroed in-VMEM) is built once per
# image in a VMEM scratch; each row tile then does 3 aligned K=3C bf16 matmuls
# (one per dy).  Grid: (N, H // THc), ("parallel", "arbitrary") — the scratch
# band is built at i == 0 and reused for the remaining row tiles of image n.
# --------------------------------------------------------------------------
def _conv3x3_kernel(x_ref, w_ref, shift_ref, o_ref, band_ref):
    H, W, C = x_ref.shape[1], x_ref.shape[2], x_ref.shape[3]
    THc = o_ref.shape[1]
    Cout = o_ref.shape[3]
    i = pl.program_id(1)

    @pl.when(i == 0)
    def _build_band():
        x = x_ref[0]                                      # [H, W, C]
        zrow = jnp.zeros((W, 3 * C), jnp.float32)
        band_ref[0, :, :] = zrow                          # top halo row
        band_ref[H + 1, :, :] = zrow                      # bottom halo row
        # Column taps via XLU rotate + edge masking (full-width, lane-aligned
        # stores only; no unaligned sublane windows, no XLA pad op).
        col = jax.lax.broadcasted_iota(jnp.int32, (H, W, C), 1)
        xm1 = jnp.where(col >= 1, pltpu.roll(x, 1, 1), 0.0)          # x[:, w-1]
        xp1 = jnp.where(col <= W - 2, pltpu.roll(x, W - 1, 1), 0.0)  # x[:, w+1]
        band_ref[1:H + 1, :, 0 * C:1 * C] = xm1
        band_ref[1:H + 1, :, 1 * C:2 * C] = x
        band_ref[1:H + 1, :, 2 * C:3 * C] = xp1

    rs = pl.multiple_of(i * THc, THc)
    acc = jnp.zeros((THc * W, Cout), jnp.float32)
    for dy in range(3):
        patch = band_ref[pl.ds(rs + dy, THc), :, :]       # [THc, W, 3C]
        patch = patch.reshape(THc * W, 3 * C).astype(jnp.bfloat16)
        acc = acc + jnp.dot(patch, w_ref[dy],
                            preferred_element_type=jnp.float32)
    y = acc + shift_ref[...]                              # BN scale folded in w
    o_ref[...] = _leaky(y).reshape(1, THc, W, Cout).astype(o_ref.dtype)


def conv3x3_bn_leaky(x_nhwc, p):
    N, H, W, C = x_nhwc.shape
    Cout = p["w_exp"].shape[-1]
    THc = _pick_tile_rows(H)

    # Fold BN scale into the HWIO weights; reshape to per-dy [3C, Cout], bf16.
    w = (p["w_exp"] * p["s_exp"]).reshape(3, 3 * C, Cout).astype(jnp.bfloat16)
    shift = p["b_exp"].reshape(1, Cout)

    return pl.pallas_call(
        _conv3x3_kernel,
        out_shape=jax.ShapeDtypeStruct((N, H, W, Cout), jnp.float32),
        grid=(N, H // THc),
        in_specs=[
            pl.BlockSpec((1, H, W, C), lambda n, i: (n, 0, 0, 0)),
            pl.BlockSpec((3, 3 * C, Cout), lambda n, i: (0, 0, 0)),
            pl.BlockSpec((1, Cout), lambda n, i: (0, 0)),
        ],
        out_specs=pl.BlockSpec((1, THc, W, Cout), lambda n, i: (n, i, 0, 0)),
        scratch_shapes=[pltpu.VMEM((H + 2, W, 3 * C), jnp.float32)],
        compiler_params=pltpu.CompilerParams(
            dimension_semantics=("parallel", "arbitrary"),
            vmem_limit_bytes=32 * 1024 * 1024),
    )(x_nhwc, w, shift)


# --------------------------------------------------------------------------
# Full ASFF level-2 forward (Pallas path).
# --------------------------------------------------------------------------
def asff_level2_forward(x0_nchw, x1_nchw, x2_nchw, p):
    x0 = jnp.transpose(x0_nchw, (0, 2, 3, 1))   # NCHW -> NHWC
    x1 = jnp.transpose(x1_nchw, (0, 2, 3, 1))
    x2 = jnp.transpose(x2_nchw, (0, 2, 3, 1))
    fused = asff_fuse_compress(x0, x1, x2, p)   # [N, H, W, 128]
    out = conv3x3_bn_leaky(fused, p)            # [N, H, W, 128]
    return jnp.transpose(out, (0, 3, 1, 2))     # back to NCHW


# --------------------------------------------------------------------------
# Deterministic parameter construction (level=2, rfb=False -> compress_c=16,
# inter_dim=128).  BN is eval-mode, folded into (scale, shift).
# --------------------------------------------------------------------------
def make_params(key):
    ks = jax.random.split(key, 14)

    def conv_w(k, cin, cout, ksize):
        std = 1.0 / (cin * ksize * ksize) ** 0.5
        return std * jax.random.normal(k, (ksize, ksize, cin, cout), jnp.float32)

    def bn(k, c):
        k1, k2, k3, k4 = jax.random.split(k, 4)
        gamma = 1.0 + 0.1 * jax.random.normal(k1, (c,), jnp.float32)
        beta = 0.1 * jax.random.normal(k2, (c,), jnp.float32)
        mean = 0.1 * jax.random.normal(k3, (c,), jnp.float32)
        var = 1.0 + 0.1 * jax.random.uniform(k4, (c,), jnp.float32)
        scale = gamma * jax.lax.rsqrt(var + BN_EPS)
        shift = beta - mean * scale
        return scale, shift

    p = {}
    p["w_c0"] = conv_w(ks[0], 512, 128, 1).reshape(512, 128)   # compress_level_0
    p["s_c0"], p["b_c0"] = bn(ks[1], 128)
    p["w_c1"] = conv_w(ks[2], 256, 128, 1).reshape(256, 128)   # compress_level_1
    p["s_c1"], p["b_c1"] = bn(ks[3], 128)
    p["w_w0"] = conv_w(ks[4], 128, 16, 1).reshape(128, 16)     # weight_level_0
    p["s_w0"], p["b_w0"] = bn(ks[5], 16)
    p["w_w1"] = conv_w(ks[6], 128, 16, 1).reshape(128, 16)     # weight_level_1
    p["s_w1"], p["b_w1"] = bn(ks[7], 16)
    p["w_w2"] = conv_w(ks[8], 128, 16, 1).reshape(128, 16)     # weight_level_2
    p["s_w2"], p["b_w2"] = bn(ks[9], 16)
    p["w_wl"] = conv_w(ks[10], 48, 3, 1).reshape(48, 3)        # weight_levels
    p["b_wl"] = 0.1 * jax.random.normal(ks[11], (3,), jnp.float32)
    p["w_exp"] = conv_w(ks[12], 128, 128, 3)                   # expand, HWIO
    p["s_exp"], p["b_exp"] = bn(ks[13], 128)
    return p


# --------------------------------------------------------------------------
# Pure-JAX f32 reference (same folded-BN semantics) for a correctness check.
# --------------------------------------------------------------------------
def ref_forward(x0, x1, x2, p):
    def c1(x, w, s, b):
        return _leaky(jnp.einsum("nhwc,co->nhwo", x, w) * s + b)

    def c3(x, w, s, b):
        y = jax.lax.conv_general_dilated(
            x, w, (1, 1), "SAME",
            dimension_numbers=("NHWC", "HWIO", "NHWC"))
        return _leaky(y * s + b)

    l0 = c1(x0, p["w_c0"], p["s_c0"], p["b_c0"])
    l0 = jnp.repeat(jnp.repeat(l0, 4, axis=1), 4, axis=2)
    l1 = c1(x1, p["w_c1"], p["s_c1"], p["b_c1"])
    l1 = jnp.repeat(jnp.repeat(l1, 2, axis=1), 2, axis=2)
    l2 = x2
    v0 = c1(l0, p["w_w0"], p["s_w0"], p["b_w0"])
    v1 = c1(l1, p["w_w1"], p["s_w1"], p["b_w1"])
    v2 = c1(l2, p["w_w2"], p["s_w2"], p["b_w2"])
    v = jnp.concatenate([v0, v1, v2], axis=-1)
    logits = jnp.einsum("nhwc,co->nhwo", v, p["w_wl"]) + p["b_wl"]
    sm = jax.nn.softmax(logits, axis=-1)
    fused = l0 * sm[..., 0:1] + l1 * sm[..., 1:2] + l2 * sm[..., 2:3]
    return c3(fused, p["w_exp"], p["s_exp"], p["b_exp"])


if __name__ == "__main__":
    key = jax.random.PRNGKey(0)
    k0, k1, k2, kp = jax.random.split(key, 4)
    # level=2: x_level_0 has 512 ch at H/4, x_level_1 256 ch at H/2, x_level_2 128 ch at H
    x0 = jax.random.normal(k0, (2, 512, 4, 4), jnp.float32)
    x1 = jax.random.normal(k1, (2, 256, 8, 8), jnp.float32)
    x2 = jax.random.normal(k2, (2, 128, 16, 16), jnp.float32)
    params = make_params(kp)

    fwd = jax.jit(asff_level2_forward)
    out = jax.block_until_ready(fwd(x0, x1, x2, params))
    assert out.shape == (2, 128, 16, 16), out.shape

    ref = ref_forward(jnp.transpose(x0, (0, 2, 3, 1)),
                      jnp.transpose(x1, (0, 2, 3, 1)),
                      jnp.transpose(x2, (0, 2, 3, 1)), params)
    ref = jnp.transpose(ref, (0, 3, 1, 2))
    # bf16 MXU inputs + approx softmax reciprocal vs. a pure-f32 reference:
    # check max-abs error relative to the reference's dynamic range.
    max_err = float(jnp.max(jnp.abs(out - ref)))
    rel_err = max_err / (float(jnp.max(jnp.abs(ref))) + 1e-6)
    assert rel_err < 5e-2, f"max abs err {max_err}, rel {rel_err}"

    print("KERNEL_OK")
</pallas_src>

<mosaic_0001>
module attributes {stable_mosaic.version = 11 : i64} {
  func.func @_fuse_kernel(%arg0: i32, %arg1: i32, %arg2: memref<1x8x512xf32, #tpu.memory_space<vmem>>, %arg3: memref<1x32x256xf32, #tpu.memory_space<vmem>>, %arg4: memref<1x128x128xf32, #tpu.memory_space<vmem>>, %arg5: memref<128x8xf32, #tpu.memory_space<vmem>>, %arg6: memref<128x32xf32, #tpu.memory_space<vmem>>, %arg7: memref<512x128xbf16, #tpu.memory_space<vmem>>, %arg8: memref<1x128xf32, #tpu.memory_space<vmem>>, %arg9: memref<256x128xbf16, #tpu.memory_space<vmem>>, %arg10: memref<1x128xf32, #tpu.memory_space<vmem>>, %arg11: memref<384x48xbf16, #tpu.memory_space<vmem>>, %arg12: memref<1x48xf32, #tpu.memory_space<vmem>>, %arg13: memref<48x3xf32, #tpu.memory_space<vmem>>, %arg14: memref<1x3xf32, #tpu.memory_space<vmem>>, %arg15: memref<1x128x128xf32, #tpu.memory_space<vmem>>) attributes {dimension_semantics = [#tpu.dimension_semantics<parallel>, #tpu.dimension_semantics<parallel>], iteration_bounds = array<i64: 2, 2>, scalar_prefetch = 0 : i64, scratch_operands = 0 : i64, tpu.core_type = #tpu.core_type<tc>, window_params = [{transform_indices = @transform_0, window_bounds = array<i64: 1, 8, 512>}, {transform_indices = @transform_1, window_bounds = array<i64: 1, 32, 256>}, {transform_indices = @transform_2, window_bounds = array<i64: 1, 128, 128>}, {pipeline_mode = #tpu.pipeline_mode<synchronous>, transform_indices = @transform_3, window_bounds = array<i64: 128, 8>}, {pipeline_mode = #tpu.pipeline_mode<synchronous>, transform_indices = @transform_4, window_bounds = array<i64: 128, 32>}, {pipeline_mode = #tpu.pipeline_mode<synchronous>, transform_indices = @transform_5, window_bounds = array<i64: 512, 128>}, {pipeline_mode = #tpu.pipeline_mode<synchronous>, transform_indices = @transform_6, window_bounds = array<i64: 1, 128>}, {pipeline_mode = #tpu.pipeline_mode<synchronous>, transform_indices = @transform_7, window_bounds = array<i64: 256, 128>}, {pipeline_mode = #tpu.pipeline_mode<synchronous>, transform_indices = @transform_8, window_bounds = array<i64: 1, 128>}, {pipeline_mode = #tpu.pipeline_mode<synchronous>, transform_indices = @transform_9, window_bounds = array<i64: 384, 48>}, {pipeline_mode = #tpu.pipeline_mode<synchronous>, transform_indices = @transform_10, window_bounds = array<i64: 1, 48>}, {pipeline_mode = #tpu.pipeline_mode<synchronous>, transform_indices = @transform_11, window_bounds = array<i64: 48, 3>}, {pipeline_mode = #tpu.pipeline_mode<synchronous>, transform_indices = @transform_12, window_bounds = array<i64: 1, 3>}, {transform_indices = @transform_13, window_bounds = array<i64: 1, 128, 128>}]} {
    %c0 = arith.constant 0 : index
    %c0_0 = arith.constant 0 : index
    %c0_1 = arith.constant 0 : index
    %0 = vector.load %arg2[%c0, %c0_0, %c0_1] : memref<1x8x512xf32, #tpu.memory_space<vmem>>, vector<1x8x512xf32>
    %1 = vector.shape_cast %0 : vector<1x8x512xf32> to vector<8x512xf32>
    %2 = arith.truncf %1 : vector<8x512xf32> to vector<8x512xbf16>
    %c0_2 = arith.constant 0 : index
    %c0_3 = arith.constant 0 : index
    %3 = vector.load %arg7[%c0_2, %c0_3] : memref<512x128xbf16, #tpu.memory_space<vmem>>, vector<512x128xbf16>
    %cst = arith.constant dense<0.000000e+00> : vector<8x128xf32>
    %4 = tpu.matmul %2, %3, %cst {dimension_numbers = #tpu.dot_dimension_numbers<[1], [0], [0], [1], [0, 0, 1, 1], [], []>} : vector<8x512xbf16>, vector<512x128xbf16>, vector<8x128xf32> -> vector<8x128xf32>
    %c0_4 = arith.constant 0 : index
    %c0_5 = arith.constant 0 : index
    %5 = vector.load %arg8[%c0_4, %c0_5] : memref<1x128xf32, #tpu.memory_space<vmem>>, vector<1x128xf32>
    %6 = vector.broadcast %5 : vector<1x128xf32> to vector<8x128xf32>
    %7 = arith.addf %4, %6 : vector<8x128xf32>
    %cst_6 = arith.constant 0.000000e+00 : f32
    %8 = vector.broadcast %cst_6 : f32 to vector<8x128xf32>
    %9 = arith.cmpf ogt, %7, %8 : vector<8x128xf32>
    %cst_7 = arith.constant 1.000000e-01 : f32
    %10 = vector.broadcast %cst_7 : f32 to vector<8x128xf32>
    %11 = arith.mulf %10, %7 : vector<8x128xf32>
    %12 = arith.select %9, %7, %11 : vector<8x128xi1>, vector<8x128xf32>
    %c0_8 = arith.constant 0 : index
    %c0_9 = arith.constant 0 : index
    %c0_10 = arith.constant 0 : index
    %13 = vector.load %arg3[%c0_8, %c0_9, %c0_10] : memref<1x32x256xf32, #tpu.memory_space<vmem>>, vector<1x32x256xf32>
    %14 = vector.shape_cast %13 : vector<1x32x256xf32> to vector<32x256xf32>
    %15 = arith.truncf %14 : vector<32x256xf32> to vector<32x256xbf16>
    %c0_11 = arith.constant 0 : index
    %c0_12 = arith.constant 0 : index
    %16 = vector.load %arg9[%c0_11, %c0_12] : memref<256x128xbf16, #tpu.memory_space<vmem>>, vector<256x128xbf16>
    %cst_13 = arith.constant dense<0.000000e+00> : vector<32x128xf32>
    %17 = tpu.matmul %15, %16, %cst_13 {dimension_numbers = #tpu.dot_dimension_numbers<[1], [0], [0], [1], [0, 0, 1, 1], [], []>} : vector<32x256xbf16>, vector<256x128xbf16>, vector<32x128xf32> -> vector<32x128xf32>
    %c0_14 = arith.constant 0 : index
    %c0_15 = arith.constant 0 : index
    %18 = vector.load %arg10[%c0_14, %c0_15] : memref<1x128xf32, #tpu.memory_space<vmem>>, vector<1x128xf32>
    %19 = vector.broadcast %18 : vector<1x128xf32> to vector<32x128xf32>
    %20 = arith.addf %17, %19 : vector<32x128xf32>
    %cst_16 = arith.constant 0.000000e+00 : f32
    %21 = vector.broadcast %cst_16 : f32 to vector<32x128xf32>
    %22 = arith.cmpf ogt, %20, %21 : vector<32x128xf32>
    %cst_17 = arith.constant 1.000000e-01 : f32
    %23 = vector.broadcast %cst_17 : f32 to vector<32x128xf32>
    %24 = arith.mulf %23, %20 : vector<32x128xf32>
    %25 = arith.select %22, %20, %24 : vector<32x128xi1>, vector<32x128xf32>
    %c0_18 = arith.constant 0 : index
    %c0_19 = arith.constant 0 : index
    %c0_20 = arith.constant 0 : index
    %26 = vector.load %arg4[%c0_18, %c0_19, %c0_20] : memref<1x128x128xf32, #tpu.memory_space<vmem>>, vector<1x128x128xf32>
    %27 = vector.shape_cast %26 : vector<1x128x128xf32> to vector<128x128xf32>
    %c0_21 = arith.constant 0 : index
    %c0_22 = arith.constant 0 : index
    %28 = vector.load %arg5[%c0_21, %c0_22] : memref<128x8xf32, #tpu.memory_space<vmem>>, vector<128x8xf32>
    %cst_23 = arith.constant dense<0.000000e+00> : vector<128x128xf32>
    %29 = tpu.matmul %28, %12, %cst_23 {dimension_numbers = #tpu.dot_dimension_numbers<[1], [0], [0], [1], [0, 0, 1, 1], [], []>} : vector<128x8xf32>, vector<8x128xf32>, vector<128x128xf32> -> vector<128x128xf32>
    %c0_24 = arith.constant 0 : index
    %c0_25 = arith.constant 0 : index
    %30 = vector.load %arg6[%c0_24, %c0_25] : memref<128x32xf32, #tpu.memory_space<vmem>>, vector<128x32xf32>
    %cst_26 = arith.constant dense<0.000000e+00> : vector<128x128xf32>
    %31 = tpu.matmul %30, %25, %cst_26 {dimension_numbers = #tpu.dot_dimension_numbers<[1], [0], [0], [1], [0, 0, 1, 1], [], []>} : vector<128x32xf32>, vector<32x128xf32>, vector<128x128xf32> -> vector<128x128xf32>
    %32 = tpu.concatenate %29, %31, %27 in 1 : vector<128x128xf32>, vector<128x128xf32>, vector<128x128xf32> -> vector<128x384xf32>
    %33 = arith.truncf %32 : vector<128x384xf32> to vector<128x384xbf16>
    %c0_27 = arith.constant 0 : index
    %c0_28 = arith.constant 0 : index
    %34 = vector.load %arg11[%c0_27, %c0_28] : memref<384x48xbf16, #tpu.memory_space<vmem>>, vector<384x48xbf16>
    %cst_29 = arith.constant dense<0.000000e+00> : vector<128x48xf32>
    %35 = tpu.matmul %33, %34, %cst_29 {dimension_numbers = #tpu.dot_dimension_numbers<[1], [0], [0], [1], [0, 0, 1, 1], [], []>} : vector<128x384xbf16>, vector<384x48xbf16>, vector<128x48xf32> -> vector<128x48xf32>
    %c0_30 = arith.constant 0 : index
    %c0_31 = arith.constant 0 : index
    %36 = vector.load %arg12[%c0_30, %c0_31] : memref<1x48xf32, #tpu.memory_space<vmem>>, vector<1x48xf32>
    %37 = vector.broadcast %36 : vector<1x48xf32> to vector<128x48xf32>
    %38 = arith.addf %35, %37 : vector<128x48xf32>
    %cst_32 = arith.constant 0.000000e+00 : f32
    %39 = vector.broadcast %cst_32 : f32 to vector<128x48xf32>
    %40 = arith.cmpf ogt, %38, %39 : vector<128x48xf32>
    %cst_33 = arith.constant 1.000000e-01 : f32
    %41 = vector.broadcast %cst_33 : f32 to vector<128x48xf32>
    %42 = arith.mulf %41, %38 : vector<128x48xf32>
    %43 = arith.select %40, %38, %42 : vector<128x48xi1>, vector<128x48xf32>
    %c0_34 = arith.constant 0 : index
    %c0_35 = arith.constant 0 : index
    %44 = vector.load %arg13[%c0_34, %c0_35] : memref<48x3xf32, #tpu.memory_space<vmem>>, vector<48x3xf32>
    %cst_36 = arith.constant dense<0.000000e+00> : vector<128x3xf32>
    %45 = tpu.matmul %43, %44, %cst_36 {dimension_numbers = #tpu.dot_dimension_numbers<[1], [0], [0], [1], [0, 0, 1, 1], [], []>} : vector<128x48xf32>, vector<48x3xf32>, vector<128x3xf32> -> vector<128x3xf32>
    %c0_37 = arith.constant 0 : index
    %c0_38 = arith.constant 0 : index
    %46 = vector.load %arg14[%c0_37, %c0_38] : memref<1x3xf32, #tpu.memory_space<vmem>>, vector<1x3xf32>
    %47 = vector.broadcast %46 : vector<1x3xf32> to vector<128x3xf32>
    %48 = arith.addf %45, %47 : vector<128x3xf32>
    %cst_39 = arith.constant dense<0xFF800000> : vector<128xf32>
    %49 = vector.multi_reduction <maximumf>, %48, %cst_39 [1] : vector<128x3xf32> to vector<128xf32>
    %50 = vector.shape_cast %49 : vector<128xf32> to vector<128x1xf32>
    %51 = vector.broadcast %50 : vector<128x1xf32> to vector<128x3xf32>
    %52 = arith.subf %48, %51 : vector<128x3xf32>
    %53 = math.exp %52 : vector<128x3xf32>
    %cst_40 = arith.constant dense<0.000000e+00> : vector<128xf32>
    %54 = vector.multi_reduction <add>, %53, %cst_40 [1] : vector<128x3xf32> to vector<128xf32>
    %55 = vector.shape_cast %54 : vector<128xf32> to vector<128x1xf32>
    %56 = tpu.reciprocal %55 {approx = true} : vector<128x1xf32> -> vector<128x1xf32>
    %57 = vector.broadcast %56 : vector<128x1xf32> to vector<128x3xf32>
    %58 = arith.mulf %53, %57 : vector<128x3xf32>
    %59 = vector.extract_strided_slice %58 {offsets = [0, 0], sizes = [128, 1], strides = [1, 1]} : vector<128x3xf32> to vector<128x1xf32>
    %60 = vector.broadcast %59 : vector<128x1xf32> to vector<128x128xf32>
    %61 = arith.mulf %29, %60 : vector<128x128xf32>
    %62 = vector.extract_strided_slice %58 {offsets = [0, 1], sizes = [128, 1], strides = [1, 1]} : vector<128x3xf32> to vector<128x1xf32>
    %63 = vector.broadcast %62 : vector<128x1xf32> to vector<128x128xf32>
    %64 = arith.mulf %31, %63 : vector<128x128xf32>
    %65 = arith.addf %61, %64 : vector<128x128xf32>
    %66 = vector.extract_strided_slice %58 {offsets = [0, 2], sizes = [128, 1], strides = [1, 1]} : vector<128x3xf32> to vector<128x1xf32>
    %67 = vector.broadcast %66 : vector<128x1xf32> to vector<128x128xf32>
    %68 = arith.mulf %27, %67 : vector<128x128xf32>
    %69 = arith.addf %65, %68 : vector<128x128xf32>
    %70 = vector.shape_cast %69 : vector<128x128xf32> to vector<1x128x128xf32>
    %c0_41 = arith.constant 0 : index
    %c0_42 = arith.constant 0 : index
    %c0_43 = arith.constant 0 : index
    %71 = vector.load %arg15[%c0_41, %c0_42, %c0_43] : memref<1x128x128xf32, #tpu.memory_space<vmem>>, vector<1x128x128xf32>
    tpu.vector_store %arg15[%c0_41, %c0_42, %c0_43], %70 {strides = array<i32>} : memref<1x128x128xf32, #tpu.memory_space<vmem>>, vector<1x128x128xf32>,
    return
  }
  func.func @transform_0(%arg0: i32, %arg1: i32) -> (i32, i32, i32) {
    %c0_i32 = arith.constant 0 : i32
    %c0_i32_0 = arith.constant 0 : i32
    return %arg0, %arg1, %c0_i32 : i32, i32, i32
  }
  func.func @transform_1(%arg0: i32, %arg1: i32) -> (i32, i32, i32) {
    %c0_i32 = arith.constant 0 : i32
    %c0_i32_0 = arith.constant 0 : i32
    return %arg0, %arg1, %c0_i32 : i32, i32, i32
  }
  func.func @transform_2(%arg0: i32, %arg1: i32) -> (i32, i32, i32) {
    %c0_i32 = arith.constant 0 : i32
    %c0_i32_0 = arith.constant 0 : i32
    return %arg0, %arg1, %c0_i32 : i32, i32, i32
  }
  func.func @transform_3(%arg0: i32, %arg1: i32) -> (i32, i32) {
    %c0_i32 = arith.constant 0 : i32
    %c0_i32_0 = arith.constant 0 : i32
    %c0_i32_1 = arith.constant 0 : i32
    return %c0_i32, %c0_i32_0 : i32, i32
  }
  func.func @transform_4(%arg0: i32, %arg1: i32) -> (i32, i32) {
    %c0_i32 = arith.constant 0 : i32
    %c0_i32_0 = arith.constant 0 : i32
    %c0_i32_1 = arith.constant 0 : i32
    return %c0_i32, %c0_i32_0 : i32, i32
  }
  func.func @transform_5(%arg0: i32, %arg1: i32) -> (i32, i32) {
    %c0_i32 = arith.constant 0 : i32
    %c0_i32_0 = arith.constant 0 : i32
    %c0_i32_1 = arith.constant 0 : i32
    return %c0_i32, %c0_i32_0 : i32, i32
  }
  func.func @transform_6(%arg0: i32, %arg1: i32) -> (i32, i32) {
    %c0_i32 = arith.constant 0 : i32
    %c0_i32_0 = arith.constant 0 : i32
    %c0_i32_1 = arith.constant 0 : i32
    return %c0_i32, %c0_i32_0 : i32, i32
  }
  func.func @transform_7(%arg0: i32, %arg1: i32) -> (i32, i32) {
    %c0_i32 = arith.constant 0 : i32
    %c0_i32_0 = arith.constant 0 : i32
    %c0_i32_1 = arith.constant 0 : i32
    return %c0_i32, %c0_i32_0 : i32, i32
  }
  func.func @transform_8(%arg0: i32, %arg1: i32) -> (i32, i32) {
    %c0_i32 = arith.constant 0 : i32
    %c0_i32_0 = arith.constant 0 : i32
    %c0_i32_1 = arith.constant 0 : i32
    return %c0_i32, %c0_i32_0 : i32, i32
  }
  func.func @transform_9(%arg0: i32, %arg1: i32) -> (i32, i32) {
    %c0_i32 = arith.constant 0 : i32
    %c0_i32_0 = arith.constant 0 : i32
    %c0_i32_1 = arith.constant 0 : i32
    return %c0_i32, %c0_i32_0 : i32, i32
  }
  func.func @transform_10(%arg0: i32, %arg1: i32) -> (i32, i32) {
    %c0_i32 = arith.constant 0 : i32
    %c0_i32_0 = arith.constant 0 : i32
    %c0_i32_1 = arith.constant 0 : i32
    return %c0_i32, %c0_i32_0 : i32, i32
  }
  func.func @transform_11(%arg0: i32, %arg1: i32) -> (i32, i32) {
    %c0_i32 = arith.constant 0 : i32
    %c0_i32_0 = arith.constant 0 : i32
    %c0_i32_1 = arith.constant 0 : i32
    return %c0_i32, %c0_i32_0 : i32, i32
  }
  func.func @transform_12(%arg0: i32, %arg1: i32) -> (i32, i32) {
    %c0_i32 = arith.constant 0 : i32
    %c0_i32_0 = arith.constant 0 : i32
    %c0_i32_1 = arith.constant 0 : i32
    return %c0_i32, %c0_i32_0 : i32, i32
  }
  func.func @transform_13(%arg0: i32, %arg1: i32) -> (i32, i32, i32) {
    %c0_i32 = arith.constant 0 : i32
    %c0_i32_0 = arith.constant 0 : i32
    return %arg0, %arg1, %c0_i32 : i32, i32, i32
  }
}

module attributes {stable_mosaic.version = 11 : i64} {
  func.func @_conv3x3_kernel(%arg0: i32, %arg1: i32, %arg2: memref<1x16x16x128xf32, #tpu.memory_space<vmem>>, %arg3: memref<3x384x128xbf16, #tpu.memory_space<vmem>>, %arg4: memref<1x128xf32, #tpu.memory_space<vmem>>, %arg5: memref<1x8x16x128xf32, #tpu.memory_space<vmem>>, %arg6: memref<18x16x384xf32, #tpu.memory_space<vmem>>) attributes {dimension_semantics = [#tpu.dimension_semantics<parallel>, #tpu.dimension_semantics<arbitrary>], iteration_bounds = array<i64: 2, 2>, scalar_prefetch = 0 : i64, scratch_operands = 1 : i64, tpu.core_type = #tpu.core_type<tc>, window_params = [{transform_indices = @transform_0, window_bounds = array<i64: 1, 16, 16, 128>}, {pipeline_mode = #tpu.pipeline_mode<synchronous>, transform_indices = @transform_1, window_bounds = array<i64: 3, 384, 128>}, {pipeline_mode = #tpu.pipeline_mode<synchronous>, transform_indices = @transform_2, window_bounds = array<i64: 1, 128>}, {transform_indices = @transform_3, window_bounds = array<i64: 1, 8, 16, 128>}]} {
    %c0_i32 = arith.constant 0 : i32
    %0 = arith.cmpi eq, %arg1, %c0_i32 : i32
    %1 = arith.extui %0 : i1 to i32
    %c0_i32_0 = arith.constant 0 : i32
    %2 = arith.cmpi ne, %1, %c0_i32_0 : i32
    scf.if %2 {
      %c0_25 = arith.constant 0 : index
      %c0_26 = arith.constant 0 : index
      %c0_27 = arith.constant 0 : index
      %c0_28 = arith.constant 0 : index
      %43 = vector.load %arg2[%c0_25, %c0_26, %c0_27, %c0_28] : memref<1x16x16x128xf32, #tpu.memory_space<vmem>>, vector<1x16x16x128xf32>
      %44 = vector.shape_cast %43 : vector<1x16x16x128xf32> to vector<16x16x128xf32>
      %cst_29 = arith.constant 0.000000e+00 : f32
      %45 = vector.broadcast %cst_29 : f32 to vector<16x384xf32>
      %c0_30 = arith.constant 0 : index
      %c0_31 = arith.constant 0 : index
      %c0_32 = arith.constant 0 : index
      %46 = vector.load %arg6[%c0_30, %c0_31, %c0_32] : memref<18x16x384xf32, #tpu.memory_space<vmem>>, vector<1x16x384xf32>
      %47 = vector.shape_cast %46 : vector<1x16x384xf32> to vector<16x384xf32>
      %48 = vector.shape_cast %45 : vector<16x384xf32> to vector<1x16x384xf32>
      tpu.vector_store %arg6[%c0_30, %c0_31, %c0_32], %48 {strides = array<i32>} : memref<18x16x384xf32, #tpu.memory_space<vmem>>, vector<1x16x384xf32>,
      %c17 = arith.constant 17 : index
      %c0_33 = arith.constant 0 : index
      %c0_34 = arith.constant 0 : index
      %49 = vector.load %arg6[%c17, %c0_33, %c0_34] : memref<18x16x384xf32, #tpu.memory_space<vmem>>, vector<1x16x384xf32>
      %50 = vector.shape_cast %49 : vector<1x16x384xf32> to vector<16x384xf32>
      %51 = vector.shape_cast %45 : vector<16x384xf32> to vector<1x16x384xf32>
      tpu.vector_store %arg6[%c17, %c0_33, %c0_34], %51 {strides = array<i32>} : memref<18x16x384xf32, #tpu.memory_space<vmem>>, vector<1x16x384xf32>,
      %52 = tpu.iota {dimensions = array<i32: 1>} : vector<16x16x128xi32>
      %c1_i32_35 = arith.constant 1 : i32
      %53 = vector.broadcast %c1_i32_35 : i32 to vector<16x16x128xi32>
      %54 = arith.cmpi sge, %52, %53 : vector<16x16x128xi32>
      %c1_i32_36 = arith.constant 1 : i32
      %55 = tpu.dynamic_rotate %44 by %c1_i32_36 dim 1 : vector<16x16x128xf32>, i32 -> vector<16x16x128xf32>
      %cst_37 = arith.constant 0.000000e+00 : f32
      %56 = vector.broadcast %cst_37 : f32 to vector<16x16x128xf32>
      %57 = arith.select %54, %55, %56 : vector<16x16x128xi1>, vector<16x16x128xf32>
      %c14_i32 = arith.constant 14 : i32
      %58 = vector.broadcast %c14_i32 : i32 to vector<16x16x128xi32>
      %59 = arith.cmpi sle, %52, %58 : vector<16x16x128xi32>
      %c15_i32 = arith.constant 15 : i32
      %60 = tpu.dynamic_rotate %44 by %c15_i32 dim 1 : vector<16x16x128xf32>, i32 -> vector<16x16x128xf32>
      %cst_38 = arith.constant 0.000000e+00 : f32
      %61 = vector.broadcast %cst_38 : f32 to vector<16x16x128xf32>
      %62 = arith.select %59, %60, %61 : vector<16x16x128xi1>, vector<16x16x128xf32>
      %c1_39 = arith.constant 1 : index
      %c0_40 = arith.constant 0 : index
      %c0_41 = arith.constant 0 : index
      %63 = vector.load %arg6[%c1_39, %c0_40, %c0_41] : memref<18x16x384xf32, #tpu.memory_space<vmem>>, vector<16x16x128xf32>
      tpu.vector_store %arg6[%c1_39, %c0_40, %c0_41], %57 {strides = array<i32>} : memref<18x16x384xf32, #tpu.memory_space<vmem>>, vector<16x16x128xf32>,
      %c1_42 = arith.constant 1 : index
      %c0_43 = arith.constant 0 : index
      %c128 = arith.constant 128 : index
      %64 = vector.load %arg6[%c1_42, %c0_43, %c128] : memref<18x16x384xf32, #tpu.memory_space<vmem>>, vector<16x16x128xf32>
      tpu.vector_store %arg6[%c1_42, %c0_43, %c128], %44 {strides = array<i32>} : memref<18x16x384xf32, #tpu.memory_space<vmem>>, vector<16x16x128xf32>,
      %c1_44 = arith.constant 1 : index
      %c0_45 = arith.constant 0 : index
      %c256 = arith.constant 256 : index
      %65 = vector.load %arg6[%c1_44, %c0_45, %c256] : memref<18x16x384xf32, #tpu.memory_space<vmem>>, vector<16x16x128xf32>
      tpu.vector_store %arg6[%c1_44, %c0_45, %c256], %62 {strides = array<i32>} : memref<18x16x384xf32, #tpu.memory_space<vmem>>, vector<16x16x128xf32>,
    } else {
    }
    %c8_i32 = arith.constant 8 : i32
    %3 = arith.muli %arg1, %c8_i32 : i32
    %4 = tpu.assume_multiple %3, 8 : i32
    %cst = arith.constant 0.000000e+00 : f32
    %5 = vector.broadcast %cst : f32 to vector<128x128xf32>
    %c0_i32_1 = arith.constant 0 : i32
    %6 = arith.addi %4, %c0_i32_1 : i32
    %7 = arith.index_cast %6 : i32 to index
    %c0 = arith.constant 0 : index
    %c0_2 = arith.constant 0 : index
    %8 = vector.load %arg6[%7, %c0, %c0_2] : memref<18x16x384xf32, #tpu.memory_space<vmem>>, vector<8x16x384xf32>
    %9 = vector.shape_cast %8 : vector<8x16x384xf32> to vector<128x384xf32>
    %10 = arith.truncf %9 : vector<128x384xf32> to vector<128x384xbf16>
    %c0_3 = arith.constant 0 : index
    %c0_4 = arith.constant 0 : index
    %c0_5 = arith.constant 0 : index
    %11 = vector.load %arg3[%c0_3, %c0_4, %c0_5] : memref<3x384x128xbf16, #tpu.memory_space<vmem>>, vector<1x384x128xbf16>
    %12 = vector.shape_cast %11 : vector<1x384x128xbf16> to vector<384x128xbf16>
    %cst_6 = arith.constant dense<0.000000e+00> : vector<128x128xf32>
    %13 = tpu.matmul %10, %12, %cst_6 {dimension_numbers = #tpu.dot_dimension_numbers<[1], [0], [0], [1], [0, 0, 1, 1], [], []>} : vector<128x384xbf16>, vector<384x128xbf16>, vector<128x128xf32> -> vector<128x128xf32>
    %14 = arith.addf %5, %13 : vector<128x128xf32>
    %c1_i32 = arith.constant 1 : i32
    %15 = arith.addi %4, %c1_i32 : i32
    %16 = arith.index_cast %15 : i32 to index
    %c0_7 = arith.constant 0 : index
    %c0_8 = arith.constant 0 : index
    %17 = vector.load %arg6[%16, %c0_7, %c0_8] : memref<18x16x384xf32, #tpu.memory_space<vmem>>, vector<8x16x384xf32>
    %18 = vector.shape_cast %17 : vector<8x16x384xf32> to vector<128x384xf32>
    %19 = arith.truncf %18 : vector<128x384xf32> to vector<128x384xbf16>
    %c1 = arith.constant 1 : index
    %c0_9 = arith.constant 0 : index
    %c0_10 = arith.constant 0 : index
    %20 = vector.load %arg3[%c1, %c0_9, %c0_10] : memref<3x384x128xbf16, #tpu.memory_space<vmem>>, vector<1x384x128xbf16>
    %21 = vector.shape_cast %20 : vector<1x384x128xbf16> to vector<384x128xbf16>
    %cst_11 = arith.constant dense<0.000000e+00> : vector<128x128xf32>
    %22 = tpu.matmul %19, %21, %cst_11 {dimension_numbers = #tpu.dot_dimension_numbers<[1], [0], [0], [1], [0, 0, 1, 1], [], []>} : vector<128x384xbf16>, vector<384x128xbf16>, vector<128x128xf32> -> vector<128x128xf32>
    %23 = arith.addf %14, %22 : vector<128x128xf32>
    %c2_i32 = arith.constant 2 : i32
    %24 = arith.addi %4, %c2_i32 : i32
    %25 = arith.index_cast %24 : i32 to index
    %c0_12 = arith.constant 0 : index
    %c0_13 = arith.constant 0 : index
    %26 = vector.load %arg6[%25, %c0_12, %c0_13] : memref<18x16x384xf32, #tpu.memory_space<vmem>>, vector<8x16x384xf32>
    %27 = vector.shape_cast %26 : vector<8x16x384xf32> to vector<128x384xf32>
    %28 = arith.truncf %27 : vector<128x384xf32> to vector<128x384xbf16>
    %c2 = arith.constant 2 : index
    %c0_14 = arith.constant 0 : index
    %c0_15 = arith.constant 0 : index
    %29 = vector.load %arg3[%c2, %c0_14, %c0_15] : memref<3x384x128xbf16, #tpu.memory_space<vmem>>, vector<1x384x128xbf16>
    %30 = vector.shape_cast %29 : vector<1x384x128xbf16> to vector<384x128xbf16>
    %cst_16 = arith.constant dense<0.000000e+00> : vector<128x128xf32>
    %31 = tpu.matmul %28, %30, %cst_16 {dimension_numbers = #tpu.dot_dimension_numbers<[1], [0], [0], [1], [0, 0, 1, 1], [], []>} : vector<128x384xbf16>, vector<384x128xbf16>, vector<128x128xf32> -> vector<128x128xf32>
    %32 = arith.addf %23, %31 : vector<128x128xf32>
    %c0_17 = arith.constant 0 : index
    %c0_18 = arith.constant 0 : index
    %33 = vector.load %arg4[%c0_17, %c0_18] : memref<1x128xf32, #tpu.memory_space<vmem>>, vector<1x128xf32>
    %34 = vector.broadcast %33 : vector<1x128xf32> to vector<128x128xf32>
    %35 = arith.addf %32, %34 : vector<128x128xf32>
    %cst_19 = arith.constant 0.000000e+00 : f32
    %36 = vector.broadcast %cst_19 : f32 to vector<128x128xf32>
    %37 = arith.cmpf ogt, %35, %36 : vector<128x128xf32>
    %cst_20 = arith.constant 1.000000e-01 : f32
    %38 = vector.broadcast %cst_20 : f32 to vector<128x128xf32>
    %39 = arith.mulf %38, %35 : vector<128x128xf32>
    %40 = arith.select %37, %35, %39 : vector<128x128xi1>, vector<128x128xf32>
    %41 = vector.shape_cast %40 : vector<128x128xf32> to vector<1x8x16x128xf32>
    %c0_21 = arith.constant 0 : index
    %c0_22 = arith.constant 0 : index
    %c0_23 = arith.constant 0 : index
    %c0_24 = arith.constant 0 : index
    %42 = vector.load %arg5[%c0_21, %c0_22, %c0_23, %c0_24] : memref<1x8x16x128xf32, #tpu.memory_space<vmem>>, vector<1x8x16x128xf32>
    tpu.vector_store %arg5[%c0_21, %c0_22, %c0_23, %c0_24], %41 {strides = array<i32>} : memref<1x8x16x128xf32, #tpu.memory_space<vmem>>, vector<1x8x16x128xf32>,
    return
  }
  func.func @transform_0(%arg0: i32, %arg1: i32) -> (i32, i32, i32, i32) {
    %c0_i32 = arith.constant 0 : i32
    %c0_i32_0 = arith.constant 0 : i32
    %c0_i32_1 = arith.constant 0 : i32
    %c0_i32_2 = arith.constant 0 : i32
    return %arg0, %c0_i32, %c0_i32_0, %c0_i32_1 : i32, i32, i32, i32
  }
  func.func @transform_1(%arg0: i32, %arg1: i32) -> (i32, i32, i32) {
    %c0_i32 = arith.constant 0 : i32
    %c0_i32_0 = arith.constant 0 : i32
    %c0_i32_1 = arith.constant 0 : i32
    %c0_i32_2 = arith.constant 0 : i32
    return %c0_i32, %c0_i32_0, %c0_i32_1 : i32, i32, i32
  }
  func.func @transform_2(%arg0: i32, %arg1: i32) -> (i32, i32) {
    %c0_i32 = arith.constant 0 : i32
    %c0_i32_0 = arith.constant 0 : i32
    %c0_i32_1 = arith.constant 0 : i32
    return %c0_i32, %c0_i32_0 : i32, i32
  }
  func.func @transform_3(%arg0: i32, %arg1: i32) -> (i32, i32, i32, i32) {
    %c0_i32 = arith.constant 0 : i32
    %c0_i32_0 = arith.constant 0 : i32
    %c0_i32_1 = arith.constant 0 : i32
    return %arg0, %arg1, %c0_i32, %c0_i32_0 : i32, i32, i32, i32
  }
}

</mosaic_0001>

<llo_original>
// kernel: asff_level2_forward.2
$region0: #{asff_level2_forward.2}
  #allocation0 [shape = 'u32[]', space=smem, size = 0x4, offset = 0x4, fixed_abs, tag = 'smem constant byte address 0x4 - core index']
  #allocation1 [shape = 'u32[72,128]{1,0:T(1,128)}', space=vmem, size = 0x9000, scoped, tag = 'internal scratch']
  %s0 = inlined_call_operand.vmem [shape: f32[2,16,512], index: 0, kind: input, shape index: {}]
  %s1 = inlined_call_operand.vmem [shape: f32[2,64,256], index: 1, kind: input, shape index: {}]
  %s2 = inlined_call_operand.vmem [shape: f32[2,256,128], index: 2, kind: input, shape index: {}]
  %s3 = inlined_call_operand.vmem [shape: f32[128,8], index: 3, kind: input, shape index: {}]
  %s4 = inlined_call_operand.vmem [shape: f32[128,32], index: 4, kind: input, shape index: {}]
  %s5 = inlined_call_operand.vmem [shape: bf16[512,128], index: 5, kind: input, shape index: {}]
  %s6 = inlined_call_operand.vmem [shape: f32[1,128], index: 6, kind: input, shape index: {}]
  %s7 = inlined_call_operand.vmem [shape: bf16[256,128], index: 7, kind: input, shape index: {}]
  %s8 = inlined_call_operand.vmem [shape: f32[1,128], index: 8, kind: input, shape index: {}]
  %s9 = inlined_call_operand.vmem [shape: bf16[384,48], index: 9, kind: input, shape index: {}]
  %s10 = inlined_call_operand.vmem [shape: f32[1,48], index: 10, kind: input, shape index: {}]
  %s11 = inlined_call_operand.vmem [shape: f32[48,3], index: 11, kind: input, shape index: {}]
  %s12 = inlined_call_operand.vmem [shape: f32[1,3], index: 12, kind: input, shape index: {}]
  %s13 = inlined_call_operand.vmem [shape: f32[2,256,128], index: 13, kind: output, shape index: {}]
  %s14 = sld [smem:[#allocation0]]
  $region85: #{asff_level2_forward.2} parent=0
    _
  %s16 = ssub.s32 1, %s14
  %s17 = scalar_select 0, %s16, %s14
  loop: start=0, step=1, limit=6
  $region2: #{asff_level2_forward.2} parent=0 // loop_pre_header
    _
  $region3: #{asff_level2_forward.2} parent=0 // loop_header
    %s19 = sphi 0, %s23
    %p20 = scmp.ge.s32.totalorder %s19, 6
    %s26 = sphi 0, %s38
    %s27 = sphi 0, %s34
    %s28 = sphi 0, %s26
    %s29 = sphi 0, %s27
    %s30 = sphi 0, %s28
    %s31 = sphi 0, %s29
    %s43 = sphi 0, %s45
    %s46 = sphi 0, %s43
    %s47 = sphi 0, %s46
    %s63 = sphi 0, %s47
    %s71 = sphi 0, %s73
    %s74 = sphi 0, %s71
    %s75 = sphi 0, %s74
    %s91 = sphi 0, %s75
    %s99 = sphi 0, %s101
    %s102 = sphi 0, %s99
    %s103 = sphi 0, %s102
    %s119 = sphi 0, %s103
    %s123 = sphi 0, %s123
    %s125 = sphi 0, %s123
    %s126 = sphi 0, %s125
    %s140 = sphi 0, %s126
    %s144 = sphi 0, %s144
    %s146 = sphi 0, %s144
    %s147 = sphi 0, %s146
    %s161 = sphi 0, %s147
    %s165 = sphi 0, %s165
    %s167 = sphi 0, %s165
    %s168 = sphi 0, %s167
    %s182 = sphi 0, %s168
    %s186 = sphi 0, %s186
    %s188 = sphi 0, %s186
    %s189 = sphi 0, %s188
    %s203 = sphi 0, %s189
    %s207 = sphi 0, %s207
    %s209 = sphi 0, %s207
    %s210 = sphi 0, %s209
    %s224 = sphi 0, %s210
    %s228 = sphi 0, %s228
    %s230 = sphi 0, %s228
    %s231 = sphi 0, %s230
    %s245 = sphi 0, %s231
    %s249 = sphi 0, %s249
    %s251 = sphi 0, %s249
    %s252 = sphi 0, %s251
    %s266 = sphi 0, %s252
    %s270 = sphi 0, %s270
    %s272 = sphi 0, %s270
    %s273 = sphi 0, %s272
    %s287 = sphi 0, %s273
    %s291 = sphi 0, %s291
    %s293 = sphi 0, %s291
    %s294 = sphi 0, %s293
    %s308 = sphi 0, %s294
    %s312 = sphi 0, %s312
    %s314 = sphi 0, %s312
    %s315 = sphi 0, %s314
    %s329 = sphi 0, %s315
    %s337 = sphi 0, %s339
    %s340 = sphi 0, %s337
    %s341 = sphi 0, %s340
    %s357 = sphi 0, %s341
  $region4: #{asff_level2_forward.2} parent=0 // loop_header_branch
    %22 = sbr.rel (%p20) target = $region8
  $region5: #{asff_level2_forward.2} parent=0 // loop_body
    %s24 = ssub.s32 %s19, 1
    %s25 = ssub.s32 %s19, 2
    %s32 = sadd.s32 1, %s27
    %p33 = scmp.ge.s32.totalorder %s32, 2
    %s34 = scalar_select %p33, 0, %s32
    %s35 = sadd.s32 1, %s26
    %s36 = scalar_select %p33, %s35, %s26
    %p37 = scmp.ge.s32.totalorder %s36, 2
    %s38 = scalar_select %p37, 0, %s36
    %s39 = ssub.s32 %s26, %s38
    %s40 = ssub.s32 %s27, %s34
    %s41 = sor.u32 %s39, %s40
    %p42 = scmp.eq.s32.totalorder %s41, 0
    %s44 = sadd.s32 %s43, 1
    %s45 = scalar_select %p42, %s43, %s44
    %p48 = pneg %p42
    %p49 = scmp.eq.s32.totalorder %s19, 3
    %p50 = por %p48, %p49
    %p51 = scmp.ne.s32.totalorder %s43, %s46
    %p52 = scmp.eq.s32.totalorder %s19, 0
    %p53 = por %p51, %p52
    %p54 = scmp.ne.s32.totalorder %s43, %s46
    %p55 = scmp.eq.s32.totalorder %s24, 3
    %p56 = por %p54, %p55
    %p57 = scmp.ne.s32.totalorder %s46, %s47
    %p58 = scmp.eq.s32.totalorder %s24, 0
    %p59 = por %p57, %p58
    %p60 = scmp.ne.s32.totalorder %s46, %s47
    %p61 = scmp.eq.s32.totalorder %s25, 3
    %p62 = por %p60, %p61
    %p64 = scmp.ne.s32.totalorder %s47, %s63
    %p65 = scmp.eq.s32.totalorder %s25, 0
    %p66 = por %p64, %p65
    %s67 = ssub.s32 %s26, %s38
    %s68 = ssub.s32 %s27, %s34
    %s69 = sor.u32 %s67, %s68
    %p70 = scmp.eq.s32.totalorder %s69, 0
    %s72 = sadd.s32 %s71, 1
    %s73 = scalar_select %p70, %s71, %s72
    %p76 = pneg %p70
    %p77 = scmp.eq.s32.totalorder %s19, 3
    %p78 = por %p76, %p77
    %p79 = scmp.ne.s32.totalorder %s71, %s74
    %p80 = scmp.eq.s32.totalorder %s19, 0
    %p81 = por %p79, %p80
    %p82 = scmp.ne.s32.totalorder %s71, %s74
    %p83 = scmp.eq.s32.totalorder %s24, 3
    %p84 = por %p82, %p83
    %p85 = scmp.ne.s32.totalorder %s74, %s75
    %p86 = scmp.eq.s32.totalorder %s24, 0
    %p87 = por %p85, %p86
    %p88 = scmp.ne.s32.totalorder %s74, %s75
    %p89 = scmp.eq.s32.totalorder %s25, 3
    %p90 = por %p88, %p89
    %p92 = scmp.ne.s32.totalorder %s75, %s91
    %p93 = scmp.eq.s32.totalorder %s25, 0
    %p94 = por %p92, %p93
    %s95 = ssub.s32 %s26, %s38
    %s96 = ssub.s32 %s27, %s34
    %s97 = sor.u32 %s95, %s96
    %p98 = scmp.eq.s32.totalorder %s97, 0
    %s100 = sadd.s32 %s99, 1
    %s101 = scalar_select %p98, %s99, %s100
    %p104 = pneg %p98
    %p105 = scmp.eq.s32.totalorder %s19, 3
    %p106 = por %p104, %p105
    %p107 = scmp.ne.s32.totalorder %s99, %s102
    %p108 = scmp.eq.s32.totalorder %s19, 0
    %p109 = por %p107, %p108
    %p110 = scmp.ne.s32.totalorder %s99, %s102
    %p111 = scmp.eq.s32.totalorder %s24, 3
    %p112 = por %p110, %p111
    %p113 = scmp.ne.s32.totalorder %s102, %s103
    %p114 = scmp.eq.s32.totalorder %s24, 0
    %p115 = por %p113, %p114
    %p116 = scmp.ne.s32.totalorder %s102, %s103
    %p117 = scmp.eq.s32.totalorder %s25, 3
    %p118 = por %p116, %p117
    %p120 = scmp.ne.s32.totalorder %s103, %s119
    %p121 = scmp.eq.s32.totalorder %s25, 0
    %p122 = por %p120, %p121
    %s124 = sadd.s32 %s123, 1
    %p127 = scmp.eq.s32.totalorder %s19, 3
    %p128 = scmp.ne.s32.totalorder %s123, %s125
    %p129 = scmp.eq.s32.totalorder %s19, 0
    %p130 = por %p128, %p129
    %p131 = scmp.ne.s32.totalorder %s123, %s125
    %p132 = scmp.eq.s32.totalorder %s24, 3
    %p133 = por %p131, %p132
    %p134 = scmp.ne.s32.totalorder %s125, %s126
    %p135 = scmp.eq.s32.totalorder %s24, 0
    %p136 = por %p134, %p135
    %p137 = scmp.ne.s32.totalorder %s125, %s126
    %p138 = scmp.eq.s32.totalorder %s25, 3
    %p139 = por %p137, %p138
    %p141 = scmp.ne.s32.totalorder %s126, %s140
    %p142 = scmp.eq.s32.totalorder %s25, 0
    %p143 = por %p141, %p142
    %s145 = sadd.s32 %s144, 1
    %p148 = scmp.eq.s32.totalorder %s19, 3
    %p149 = scmp.ne.s32.totalorder %s144, %s146
    %p150 = scmp.eq.s32.totalorder %s19, 0
    %p151 = por %p149, %p150
    %p152 = scmp.ne.s32.totalorder %s144, %s146
    %p153 = scmp.eq.s32.totalorder %s24, 3
    %p154 = por %p152, %p153
    %p155 = scmp.ne.s32.totalorder %s146, %s147
    %p156 = scmp.eq.s32.totalorder %s24, 0
    %p157 = por %p155, %p156
    %p158 = scmp.ne.s32.totalorder %s146, %s147
    %p159 = scmp.eq.s32.totalorder %s25, 3
    %p160 = por %p158, %p159
    %p162 = scmp.ne.s32.totalorder %s147, %s161
    %p163 = scmp.eq.s32.totalorder %s25, 0
    %p164 = por %p162, %p163
    %s166 = sadd.s32 %s165, 1
    %p169 = scmp.eq.s32.totalorder %s19, 3
    %p170 = scmp.ne.s32.totalorder %s165, %s167
    %p171 = scmp.eq.s32.totalorder %s19, 0
    %p172 = por %p170, %p171
    %p173 = scmp.ne.s32.totalorder %s165, %s167
    %p174 = scmp.eq.s32.totalorder %s24, 3
    %p175 = por %p173, %p174
    %p176 = scmp.ne.s32.totalorder %s167, %s168
    %p177 = scmp.eq.s32.totalorder %s24, 0
    %p178 = por %p176, %p177
    %p179 = scmp.ne.s32.totalorder %s167, %s168
    %p180 = scmp.eq.s32.totalorder %s25, 3
    %p181 = por %p179, %p180
    %p183 = scmp.ne.s32.totalorder %s168, %s182
    %p184 = scmp.eq.s32.totalorder %s25, 0
    %p185 = por %p183, %p184
    %s187 = sadd.s32 %s186, 1
    %p190 = scmp.eq.s32.totalorder %s19, 3
    %p191 = scmp.ne.s32.totalorder %s186, %s188
    %p192 = scmp.eq.s32.totalorder %s19, 0
    %p193 = por %p191, %p192
    %p194 = scmp.ne.s32.totalorder %s186, %s188
    %p195 = scmp.eq.s32.totalorder %s24, 3
    %p196 = por %p194, %p195
    %p197 = scmp.ne.s32.totalorder %s188, %s189
    %p198 = scmp.eq.s32.totalorder %s24, 0
    %p199 = por %p197, %p198
    %p200 = scmp.ne.s32.totalorder %s188, %s189
    %p201 = scmp.eq.s32.totalorder %s25, 3
    %p202 = por %p200, %p201
    %p204 = scmp.ne.s32.totalorder %s189, %s203
    %p205 = scmp.eq.s32.totalorder %s25, 0
    %p206 = por %p204, %p205
    %s208 = sadd.s32 %s207, 1
    %p211 = scmp.eq.s32.totalorder %s19, 3
    %p212 = scmp.ne.s32.totalorder %s207, %s209
    %p213 = scmp.eq.s32.totalorder %s19, 0
    %p214 = por %p212, %p213
    %p215 = scmp.ne.s32.totalorder %s207, %s209
    %p216 = scmp.eq.s32.totalorder %s24, 3
    %p217 = por %p215, %p216
    %p218 = scmp.ne.s32.totalorder %s209, %s210
    %p219 = scmp.eq.s32.totalorder %s24, 0
    %p220 = por %p218, %p219
    %p221 = scmp.ne.s32.totalorder %s209, %s210
    %p222 = scmp.eq.s32.totalorder %s25, 3
    %p223 = por %p221, %p222
    %p225 = scmp.ne.s32.totalorder %s210, %s224
    %p226 = scmp.eq.s32.totalorder %s25, 0
    %p227 = por %p225, %p226
    %s229 = sadd.s32 %s228, 1
    %p232 = scmp.eq.s32.totalorder %s19, 3
    %p233 = scmp.ne.s32.totalorder %s228, %s230
    %p234 = scmp.eq.s32.totalorder %s19, 0
    %p235 = por %p233, %p234
    %p236 = scmp.ne.s32.totalorder %s228, %s230
    %p237 = scmp.eq.s32.totalorder %s24, 3
    %p238 = por %p236, %p237
    %p239 = scmp.ne.s32.totalorder %s230, %s231
    %p240 = scmp.eq.s32.totalorder %s24, 0
    %p241 = por %p239, %p240
    %p242 = scmp.ne.s32.totalorder %s230, %s231
    %p243 = scmp.eq.s32.totalorder %s25, 3
    %p244 = por %p242, %p243
    %p246 = scmp.ne.s32.totalorder %s231, %s245
    %p247 = scmp.eq.s32.totalorder %s25, 0
    %p248 = por %p246, %p247
    %s250 = sadd.s32 %s249, 1
    %p253 = scmp.eq.s32.totalorder %s19, 3
    %p254 = scmp.ne.s32.totalorder %s249, %s251
    %p255 = scmp.eq.s32.totalorder %s19, 0
    %p256 = por %p254, %p255
    %p257 = scmp.ne.s32.totalorder %s249, %s251
    %p258 = scmp.eq.s32.totalorder %s24, 3
    %p259 = por %p257, %p258
    %p260 = scmp.ne.s32.totalorder %s251, %s252
    %p261 = scmp.eq.s32.totalorder %s24, 0
    %p262 = por %p260, %p261
    %p263 = scmp.ne.s32.totalorder %s251, %s252
    %p264 = scmp.eq.s32.totalorder %s25, 3
    %p265 = por %p263, %p264
    %p267 = scmp.ne.s32.totalorder %s252, %s266
    %p268 = scmp.eq.s32.totalorder %s25, 0
    %p269 = por %p267, %p268
    %s271 = sadd.s32 %s270, 1
    %p274 = scmp.eq.s32.totalorder %s19, 3
    %p275 = scmp.ne.s32.totalorder %s270, %s272
    %p276 = scmp.eq.s32.totalorder %s19, 0
    %p277 = por %p275, %p276
    %p278 = scmp.ne.s32.totalorder %s270, %s272
    %p279 = scmp.eq.s32.totalorder %s24, 3
    %p280 = por %p278, %p279
    %p281 = scmp.ne.s32.totalorder %s272, %s273
    %p282 = scmp.eq.s32.totalorder %s24, 0
    %p283 = por %p281, %p282
    %p284 = scmp.ne.s32.totalorder %s272, %s273
    %p285 = scmp.eq.s32.totalorder %s25, 3
    %p286 = por %p284, %p285
    %p288 = scmp.ne.s32.totalorder %s273, %s287
    %p289 = scmp.eq.s32.totalorder %s25, 0
    %p290 = por %p288, %p289
    %s292 = sadd.s32 %s291, 1
    %p295 = scmp.eq.s32.totalorder %s19, 3
    %p296 = scmp.ne.s32.totalorder %s291, %s293
    %p297 = scmp.eq.s32.totalorder %s19, 0
    %p298 = por %p296, %p297
    %p299 = scmp.ne.s32.totalorder %s291, %s293
    %p300 = scmp.eq.s32.totalorder %s24, 3
    %p301 = por %p299, %p300
    %p302 = scmp.ne.s32.totalorder %s293, %s294
    %p303 = scmp.eq.s32.totalorder %s24, 0
    %p304 = por %p302, %p303
    %p305 = scmp.ne.s32.totalorder %s293, %s294
    %p306 = scmp.eq.s32.totalorder %s25, 3
    %p307 = por %p305, %p306
    %p309 = scmp.ne.s32.totalorder %s294, %s308
    %p310 = scmp.eq.s32.totalorder %s25, 0
    %p311 = por %p309, %p310
    %s313 = sadd.s32 %s312, 1
    %p316 = scmp.eq.s32.totalorder %s19, 3
    %p317 = scmp.ne.s32.totalorder %s312, %s314
    %p318 = scmp.eq.s32.totalorder %s19, 0
    %p319 = por %p317, %p318
    %p320 = scmp.ne.s32.totalorder %s312, %s314
    %p321 = scmp.eq.s32.totalorder %s24, 3
    %p322 = por %p320, %p321
    %p323 = scmp.ne.s32.totalorder %s314, %s315
    %p324 = scmp.eq.s32.totalorder %s24, 0
    %p325 = por %p323, %p324
    %p326 = scmp.ne.s32.totalorder %s314, %s315
    %p327 = scmp.eq.s32.totalorder %s25, 3
    %p328 = por %p326, %p327
    %p330 = scmp.ne.s32.totalorder %s315, %s329
    %p331 = scmp.eq.s32.totalorder %s25, 0
    %p332 = por %p330, %p331
    %s333 = ssub.s32 %s26, %s38
    %s334 = ssub.s32 %s27, %s34
    %s335 = sor.u32 %s333, %s334
    %p336 = scmp.eq.s32.totalorder %s335, 0
    %s338 = sadd.s32 %s337, 1
    %s339 = scalar_select %p336, %s337, %s338
    %p342 = pneg %p336
    %p343 = scmp.eq.s32.totalorder %s19, 3
    %p344 = por %p342, %p343
    %p345 = scmp.ne.s32.totalorder %s337, %s340
    %p346 = scmp.eq.s32.totalorder %s19, 0
    %p347 = por %p345, %p346
    %p348 = scmp.ne.s32.totalorder %s337, %s340
    %p349 = scmp.eq.s32.totalorder %s24, 3
    %p350 = por %p348, %p349
    %p351 = scmp.ne.s32.totalorder %s340, %s341
    %p352 = scmp.eq.s32.totalorder %s24, 0
    %p353 = por %p351, %p352
    %p354 = scmp.ne.s32.totalorder %s340, %s341
    %p355 = scmp.eq.s32.totalorder %s25, 3
    %p356 = por %p354, %p355
    %p358 = scmp.ne.s32.totalorder %s341, %s357
    %p359 = scmp.eq.s32.totalorder %s25, 0
    %p360 = por %p358, %p359
    %p361 = scmp.le.s32.totalorder 1, %s19
    %p362 = scmp.lt.s32.totalorder %s19, 5
    %p363 = pnand %p361, %p362
    %p364 = pneg %p363
    // Predicated region
    $region9: #{asff_level2_forward.2} parent=5 // pred_check
      _
    $region10: #{asff_level2_forward.2} parent=5 // pred_check_branch
      %366 = sbr.rel (%p363) target = $region12
    $region11: #{asff_level2_forward.2} parent=5 // pred_region
      %s367 = ssub.s32 %s19, 1
      // Predicated region
      $region13: #{asff_level2_forward.2} parent=11 // pred_check
        %p368 = pneg %p136
      $region14: #{asff_level2_forward.2} parent=11 // pred_check_branch
        %370 = sbr.rel (%p368) target = $region16
      $region15: #{asff_level2_forward.2} parent=11 // pred_region
        _
      $region16: #{asff_level2_forward.2} parent=11 // pred_fallthru
        _
      // Predicated region
      $region17: #{asff_level2_forward.2} parent=11 // pred_check
        %p371 = pneg %p157
      $region18: #{asff_level2_forward.2} parent=11 // pred_check_branch
        %373 = sbr.rel (%p371) target = $region20
      $region19: #{asff_level2_forward.2} parent=11 // pred_region
        _
      $region20: #{asff_level2_forward.2} parent=11 // pred_fallthru
        _
      // Predicated region
      $region21: #{asff_level2_forward.2} parent=11 // pred_check
        %p374 = pneg %p178
      $region22: #{asff_level2_forward.2} parent=11 // pred_check_branch
        %376 = sbr.rel (%p374) target = $region24
      $region23: #{asff_level2_forward.2} parent=11 // pred_region
        _
      $region24: #{asff_level2_forward.2} parent=11 // pred_fallthru
        _
      // Predicated region
      $region25: #{asff_level2_forward.2} parent=11 // pred_check
        %p377 = pneg %p199
      $region26: #{asff_level2_forward.2} parent=11 // pred_check_branch
        %379 = sbr.rel (%p377) target = $region28
      $region27: #{asff_level2_forward.2} parent=11 // pred_region
        _
      $region28: #{asff_level2_forward.2} parent=11 // pred_fallthru
        _
      // Predicated region
      $region29: #{asff_level2_forward.2} parent=11 // pred_check
        %p380 = pneg %p220
      $region30: #{asff_level2_forward.2} parent=11 // pred_check_branch
        %382 = sbr.rel (%p380) target = $region32
      $region31: #{asff_level2_forward.2} parent=11 // pred_region
        _
      $region32: #{asff_level2_forward.2} parent=11 // pred_fallthru
        _
      // Predicated region
      $region33: #{asff_level2_forward.2} parent=11 // pred_check
        %p383 = pneg %p241
      $region34: #{asff_level2_forward.2} parent=11 // pred_check_branch
        %385 = sbr.rel (%p383) target = $region36
      $region35: #{asff_level2_forward.2} parent=11 // pred_region
        _
      $region36: #{asff_level2_forward.2} parent=11 // pred_fallthru
        _
      // Predicated region
      $region37: #{asff_level2_forward.2} parent=11 // pred_check
        %p386 = pneg %p262
      $region38: #{asff_level2_forward.2} parent=11 // pred_check_branch
        %388 = sbr.rel (%p386) target = $region40
      $region39: #{asff_level2_forward.2} parent=11 // pred_region
        _
      $region40: #{asff_level2_forward.2} parent=11 // pred_fallthru
        _
      // Predicated region
      $region41: #{asff_level2_forward.2} parent=11 // pred_check
        %p389 = pneg %p283
      $region42: #{asff_level2_forward.2} parent=11 // pred_check_branch
        %391 = sbr.rel (%p389) target = $region44
      $region43: #{asff_level2_forward.2} parent=11 // pred_region
        _
      $region44: #{asff_level2_forward.2} parent=11 // pred_fallthru
        _
      // Predicated region
      $region45: #{asff_level2_forward.2} parent=11 // pred_check
        %p392 = pneg %p304
      $region46: #{asff_level2_forward.2} parent=11 // pred_check_branch
        %394 = sbr.rel (%p392) target = $region48
      $region47: #{asff_level2_forward.2} parent=11 // pred_region
        _
      $region48: #{asff_level2_forward.2} parent=11 // pred_fallthru
        _
      // Predicated region
      $region49: #{asff_level2_forward.2} parent=11 // pred_check
        %p395 = pneg %p325
      $region50: #{asff_level2_forward.2} parent=11 // pred_check_branch
        %397 = sbr.rel (%p395) target = $region52
      $region51: #{asff_level2_forward.2} parent=11 // pred_region
        _
      $region52: #{asff_level2_forward.2} parent=11 // pred_fallthru
        _
    $region12: #{asff_level2_forward.2} parent=5 // pred_fallthru
      _
    %p398 = scmp.lt.s32.totalorder %s19, 4
    // Predicated region
    $region53: #{asff_level2_forward.2} parent=5 // pred_check
      %p399 = pneg %p398
    $region54: #{asff_level2_forward.2} parent=5 // pred_check_branch
      %401 = sbr.rel (%p399) target = $region56
    $region55: #{asff_level2_forward.2} parent=5 // pred_region
      // Predicated region
      $region57: #{asff_level2_forward.2} parent=55 // pred_check
        %p402 = pneg %p53
      $region58: #{asff_level2_forward.2} parent=55 // pred_check_branch
        %404 = sbr.rel (%p402) target = $region60
      $region59: #{asff_level2_forward.2} parent=55 // pred_region
        %p405 = scmp.lt.s32.totalorder %s26, 1
        %s406 = scalar_select %p405, %s26, 1
        %p407 = scmp.lt.s32.totalorder %s27, 1
        %s408 = scalar_select %p407, %s27, 1
        %s409 = smul.addr %s408, 4
        %s410 = smul.addr %s406, 8
        %s411 = sadd.s32 %s409, %s410
        %s412 = smul.addr %s411, 8
        %s413 = scalar_lea.vmem %s0, %s412
      $region60: #{asff_level2_forward.2} parent=55 // pred_fallthru
        _
      // Predicated region
      $region61: #{asff_level2_forward.2} parent=55 // pred_check
        %p414 = pneg %p81
      $region62: #{asff_level2_forward.2} parent=55 // pred_check_branch
        %416 = sbr.rel (%p414) target = $region64
      $region63: #{asff_level2_forward.2} parent=55 // pred_region
        %s417 = smul.u32 4, %s27
        %p418 = scmp.lt.s32.totalorder %s26, 1
        %s419 = scalar_select %p418, %s26, 1
        %p420 = scmp.lt.s32.totalorder %s417, 7
        %s421 = scalar_select %p420, %s417, 7
        %s422 = smul.addr %s421, 2
        %s423 = smul.addr %s419, 16
        %s424 = sadd.s32 %s422, %s423
        %s425 = smul.addr %s424, 8
        %s426 = scalar_lea.vmem %s1, %s425
        %s427 = smul.u32 4, %s27
      $region64: #{asff_level2_forward.2} parent=55 // pred_fallthru
        _
      // Predicated region
      $region65: #{asff_level2_forward.2} parent=55 // pred_check
        %p428 = pneg %p109
      $region66: #{asff_level2_forward.2} parent=55 // pred_check_branch
        %430 = sbr.rel (%p428) target = $region68
      $region67: #{asff_level2_forward.2} parent=55 // pred_region
        %s431 = smul.u32 16, %s27
        %p432 = scmp.lt.s32.totalorder %s26, 1
        %s433 = scalar_select %p432, %s26, 1
        %p434 = scmp.lt.s32.totalorder %s431, 31
        %s435 = scalar_select %p434, %s431, 31
        %s436 = smul.addr %s433, 32
        %s437 = sadd.s32 %s435, %s436
        %s438 = smul.addr %s437, 8
        %s439 = scalar_lea.vmem %s2, %s438
        %s440 = smul.u32 16, %s27
      $region68: #{asff_level2_forward.2} parent=55 // pred_fallthru
        _
    $region56: #{asff_level2_forward.2} parent=5 // pred_fallthru
      _
    %p441 = scmp.le.s32.totalorder 1, %s19
    %p442 = scmp.lt.s32.totalorder %s19, 5
    %p443 = pnand %p441, %p442
    %p444 = pneg %p443
    // Predicated region
    $region69: #{asff_level2_forward.2} parent=5 // pred_check
      _
    $region70: #{asff_level2_forward.2} parent=5 // pred_check_branch
      %446 = sbr.rel (%p443) target = $region72
    $region71: #{asff_level2_forward.2} parent=5 // pred_region
      %s447 = ssub.s32 %s19, 1
      %p448 = scmp.lt.s32.totalorder %s28, 1
      %s449 = scalar_select %p448, %s28, 1
      %p450 = scmp.lt.s32.totalorder %s29, 1
      %s451 = scalar_select %p450, %s29, 1
      %s452 = smul.addr %s451, 4
      %s453 = smul.addr %s449, 8
      %s454 = sadd.s32 %s452, %s453
      %s455 = smul.addr %s454, 8
      %s456 = scalar_lea.vmem %s0, %s455
      %p457 = pneg %p59
      %p458 = pneg %p56
      %s459 = smul.u32 4, %s29
      %p460 = scmp.lt.s32.totalorder %s28, 1
      %s461 = scalar_select %p460, %s28, 1
      %p462 = scmp.lt.s32.totalorder %s459, 7
      %s463 = scalar_select %p462, %s459, 7
      %s464 = smul.addr %s463, 2
      %s465 = smul.addr %s461, 16
      %s466 = sadd.s32 %s464, %s465
      %s467 = smul.addr %s466, 8
      %s468 = scalar_lea.vmem %s1, %s467
      %p469 = pneg %p87
      %p470 = pneg %p84
      %s471 = smul.u32 16, %s29
      %p472 = scmp.lt.s32.totalorder %s28, 1
      %s473 = scalar_select %p472, %s28, 1
      %p474 = scmp.lt.s32.totalorder %s471, 31
      %s475 = scalar_select %p474, %s471, 31
      %s476 = smul.addr %s473, 32
      %s477 = sadd.s32 %s475, %s476
      %s478 = smul.addr %s477, 8
      %s479 = scalar_lea.vmem %s2, %s478
      %p480 = pneg %p115
      %p481 = pneg %p112
      %p482 = pneg %p136
      %p483 = pneg %p133
      %p484 = pneg %p157
      %p485 = pneg %p154
      %p486 = pneg %p178
      %p487 = pneg %p175
      %p488 = pneg %p199
      %p489 = pneg %p196
      %p490 = pneg %p220
      %p491 = pneg %p217
      %p492 = pneg %p241
      %p493 = pneg %p238
      %p494 = pneg %p262
      %p495 = pneg %p259
      %p496 = pneg %p283
      %p497 = pneg %p280
      %p498 = pneg %p304
      %p499 = pneg %p301
      %p500 = pneg %p325
      %p501 = pneg %p322
      %p502 = pneg %p353
      %p503 = pneg %p350
      %s504 = smul.u32 16, %s29
      %p505 = scmp.lt.s32.totalorder %s28, 1
      %s506 = scalar_select %p505, %s28, 1
      %p507 = scmp.lt.s32.totalorder %s504, 31
      %s508 = scalar_select %p507, %s504, 31
      %s509 = smul.addr %s506, 32
      %s510 = sadd.s32 %s508, %s509
      %s511 = smul.addr %s510, 8
      %s512 = scalar_lea.vmem %s13, %s511
      %p513 = scmp.lt.s32.totalorder %s28, 1
      %s514 = scalar_select %p513, %s28, 1
      %p515 = scmp.lt.s32.totalorder %s29, 1
      %s516 = scalar_select %p515, %s29, 1
      %s517 = smul.addr %s516, 4
      %s518 = smul.addr %s514, 8
      %s519 = sadd.s32 %s517, %s518
      %s520 = smul.addr %s519, 8
      %s521 = scalar_lea.vmem %s0, %s520
      %s522 = smul.u32 4, %s29
      %p523 = scmp.lt.s32.totalorder %s28, 1
      %s524 = scalar_select %p523, %s28, 1
      %p525 = scmp.lt.s32.totalorder %s522, 7
      %s526 = scalar_select %p525, %s522, 7
      %s527 = smul.addr %s526, 2
      %s528 = smul.addr %s524, 16
      %s529 = sadd.s32 %s527, %s528
      %s530 = smul.addr %s529, 8
      %s531 = scalar_lea.vmem %s1, %s530
      %s532 = smul.u32 4, %s29
      %s533 = smul.u32 16, %s29
      %p534 = scmp.lt.s32.totalorder %s28, 1
      %s535 = scalar_select %p534, %s28, 1
      %p536 = scmp.lt.s32.totalorder %s533, 31
      %s537 = scalar_select %p536, %s533, 31
      %s538 = smul.addr %s535, 32
      %s539 = sadd.s32 %s537, %s538
      %s540 = smul.addr %s539, 8
      %s541 = scalar_lea.vmem %s2, %s540
      %s542 = smul.u32 16, %s29
      %s543 = smul.u32 16, %s29
      %p544 = scmp.lt.s32.totalorder %s28, 1
      %s545 = scalar_select %p544, %s28, 1
      %p546 = scmp.lt.s32.totalorder %s543, 31
      %s547 = scalar_select %p546, %s543, 31
      %s548 = smul.addr %s545, 32
      %s549 = sadd.s32 %s547, %s548
      %s550 = smul.addr %s549, 8
      %s551 = scalar_lea.vmem %s13, %s550
      %s552 = smul.u32 16, %s29
      %v553 = vld [vmem:[%s521] sm:$0xff]
      %v554 = vld [vmem:[%s521 + $0x8] sm:$0xff]
      %v555 = vld [vmem:[%s521 + $0x10] sm:$0xff]
      %v556 = vld [vmem:[%s521 + $0x18] sm:$0xff]
      %v557 = vpack.c.bf16 %v553, %v553
      %v558 = vpack.c.bf16 %v554, %v554
      %v559 = vpack.c.bf16 %v555, %v555
      %v560 = vpack.c.bf16 %v556, %v556
      %v561 = vld [vmem:[%s5] sm:$0xf]
      %v562 = vld [vmem:[%s5 + $0x4] sm:$0xf]
      %v563 = vld [vmem:[%s5 + $0x8] sm:$0xf]
      %v564 = vld [vmem:[%s5 + $0xc] sm:$0xf]
      %v565 = vld [vmem:[%s5 + $0x10] sm:$0xf]
      %v566 = vld [vmem:[%s5 + $0x14] sm:$0xf]
      %v567 = vld [vmem:[%s5 + $0x18] sm:$0xf]
      %v568 = vld [vmem:[%s5 + $0x1c] sm:$0xf]
      %v569 = vld [vmem:[%s5 + $0x20] sm:$0xf]
      %v570 = vld [vmem:[%s5 + $0x24] sm:$0xf]
      %v571 = vld [vmem:[%s5 + $0x28] sm:$0xf]
      %v572 = vld [vmem:[%s5 + $0x2c] sm:$0xf]
      %v573 = vld [vmem:[%s5 + $0x30] sm:$0xf]
      %v574 = vld [vmem:[%s5 + $0x34] sm:$0xf]
      %v575 = vld [vmem:[%s5 + $0x38] sm:$0xf]
      %v576 = vld [vmem:[%s5 + $0x3c] sm:$0xf]
      %v577 = vld [vmem:[%s5 + $0x40] sm:$0xf]
      %v578 = vld [vmem:[%s5 + $0x44] sm:$0xf]
      %v579 = vld [vmem:[%s5 + $0x48] sm:$0xf]
      %v580 = vld [vmem:[%s5 + $0x4c] sm:$0xf]
      %v581 = vld [vmem:[%s5 + $0x50] sm:$0xf]
      %v582 = vld [vmem:[%s5 + $0x54] sm:$0xf]
      %v583 = vld [vmem:[%s5 + $0x58] sm:$0xf]
      %v584 = vld [vmem:[%s5 + $0x5c] sm:$0xf]
      %v585 = vld [vmem:[%s5 + $0x60] sm:$0xf]
      %v586 = vld [vmem:[%s5 + $0x64] sm:$0xf]
      %v587 = vld [vmem:[%s5 + $0x68] sm:$0xf]
      %v588 = vld [vmem:[%s5 + $0x6c] sm:$0xf]
      %v589 = vld [vmem:[%s5 + $0x70] sm:$0xf]
      %v590 = vld [vmem:[%s5 + $0x74] sm:$0xf]
      %v591 = vld [vmem:[%s5 + $0x78] sm:$0xf]
      %v592 = vld [vmem:[%s5 + $0x7c] sm:$0xf]
      %v593 = vld [vmem:[%s5 + $0x80] sm:$0xf]
      %v594 = vld [vmem:[%s5 + $0x84] sm:$0xf]
      %v595 = vld [vmem:[%s5 + $0x88] sm:$0xf]
      %v596 = vld [vmem:[%s5 + $0x8c] sm:$0xf]
      %v597 = vld [vmem:[%s5 + $0x90] sm:$0xf]
      %v598 = vld [vmem:[%s5 + $0x94] sm:$0xf]
      %v599 = vld [vmem:[%s5 + $0x98] sm:$0xf]
      %v600 = vld [vmem:[%s5 + $0x9c] sm:$0xf]
      %v601 = vld [vmem:[%s5 + $0xa0] sm:$0xf]
      %v602 = vld [vmem:[%s5 + $0xa4] sm:$0xf]
      %v603 = vld [vmem:[%s5 + $0xa8] sm:$0xf]
      %v604 = vld [vmem:[%s5 + $0xac] sm:$0xf]
      %v605 = vld [vmem:[%s5 + $0xb0] sm:$0xf]
      %v606 = vld [vmem:[%s5 + $0xb4] sm:$0xf]
      %v607 = vld [vmem:[%s5 + $0xb8] sm:$0xf]
      %v608 = vld [vmem:[%s5 + $0xbc] sm:$0xf]
      %v609 = vld [vmem:[%s5 + $0xc0] sm:$0xf]
      %v610 = vld [vmem:[%s5 + $0xc4] sm:$0xf]
      %v611 = vld [vmem:[%s5 + $0xc8] sm:$0xf]
      %v612 = vld [vmem:[%s5 + $0xcc] sm:$0xf]
      %v613 = vld [vmem:[%s5 + $0xd0] sm:$0xf]
      %v614 = vld [vmem:[%s5 + $0xd4] sm:$0xf]
      %v615 = vld [vmem:[%s5 + $0xd8] sm:$0xf]
      %v616 = vld [vmem:[%s5 + $0xdc] sm:$0xf]
      %v617 = vld [vmem:[%s5 + $0xe0] sm:$0xf]
      %v618 = vld [vmem:[%s5 + $0xe4] sm:$0xf]
      %v619 = vld [vmem:[%s5 + $0xe8] sm:$0xf]
      %v620 = vld [vmem:[%s5 + $0xec] sm:$0xf]
      %v621 = vld [vmem:[%s5 + $0xf0] sm:$0xf]
      %v622 = vld [vmem:[%s5 + $0xf4] sm:$0xf]
      %v623 = vld [vmem:[%s5 + $0xf8] sm:$0xf]
      %v624 = vld [vmem:[%s5 + $0xfc] sm:$0xf]
      %v625 = vld [vmem:[%s6] sm:$0x1]
      %v627 = vperm.slane %v625, 0
      %v693 = vunpack.c.l.b16 %v561
      %v694 = vunpack.c.l.b16 %v562
      %v695 = vunpack.c.l.b16 %v563
      %v696 = vunpack.c.l.b16 %v564
      %v697 = vunpack.c.l.b16 %v565
      %v698 = vunpack.c.l.b16 %v566
      %v699 = vunpack.c.l.b16 %v567
      %v700 = vunpack.c.l.b16 %v568
      %v701 = vunpack.c.l.b16 %v569
      %v702 = vunpack.c.l.b16 %v570
      %v703 = vunpack.c.l.b16 %v571
      %v704 = vunpack.c.l.b16 %v572
      %v705 = vunpack.c.l.b16 %v573
      %v706 = vunpack.c.l.b16 %v574
      %v707 = vunpack.c.l.b16 %v575
      %v708 = vunpack.c.l.b16 %v576
      %v709 = vunpack.c.l.b16 %v577
      %v710 = vunpack.c.l.b16 %v578
      %v711 = vunpack.c.l.b16 %v579
      %v712 = vunpack.c.l.b16 %v580
      %v713 = vunpack.c.l.b16 %v581
      %v714 = vunpack.c.l.b16 %v582
      %v715 = vunpack.c.l.b16 %v583
      %v716 = vunpack.c.l.b16 %v584
      %v717 = vunpack.c.l.b16 %v585
      %v718 = vunpack.c.l.b16 %v586
      %v719 = vunpack.c.l.b16 %v587
      %v720 = vunpack.c.l.b16 %v588
      %v721 = vunpack.c.l.b16 %v589
      %v722 = vunpack.c.l.b16 %v590
      %v723 = vunpack.c.l.b16 %v591
      %v724 = vunpack.c.l.b16 %v592
      %v725 = vunpack.c.l.b16 %v593
      %v726 = vunpack.c.l.b16 %v594
      %v727 = vunpack.c.l.b16 %v595
      %v728 = vunpack.c.l.b16 %v596
      %v729 = vunpack.c.l.b16 %v597
      %v730 = vunpack.c.l.b16 %v598
      %v731 = vunpack.c.l.b16 %v599
      %v732 = vunpack.c.l.b16 %v600
      %v733 = vunpack.c.l.b16 %v601
      %v734 = vunpack.c.l.b16 %v602
      %v735 = vunpack.c.l.b16 %v603
      %v736 = vunpack.c.l.b16 %v604
      %v737 = vunpack.c.l.b16 %v605
      %v738 = vunpack.c.l.b16 %v606
      %v739 = vunpack.c.l.b16 %v607
      %v740 = vunpack.c.l.b16 %v608
      %v741 = vunpack.c.l.b16 %v609
      %v742 = vunpack.c.l.b16 %v610
      %v743 = vunpack.c.l.b16 %v611
      %v744 = vunpack.c.l.b16 %v612
      %v745 = vunpack.c.l.b16 %v613
      %v746 = vunpack.c.l.b16 %v614
      %v747 = vunpack.c.l.b16 %v615
      %v748 = vunpack.c.l.b16 %v616
      %v749 = vunpack.c.l.b16 %v617
      %v750 = vunpack.c.l.b16 %v618
      %v751 = vunpack.c.l.b16 %v619
      %v752 = vunpack.c.l.b16 %v620
      %v753 = vunpack.c.l.b16 %v621
      %v754 = vunpack.c.l.b16 %v622
      %v755 = vunpack.c.l.b16 %v623
      %v756 = vunpack.c.l.b16 %v624
      %v757 = vpack.c.b16 %v694, %v693
      %v758 = vpack.c.b16 %v696, %v695
      %v759 = vpack.c.b16 %v698, %v697
      %v760 = vpack.c.b16 %v700, %v699
      %v761 = vpack.c.b16 %v702, %v701
      %v762 = vpack.c.b16 %v704, %v703
      %v763 = vpack.c.b16 %v706, %v705
      %v764 = vpack.c.b16 %v708, %v707
      %v765 = vpack.c.b16 %v710, %v709
      %v766 = vpack.c.b16 %v712, %v711
      %v767 = vpack.c.b16 %v714, %v713
      %v768 = vpack.c.b16 %v716, %v715
      %v769 = vpack.c.b16 %v718, %v717
      %v770 = vpack.c.b16 %v720, %v719
      %v771 = vpack.c.b16 %v722, %v721
      %v772 = vpack.c.b16 %v724, %v723
      %v773 = vpack.c.b16 %v726, %v725
      %v774 = vpack.c.b16 %v728, %v727
      %v775 = vpack.c.b16 %v730, %v729
      %v776 = vpack.c.b16 %v732, %v731
      %v777 = vpack.c.b16 %v734, %v733
      %v778 = vpack.c.b16 %v736, %v735
      %v779 = vpack.c.b16 %v738, %v737
      %v780 = vpack.c.b16 %v740, %v739
      %v781 = vpack.c.b16 %v742, %v741
      %v782 = vpack.c.b16 %v744, %v743
      %v783 = vpack.c.b16 %v746, %v745
      %v784 = vpack.c.b16 %v748, %v747
      %v785 = vpack.c.b16 %v750, %v749
      %v786 = vpack.c.b16 %v752, %v751
      %v787 = vpack.c.b16 %v754, %v753
      %v788 = vpack.c.b16 %v756, %v755
      %821 = vmatpush.bf16.msra.mxu0 %v764
      %822 = vmatpush.bf16.msra.mxu0 %v763
      %823 = vmatpush.bf16.msra.mxu0 %v762
      %824 = vmatpush.bf16.msra.mxu0 %v761
      %825 = vmatpush.bf16.msra.mxu0 %v760
      %826 = vmatpush.bf16.msra.mxu0 %v759
      %827 = vmatpush.bf16.msra.mxu0 %v758
      %828 = vmatpush.bf16.msra.mxu0 %v757
      %829 = vmatmul.bf16.gmra.mxu0 %v557
      %v830 = vpop.f32.mrf.mxu0
      %v831 = vadd.f32 %v627, %v830
      %v832 = vpop.f32.mrf.mxu0
      %833 = vdwg.mxu0
      %834 = vmatpush.bf16.msra.mxu0 %v772
      %835 = vmatpush.bf16.msra.mxu0 %v771
      %836 = vmatpush.bf16.msra.mxu0 %v770
      %837 = vmatpush.bf16.msra.mxu0 %v769
      %838 = vmatpush.bf16.msra.mxu0 %v768
      %839 = vmatpush.bf16.msra.mxu0 %v767
      %840 = vmatpush.bf16.msra.mxu0 %v766
      %841 = vmatpush.bf16.msra.mxu0 %v765
      %842 = vmatmul.bf16.gmra.mxu0 %v558
      %v843 = vpop.f32.mrf.mxu0
      %v844 = vadd.f32 %v831, %v843
      %v845 = vpop.f32.mrf.mxu0
      %846 = vdwg.mxu0
      %847 = vmatpush.bf16.msra.mxu0 %v780
      %848 = vmatpush.bf16.msra.mxu0 %v779
      %849 = vmatpush.bf16.msra.mxu0 %v778
      %850 = vmatpush.bf16.msra.mxu0 %v777
      %851 = vmatpush.bf16.msra.mxu0 %v776
      %852 = vmatpush.bf16.msra.mxu0 %v775
      %853 = vmatpush.bf16.msra.mxu0 %v774
      %854 = vmatpush.bf16.msra.mxu0 %v773
      %855 = vmatmul.bf16.gmra.mxu0 %v559
      %v856 = vpop.f32.mrf.mxu0
      %v857 = vadd.f32 %v844, %v856
      %v858 = vpop.f32.mrf.mxu0
      %859 = vdwg.mxu0
      %860 = vmatpush.bf16.msra.mxu0 %v788
      %861 = vmatpush.bf16.msra.mxu0 %v787
      %862 = vmatpush.bf16.msra.mxu0 %v786
      %863 = vmatpush.bf16.msra.mxu0 %v785
      %864 = vmatpush.bf16.msra.mxu0 %v784
      %865 = vmatpush.bf16.msra.mxu0 %v783
      %866 = vmatpush.bf16.msra.mxu0 %v782
      %867 = vmatpush.bf16.msra.mxu0 %v781
      %868 = vmatmul.bf16.gmra.mxu0 %v560
      %v869 = vpop.f32.mrf.mxu0
      %v870 = vadd.f32 %v857, %v869
      %v871 = vpop.f32.mrf.mxu0
      %872 = vdwg.mxu0
      %vm873 = vcmp.gt.f32.partialorder %v870, 0.0
      %v874 = vmul.f32 %v870, 0.1
      %v875 = vsel %vm873, %v870, %v874
      %v876 = vld [vmem:[%s531] sm:$0xff]
      %v877 = vld [vmem:[%s531 + $0x8] sm:$0xff]
      %v878 = vld [vmem:[%s531 + $0x10] sm:$0xff]
      %v879 = vld [vmem:[%s531 + $0x18] sm:$0xff]
      %v880 = vld [vmem:[%s531 + $0x20] sm:$0xff]
      %v881 = vld [vmem:[%s531 + $0x28] sm:$0xff]
      %v882 = vld [vmem:[%s531 + $0x30] sm:$0xff]
      %v883 = vld [vmem:[%s531 + $0x38] sm:$0xff]
      %v884 = vpack.c.bf16 %v878, %v876
      %v885 = vpack.c.bf16 %v879, %v877
      %v886 = vpack.c.bf16 %v882, %v880
      %v887 = vpack.c.bf16 %v883, %v881
      %v888 = vld [vmem:[%s7] sm:$0xf]
      %v889 = vld [vmem:[%s7 + $0x4] sm:$0xf]
      %v890 = vld [vmem:[%s7 + $0x8] sm:$0xf]
      %v891 = vld [vmem:[%s7 + $0xc] sm:$0xf]
      %v892 = vld [vmem:[%s7 + $0x10] sm:$0xf]
      %v893 = vld [vmem:[%s7 + $0x14] sm:$0xf]
      %v894 = vld [vmem:[%s7 + $0x18] sm:$0xf]
      %v895 = vld [vmem:[%s7 + $0x1c] sm:$0xf]
      %v896 = vld [vmem:[%s7 + $0x20] sm:$0xf]
      %v897 = vld [vmem:[%s7 + $0x24] sm:$0xf]
      %v898 = vld [vmem:[%s7 + $0x28] sm:$0xf]
      %v899 = vld [vmem:[%s7 + $0x2c] sm:$0xf]
      %v900 = vld [vmem:[%s7 + $0x30] sm:$0xf]
      %v901 = vld [vmem:[%s7 + $0x34] sm:$0xf]
      %v902 = vld [vmem:[%s7 + $0x38] sm:$0xf]
      %v903 = vld [vmem:[%s7 + $0x3c] sm:$0xf]
      %v904 = vld [vmem:[%s7 + $0x40] sm:$0xf]
      %v905 = vld [vmem:[%s7 + $0x44] sm:$0xf]
      %v906 = vld [vmem:[%s7 + $0x48] sm:$0xf]
      %v907 = vld [vmem:[%s7 + $0x4c] sm:$0xf]
      %v908 = vld [vmem:[%s7 + $0x50] sm:$0xf]
      %v909 = vld [vmem:[%s7 + $0x54] sm:$0xf]
      %v910 = vld [vmem:[%s7 + $0x58] sm:$0xf]
      %v911 = vld [vmem:[%s7 + $0x5c] sm:$0xf]
      %v912 = vld [vmem:[%s7 + $0x60] sm:$0xf]
      %v913 = vld [vmem:[%s7 + $0x64] sm:$0xf]
      %v914 = vld [vmem:[%s7 + $0x68] sm:$0xf]
      %v915 = vld [vmem:[%s7 + $0x6c] sm:$0xf]
      %v916 = vld [vmem:[%s7 + $0x70] sm:$0xf]
      %v917 = vld [vmem:[%s7 + $0x74] sm:$0xf]
      %v918 = vld [vmem:[%s7 + $0x78] sm:$0xf]
      %v919 = vld [vmem:[%s7 + $0x7c] sm:$0xf]
      %v920 = vld [vmem:[%s8] sm:$0x1]
      %v922 = vperm.slane %v920, 0
      %v956 = vunpack.c.l.b16 %v888
      %v957 = vunpack.c.l.b16 %v889
      %v958 = vunpack.c.l.b16 %v890
      %v959 = vunpack.c.l.b16 %v891
      %v960 = vunpack.c.l.b16 %v892
      %v961 = vunpack.c.l.b16 %v893
      %v962 = vunpack.c.l.b16 %v894
      %v963 = vunpack.c.l.b16 %v895
      %v964 = vunpack.c.l.b16 %v896
      %v965 = vunpack.c.l.b16 %v897
      %v966 = vunpack.c.l.b16 %v898
      %v967 = vunpack.c.l.b16 %v899
      %v968 = vunpack.c.l.b16 %v900
      %v969 = vunpack.c.l.b16 %v901
      %v970 = vunpack.c.l.b16 %v902
      %v971 = vunpack.c.l.b16 %v903
      %v972 = vunpack.c.l.b16 %v904
      %v973 = vunpack.c.l.b16 %v905
      %v974 = vunpack.c.l.b16 %v906
      %v975 = vunpack.c.l.b16 %v907
      %v976 = vunpack.c.l.b16 %v908
      %v977 = vunpack.c.l.b16 %v909
      %v978 = vunpack.c.l.b16 %v910
      %v979 = vunpack.c.l.b16 %v911
      %v980 = vunpack.c.l.b16 %v912
      %v981 = vunpack.c.l.b16 %v913
      %v982 = vunpack.c.l.b16 %v914
      %v983 = vunpack.c.l.b16 %v915
      %v984 = vunpack.c.l.b16 %v916
      %v985 = vunpack.c.l.b16 %v917
      %v986 = vunpack.c.l.b16 %v918
      %v987 = vunpack.c.l.b16 %v919
      %v988 = vpack.c.b16 %v957, %v956
      %v989 = vpack.c.b16 %v959, %v958
      %v990 = vpack.c.b16 %v961, %v960
      %v991 = vpack.c.b16 %v963, %v962
      %v992 = vpack.c.b16 %v965, %v964
      %v993 = vpack.c.b16 %v967, %v966
      %v994 = vpack.c.b16 %v969, %v968
      %v995 = vpack.c.b16 %v971, %v970
      %v996 = vpack.c.b16 %v973, %v972
      %v997 = vpack.c.b16 %v975, %v974
      %v998 = vpack.c.b16 %v977, %v976
      %v999 = vpack.c.b16 %v979, %v978
      %v1000 = vpack.c.b16 %v981, %v980
      %v1001 = vpack.c.b16 %v983, %v982
      %v1002 = vpack.c.b16 %v985, %v984
      %v1003 = vpack.c.b16 %v987, %v986
      %1020 = vmatpush.bf16.msra.mxu0 %v995
      %1021 = vmatpush.bf16.msra.mxu0 %v994
      %1022 = vmatpush.bf16.msra.mxu0 %v993
      %1023 = vmatpush.bf16.msra.mxu0 %v992
      %1024 = vmatpush.bf16.msra.mxu0 %v991
      %1025 = vmatpush.bf16.msra.mxu0 %v990
      %1026 = vmatpush.bf16.msra.mxu0 %v989
      %1027 = vmatpush.bf16.msra.mxu0 %v988
      %1028 = vmatmul.bf16.gmra.mxu0 %v884
      %v1029 = vpop.f32.mrf.mxu0
      %v1030 = vadd.f32 %v922, %v1029
      %v1031 = vpop.f32.mrf.mxu0
      %v1032 = vadd.f32 %v922, %v1031
      %1033 = vmatmul.bf16.gmra.mxu0 %v886
      %v1034 = vpop.f32.mrf.mxu0
      %v1035 = vadd.f32 %v922, %v1034
      %v1036 = vpop.f32.mrf.mxu0
      %v1037 = vadd.f32 %v922, %v1036
      %1038 = vdwg.mxu0
      %1039 = vmatpush.bf16.msra.mxu0 %v1003
      %1040 = vmatpush.bf16.msra.mxu0 %v1002
      %1041 = vmatpush.bf16.msra.mxu0 %v1001
      %1042 = vmatpush.bf16.msra.mxu0 %v1000
      %1043 = vmatpush.bf16.msra.mxu0 %v999
      %1044 = vmatpush.bf16.msra.mxu0 %v998
      %1045 = vmatpush.bf16.msra.mxu0 %v997
      %1046 = vmatpush.bf16.msra.mxu0 %v996
      %1047 = vmatmul.bf16.gmra.mxu0 %v885
      %v1048 = vpop.f32.mrf.mxu0
      %v1049 = vadd.f32 %v1030, %v1048
      %v1050 = vpop.f32.mrf.mxu0
      %v1051 = vadd.f32 %v1032, %v1050
      %1052 = vmatmul.bf16.gmra.mxu0 %v887
      %v1053 = vpop.f32.mrf.mxu0
      %v1054 = vadd.f32 %v1035, %v1053
      %v1055 = vpop.f32.mrf.mxu0
      %v1056 = vadd.f32 %v1037, %v1055
      %1057 = vdwg.mxu0
      %vm1058 = vcmp.gt.f32.partialorder %v1049, 0.0
      %vm1059 = vcmp.gt.f32.partialorder %v1051, 0.0
      %vm1060 = vcmp.gt.f32.partialorder %v1054, 0.0
      %vm1061 = vcmp.gt.f32.partialorder %v1056, 0.0
      %v1062 = vmul.f32 %v1049, 0.1
      %v1063 = vmul.f32 %v1051, 0.1
      %v1064 = vmul.f32 %v1054, 0.1
      %v1065 = vmul.f32 %v1056, 0.1
      %v1066 = vsel %vm1058, %v1049, %v1062
      %v1067 = vsel %vm1059, %v1051, %v1063
      %v1068 = vsel %vm1060, %v1054, %v1064
      %v1069 = vsel %vm1061, %v1056, %v1065
      %v1070 = vld [vmem:[%s541] sm:$0xff]
      %v1071 = vld [vmem:[%s541 + $0x8] sm:$0xff]
      %v1072 = vld [vmem:[%s541 + $0x10] sm:$0xff]
      %v1073 = vld [vmem:[%s541 + $0x18] sm:$0xff]
      %v1074 = vld [vmem:[%s541 + $0x20] sm:$0xff]
      %v1075 = vld [vmem:[%s541 + $0x28] sm:$0xff]
      %v1076 = vld [vmem:[%s541 + $0x30] sm:$0xff]
      %v1077 = vld [vmem:[%s541 + $0x38] sm:$0xff]
      %v1078 = vld [vmem:[%s541 + $0x40] sm:$0xff]
      %v1079 = vld [vmem:[%s541 + $0x48] sm:$0xff]
      %v1080 = vld [vmem:[%s541 + $0x50] sm:$0xff]
      %v1081 = vld [vmem:[%s541 + $0x58] sm:$0xff]
      %v1082 = vld [vmem:[%s541 + $0x60] sm:$0xff]
      %v1083 = vld [vmem:[%s541 + $0x68] sm:$0xff]
      %v1084 = vld [vmem:[%s541 + $0x70] sm:$0xff]
      %v1085 = vld [vmem:[%s541 + $0x78] sm:$0xff]
      %v1086 = vld [vmem:[%s3] sm:$0xff]
      %v1087 = vld [vmem:[%s3 + $0x8] sm:$0xff]
      %v1088 = vld [vmem:[%s3 + $0x10] sm:$0xff]
      %v1089 = vld [vmem:[%s3 + $0x18] sm:$0xff]
      %v1090 = vld [vmem:[%s3 + $0x20] sm:$0xff]
      %v1091 = vld [vmem:[%s3 + $0x28] sm:$0xff]
      %v1092 = vld [vmem:[%s3 + $0x30] sm:$0xff]
      %v1093 = vld [vmem:[%s3 + $0x38] sm:$0xff]
      %v1094 = vld [vmem:[%s3 + $0x40] sm:$0xff]
      %v1095 = vld [vmem:[%s3 + $0x48] sm:$0xff]
      %v1096 = vld [vmem:[%s3 + $0x50] sm:$0xff]
      %v1097 = vld [vmem:[%s3 + $0x58] sm:$0xff]
      %v1098 = vld [vmem:[%s3 + $0x60] sm:$0xff]
      %v1099 = vld [vmem:[%s3 + $0x68] sm:$0xff]
      %v1100 = vld [vmem:[%s3 + $0x70] sm:$0xff]
      %v1101 = vld [vmem:[%s3 + $0x78] sm:$0xff]
      %vm1102 = vcmask 64512
      %v1104 = vsel %vm1102, %v1086, 0
      %v1107 = vsel %vm1102, %v1087, 0
      %v1110 = vsel %vm1102, %v1088, 0
      %v1113 = vsel %vm1102, %v1089, 0
      %v1116 = vsel %vm1102, %v1090, 0
      %v1119 = vsel %vm1102, %v1091, 0
      %v1122 = vsel %vm1102, %v1092, 0
      %v1125 = vsel %vm1102, %v1093, 0
      %v1128 = vsel %vm1102, %v1094, 0
      %v1131 = vsel %vm1102, %v1095, 0
      %v1134 = vsel %vm1102, %v1096, 0
      %v1137 = vsel %vm1102, %v1097, 0
      %v1140 = vsel %vm1102, %v1098, 0
      %v1143 = vsel %vm1102, %v1099, 0
      %v1146 = vsel %vm1102, %v1100, 0
      %v1149 = vsel %vm1102, %v1101, 0
      %1151 = vmatpush.msra.mxu0 0.0
      %1152 = vmatpush.msra.mxu0 0.0
      %1153 = vmatpush.msra.mxu0 0.0
      %1154 = vmatpush.msra.mxu0 0.0
      %1155 = vmatpush.msra.mxu0 0.0
      %1156 = vmatpush.msra.mxu0 0.0
      %1157 = vmatpush.msra.mxu0 0.0
      %1158 = vmatpush.msra.mxu0 0.0
      %1159 = vmatpush.msra.mxu0 0.0
      %1160 = vmatpush.msra.mxu0 0.0
      %1161 = vmatpush.msra.mxu0 0.0
      %1162 = vmatpush.msra.mxu0 0.0
      %1163 = vmatpush.msra.mxu0 0.0
      %1164 = vmatpush.msra.mxu0 0.0
      %1165 = vmatpush.msra.mxu0 0.0
      %1166 = vmatpush.msra.mxu0 %v875
      %1167 = vmatmul.f32.gmra.mxu0 %v1104
      %v1168 = vpop.f32.mrf.mxu0
      %v1169 = vadd.f32 0.0, %v1168
      %1170 = vmatmul.f32.gmra.mxu0 %v1107
      %v1171 = vpop.f32.mrf.mxu0
      %v1172 = vadd.f32 0.0, %v1171
      %1173 = vmatmul.f32.gmra.mxu0 %v1110
      %v1174 = vpop.f32.mrf.mxu0
      %v1175 = vadd.f32 0.0, %v1174
      %1176 = vmatmul.f32.gmra.mxu0 %v1113
      %v1177 = vpop.f32.mrf.mxu0
      %v1178 = vadd.f32 0.0, %v1177
      %1179 = vmatmul.f32.gmra.mxu0 %v1116
      %v1180 = vpop.f32.mrf.mxu0
      %v1181 = vadd.f32 0.0, %v1180
      %1182 = vmatmul.f32.gmra.mxu0 %v1119
      %v1183 = vpop.f32.mrf.mxu0
      %v1184 = vadd.f32 0.0, %v1183
      %1185 = vmatmul.f32.gmra.mxu0 %v1122
      %v1186 = vpop.f32.mrf.mxu0
      %v1187 = vadd.f32 0.0, %v1186
      %1188 = vmatmul.f32.gmra.mxu0 %v1125
      %v1189 = vpop.f32.mrf.mxu0
      %v1190 = vadd.f32 0.0, %v1189
      %1191 = vmatmul.f32.gmra.mxu0 %v1128
      %v1192 = vpop.f32.mrf.mxu0
      %v1193 = vadd.f32 0.0, %v1192
      %1194 = vmatmul.f32.gmra.mxu0 %v1131
      %v1195 = vpop.f32.mrf.mxu0
      %v1196 = vadd.f32 0.0, %v1195
      %1197 = vmatmul.f32.gmra.mxu0 %v1134
      %v1198 = vpop.f32.mrf.mxu0
      %v1199 = vadd.f32 0.0, %v1198
      %1200 = vmatmul.f32.gmra.mxu0 %v1137
      %v1201 = vpop.f32.mrf.mxu0
      %v1202 = vadd.f32 0.0, %v1201
      %1203 = vmatmul.f32.gmra.mxu0 %v1140
      %v1204 = vpop.f32.mrf.mxu0
      %v1205 = vadd.f32 0.0, %v1204
      %1206 = vmatmul.f32.gmra.mxu0 %v1143
      %v1207 = vpop.f32.mrf.mxu0
      %v1208 = vadd.f32 0.0, %v1207
      %1209 = vmatmul.f32.gmra.mxu0 %v1146
      %v1210 = vpop.f32.mrf.mxu0
      %v1211 = vadd.f32 0.0, %v1210
      %1212 = vmatmul.f32.gmra.mxu0 %v1149
      %v1213 = vpop.f32.mrf.mxu0
      %v1214 = vadd.f32 0.0, %v1213
      %1215 = vdwg.mxu0
      %v1216 = vld [vmem:[%s4] sm:$0xff]
      %v1217 = vld [vmem:[%s4 + $0x8] sm:$0xff]
      %v1218 = vld [vmem:[%s4 + $0x10] sm:$0xff]
      %v1219 = vld [vmem:[%s4 + $0x18] sm:$0xff]
      %v1220 = vld [vmem:[%s4 + $0x20] sm:$0xff]
      %v1221 = vld [vmem:[%s4 + $0x28] sm:$0xff]
      %v1222 = vld [vmem:[%s4 + $0x30] sm:$0xff]
      %v1223 = vld [vmem:[%s4 + $0x38] sm:$0xff]
      %v1224 = vld [vmem:[%s4 + $0x40] sm:$0xff]
      %v1225 = vld [vmem:[%s4 + $0x48] sm:$0xff]
      %v1226 = vld [vmem:[%s4 + $0x50] sm:$0xff]
      %v1227 = vld [vmem:[%s4 + $0x58] sm:$0xff]
      %v1228 = vld [vmem:[%s4 + $0x60] sm:$0xff]
      %v1229 = vld [vmem:[%s4 + $0x68] sm:$0xff]
      %v1230 = vld [vmem:[%s4 + $0x70] sm:$0xff]
      %v1231 = vld [vmem:[%s4 + $0x78] sm:$0xff]
      %vm1232 = vcmask 261120
      %v1234 = vsel %vm1232, %v1216, 0
      %v1237 = vsel %vm1232, %v1217, 0
      %v1240 = vsel %vm1232, %v1218, 0
      %v1243 = vsel %vm1232, %v1219, 0
      %v1246 = vsel %vm1232, %v1220, 0
      %v1249 = vsel %vm1232, %v1221, 0
      %v1252 = vsel %vm1232, %v1222, 0
      %v1255 = vsel %vm1232, %v1223, 0
      %v1258 = vsel %vm1232, %v1224, 0
      %v1261 = vsel %vm1232, %v1225, 0
      %v1264 = vsel %vm1232, %v1226, 0
      %v1267 = vsel %vm1232, %v1227, 0
      %v1270 = vsel %vm1232, %v1228, 0
      %v1273 = vsel %vm1232, %v1229, 0
      %v1276 = vsel %vm1232, %v1230, 0
      %v1279 = vsel %vm1232, %v1231, 0
      %1281 = vmatpush.msra.mxu0 0.0
      %1282 = vmatpush.msra.mxu0 0.0
      %1283 = vmatpush.msra.mxu0 0.0
      %1284 = vmatpush.msra.mxu0 0.0
      %1285 = vmatpush.msra.mxu0 0.0
      %1286 = vmatpush.msra.mxu0 0.0
      %1287 = vmatpush.msra.mxu0 0.0
      %1288 = vmatpush.msra.mxu0 0.0
      %1289 = vmatpush.msra.mxu0 0.0
      %1290 = vmatpush.msra.mxu0 0.0
      %1291 = vmatpush.msra.mxu0 0.0
      %1292 = vmatpush.msra.mxu0 0.0
      %1293 = vmatpush.msra.mxu0 %v1069
      %1294 = vmatpush.msra.mxu0 %v1068
      %1295 = vmatpush.msra.mxu0 %v1067
      %1296 = vmatpush.msra.mxu0 %v1066
      %1297 = vmatmul.f32.gmra.mxu0 %v1234
      %v1298 = vpop.f32.mrf.mxu0
      %v1299 = vadd.f32 0.0, %v1298
      %1300 = vmatmul.f32.gmra.mxu0 %v1237
      %v1301 = vpop.f32.mrf.mxu0
      %v1302 = vadd.f32 0.0, %v1301
      %1303 = vmatmul.f32.gmra.mxu0 %v1240
      %v1304 = vpop.f32.mrf.mxu0
      %v1305 = vadd.f32 0.0, %v1304
      %1306 = vmatmul.f32.gmra.mxu0 %v1243
      %v1307 = vpop.f32.mrf.mxu0
      %v1308 = vadd.f32 0.0, %v1307
      %1309 = vmatmul.f32.gmra.mxu0 %v1246
      %v1310 = vpop.f32.mrf.mxu0
      %v1311 = vadd.f32 0.0, %v1310
      %1312 = vmatmul.f32.gmra.mxu0 %v1249
      %v1313 = vpop.f32.mrf.mxu0
      %v1314 = vadd.f32 0.0, %v1313
      %1315 = vmatmul.f32.gmra.mxu0 %v1252
      %v1316 = vpop.f32.mrf.mxu0
      %v1317 = vadd.f32 0.0, %v1316
      %1318 = vmatmul.f32.gmra.mxu0 %v1255
      %v1319 = vpop.f32.mrf.mxu0
      %v1320 = vadd.f32 0.0, %v1319
      %1321 = vmatmul.f32.gmra.mxu0 %v1258
      %v1322 = vpop.f32.mrf.mxu0
      %v1323 = vadd.f32 0.0, %v1322
      %1324 = vmatmul.f32.gmra.mxu0 %v1261
      %v1325 = vpop.f32.mrf.mxu0
      %v1326 = vadd.f32 0.0, %v1325
      %1327 = vmatmul.f32.gmra.mxu0 %v1264
      %v1328 = vpop.f32.mrf.mxu0
      %v1329 = vadd.f32 0.0, %v1328
      %1330 = vmatmul.f32.gmra.mxu0 %v1267
      %v1331 = vpop.f32.mrf.mxu0
      %v1332 = vadd.f32 0.0, %v1331
      %1333 = vmatmul.f32.gmra.mxu0 %v1270
      %v1334 = vpop.f32.mrf.mxu0
      %v1335 = vadd.f32 0.0, %v1334
      %1336 = vmatmul.f32.gmra.mxu0 %v1273
      %v1337 = vpop.f32.mrf.mxu0
      %v1338 = vadd.f32 0.0, %v1337
      %1339 = vmatmul.f32.gmra.mxu0 %v1276
      %v1340 = vpop.f32.mrf.mxu0
      %v1341 = vadd.f32 0.0, %v1340
      %1342 = vmatmul.f32.gmra.mxu0 %v1279
      %v1343 = vpop.f32.mrf.mxu0
      %v1344 = vadd.f32 0.0, %v1343
      %1345 = vdwg.mxu0
      %v1346 = vpack.c.bf16 %v1172, %v1169
      %v1347 = vpack.c.bf16 %v1302, %v1299
      %v1348 = vpack.c.bf16 %v1071, %v1070
      %v1349 = vpack.c.bf16 %v1178, %v1175
      %v1350 = vpack.c.bf16 %v1308, %v1305
      %v1351 = vpack.c.bf16 %v1073, %v1072
      %v1352 = vpack.c.bf16 %v1184, %v1181
      %v1353 = vpack.c.bf16 %v1314, %v1311
      %v1354 = vpack.c.bf16 %v1075, %v1074
      %v1355 = vpack.c.bf16 %v1190, %v1187
      %v1356 = vpack.c.bf16 %v1320, %v1317
      %v1357 = vpack.c.bf16 %v1077, %v1076
      %v1358 = vpack.c.bf16 %v1196, %v1193
      %v1359 = vpack.c.bf16 %v1326, %v1323
      %v1360 = vpack.c.bf16 %v1079, %v1078
      %v1361 = vpack.c.bf16 %v1202, %v1199
      %v1362 = vpack.c.bf16 %v1332, %v1329
      %v1363 = vpack.c.bf16 %v1081, %v1080
      %v1364 = vpack.c.bf16 %v1208, %v1205
      %v1365 = vpack.c.bf16 %v1338, %v1335
      %v1366 = vpack.c.bf16 %v1083, %v1082
      %v1367 = vpack.c.bf16 %v1214, %v1211
      %v1368 = vpack.c.bf16 %v1344, %v1341
      %v1369 = vpack.c.bf16 %v1085, %v1084
      %v1370 = vld [vmem:[%s9] sm:$0xf]
      %v1371 = vld [vmem:[%s9 + $0x4] sm:$0xf]
      %v1372 = vld [vmem:[%s9 + $0x8] sm:$0xf]
      %v1373 = vld [vmem:[%s9 + $0xc] sm:$0xf]
      %v1374 = vld [vmem:[%s9 + $0x10] sm:$0xf]
      %v1375 = vld [vmem:[%s9 + $0x14] sm:$0xf]
      %v1376 = vld [vmem:[%s9 + $0x18] sm:$0xf]
      %v1377 = vld [vmem:[%s9 + $0x1c] sm:$0xf]
      %v1378 = vld [vmem:[%s9 + $0x20] sm:$0xf]
      %v1379 = vld [vmem:[%s9 + $0x24] sm:$0xf]
      %v1380 = vld [vmem:[%s9 + $0x28] sm:$0xf]
      %v1381 = vld [vmem:[%s9 + $0x2c] sm:$0xf]
      %v1382 = vld [vmem:[%s9 + $0x30] sm:$0xf]
      %v1383 = vld [vmem:[%s9 + $0x34] sm:$0xf]
      %v1384 = vld [vmem:[%s9 + $0x38] sm:$0xf]
      %v1385 = vld [vmem:[%s9 + $0x3c] sm:$0xf]
      %v1386 = vld [vmem:[%s9 + $0x40] sm:$0xf]
      %v1387 = vld [vmem:[%s9 + $0x44] sm:$0xf]
      %v1388 = vld [vmem:[%s9 + $0x48] sm:$0xf]
      %v1389 = vld [vmem:[%s9 + $0x4c] sm:$0xf]
      %v1390 = vld [vmem:[%s9 + $0x50] sm:$0xf]
      %v1391 = vld [vmem:[%s9 + $0x54] sm:$0xf]
      %v1392 = vld [vmem:[%s9 + $0x58] sm:$0xf]
      %v1393 = vld [vmem:[%s9 + $0x5c] sm:$0xf]
      %v1394 = vld [vmem:[%s9 + $0x60] sm:$0xf]
      %v1395 = vld [vmem:[%s9 + $0x64] sm:$0xf]
      %v1396 = vld [vmem:[%s9 + $0x68] sm:$0xf]
      %v1397 = vld [vmem:[%s9 + $0x6c] sm:$0xf]
      %v1398 = vld [vmem:[%s9 + $0x70] sm:$0xf]
      %v1399 = vld [vmem:[%s9 + $0x74] sm:$0xf]
      %v1400 = vld [vmem:[%s9 + $0x78] sm:$0xf]
      %v1401 = vld [vmem:[%s9 + $0x7c] sm:$0xf]
      %v1402 = vld [vmem:[%s9 + $0x80] sm:$0xf]
      %v1403 = vld [vmem:[%s9 + $0x84] sm:$0xf]
      %v1404 = vld [vmem:[%s9 + $0x88] sm:$0xf]
      %v1405 = vld [vmem:[%s9 + $0x8c] sm:$0xf]
      %v1406 = vld [vmem:[%s9 + $0x90] sm:$0xf]
      %v1407 = vld [vmem:[%s9 + $0x94] sm:$0xf]
      %v1408 = vld [vmem:[%s9 + $0x98] sm:$0xf]
      %v1409 = vld [vmem:[%s9 + $0x9c] sm:$0xf]
      %v1410 = vld [vmem:[%s9 + $0xa0] sm:$0xf]
      %v1411 = vld [vmem:[%s9 + $0xa4] sm:$0xf]
      %v1412 = vld [vmem:[%s9 + $0xa8] sm:$0xf]
      %v1413 = vld [vmem:[%s9 + $0xac] sm:$0xf]
      %v1414 = vld [vmem:[%s9 + $0xb0] sm:$0xf]
      %v1415 = vld [vmem:[%s9 + $0xb4] sm:$0xf]
      %v1416 = vld [vmem:[%s9 + $0xb8] sm:$0xf]
      %v1417 = vld [vmem:[%s9 + $0xbc] sm:$0xf]
      %v1418 = vld [vmem:[%s10] sm:$0x1]
      %v1420 = vperm.slane %v1418, 0
      %v1470 = vunpack.c.l.b16 %v1370
      %v1471 = vunpack.c.l.b16 %v1371
      %v1472 = vunpack.c.l.b16 %v1372
      %v1473 = vunpack.c.l.b16 %v1373
      %v1474 = vunpack.c.l.b16 %v1374
      %v1475 = vunpack.c.l.b16 %v1375
      %v1476 = vunpack.c.l.b16 %v1376
      %v1477 = vunpack.c.l.b16 %v1377
      %v1478 = vunpack.c.l.b16 %v1378
      %v1479 = vunpack.c.l.b16 %v1379
      %v1480 = vunpack.c.l.b16 %v1380
      %v1481 = vunpack.c.l.b16 %v1381
      %v1482 = vunpack.c.l.b16 %v1382
      %v1483 = vunpack.c.l.b16 %v1383
      %v1484 = vunpack.c.l.b16 %v1384
      %v1485 = vunpack.c.l.b16 %v1385
      %v1486 = vunpack.c.l.b16 %v1386
      %v1487 = vunpack.c.l.b16 %v1387
      %v1488 = vunpack.c.l.b16 %v1388
      %v1489 = vunpack.c.l.b16 %v1389
      %v1490 = vunpack.c.l.b16 %v1390
      %v1491 = vunpack.c.l.b16 %v1391
      %v1492 = vunpack.c.l.b16 %v1392
      %v1493 = vunpack.c.l.b16 %v1393
      %v1494 = vunpack.c.l.b16 %v1394
      %v1495 = vunpack.c.l.b16 %v1395
      %v1496 = vunpack.c.l.b16 %v1396
      %v1497 = vunpack.c.l.b16 %v1397
      %v1498 = vunpack.c.l.b16 %v1398
      %v1499 = vunpack.c.l.b16 %v1399
      %v1500 = vunpack.c.l.b16 %v1400
      %v1501 = vunpack.c.l.b16 %v1401
      %v1502 = vunpack.c.l.b16 %v1402
      %v1503 = vunpack.c.l.b16 %v1403
      %v1504 = vunpack.c.l.b16 %v1404
      %v1505 = vunpack.c.l.b16 %v1405
      %v1506 = vunpack.c.l.b16 %v1406
      %v1507 = vunpack.c.l.b16 %v1407
      %v1508 = vunpack.c.l.b16 %v1408
      %v1509 = vunpack.c.l.b16 %v1409
      %v1510 = vunpack.c.l.b16 %v1410
      %v1511 = vunpack.c.l.b16 %v1411
      %v1512 = vunpack.c.l.b16 %v1412
      %v1513 = vunpack.c.l.b16 %v1413
      %v1514 = vunpack.c.l.b16 %v1414
      %v1515 = vunpack.c.l.b16 %v1415
      %v1516 = vunpack.c.l.b16 %v1416
      %v1517 = vunpack.c.l.b16 %v1417
      %v1518 = vpack.c.b16 %v1471, %v1470
      %v1519 = vpack.c.b16 %v1473, %v1472
      %v1520 = vpack.c.b16 %v1475, %v1474
      %v1521 = vpack.c.b16 %v1477, %v1476
      %v1522 = vpack.c.b16 %v1479, %v1478
      %v1523 = vpack.c.b16 %v1481, %v1480
      %v1524 = vpack.c.b16 %v1483, %v1482
      %v1525 = vpack.c.b16 %v1485, %v1484
      %v1526 = vpack.c.b16 %v1487, %v1486
      %v1527 = vpack.c.b16 %v1489, %v1488
      %v1528 = vpack.c.b16 %v1491, %v1490
      %v1529 = vpack.c.b16 %v1493, %v1492
      %v1530 = vpack.c.b16 %v1495, %v1494
      %v1531 = vpack.c.b16 %v1497, %v1496
      %v1532 = vpack.c.b16 %v1499, %v1498
      %v1533 = vpack.c.b16 %v1501, %v1500
      %v1534 = vpack.c.b16 %v1503, %v1502
      %v1535 = vpack.c.b16 %v1505, %v1504
      %v1536 = vpack.c.b16 %v1507, %v1506
      %v1537 = vpack.c.b16 %v1509, %v1508
      %v1538 = vpack.c.b16 %v1511, %v1510
      %v1539 = vpack.c.b16 %v1513, %v1512
      %v1540 = vpack.c.b16 %v1515, %v1514
      %v1541 = vpack.c.b16 %v1517, %v1516
      %1566 = vmatpush.bf16.msra.mxu0 %v1525
      %1567 = vmatpush.bf16.msra.mxu0 %v1524
      %1568 = vmatpush.bf16.msra.mxu0 %v1523
      %1569 = vmatpush.bf16.msra.mxu0 %v1522
      %1570 = vmatpush.bf16.msra.mxu0 %v1521
      %1571 = vmatpush.bf16.msra.mxu0 %v1520
      %1572 = vmatpush.bf16.msra.mxu0 %v1519
      %1573 = vmatpush.bf16.msra.mxu0 %v1518
      %1574 = vmatmul.bf16.gmra.mxu0 %v1346
      %v1575 = vpop.f32.mrf.mxu0
      %v1576 = vadd.f32 %v1420, %v1575
      %v1577 = vpop.f32.mrf.mxu0
      %v1578 = vadd.f32 %v1420, %v1577
      %1579 = vmatmul.bf16.gmra.mxu0 %v1349
      %v1580 = vpop.f32.mrf.mxu0
      %v1581 = vadd.f32 %v1420, %v1580
      %v1582 = vpop.f32.mrf.mxu0
      %v1583 = vadd.f32 %v1420, %v1582
      %1584 = vmatmul.bf16.gmra.mxu0 %v1352
      %v1585 = vpop.f32.mrf.mxu0
      %v1586 = vadd.f32 %v1420, %v1585
      %v1587 = vpop.f32.mrf.mxu0
      %v1588 = vadd.f32 %v1420, %v1587
      %1589 = vmatmul.bf16.gmra.mxu0 %v1355
      %v1590 = vpop.f32.mrf.mxu0
      %v1591 = vadd.f32 %v1420, %v1590
      %v1592 = vpop.f32.mrf.mxu0
      %v1593 = vadd.f32 %v1420, %v1592
      %1594 = vmatmul.bf16.gmra.mxu0 %v1358
      %v1595 = vpop.f32.mrf.mxu0
      %v1596 = vadd.f32 %v1420, %v1595
      %v1597 = vpop.f32.mrf.mxu0
      %v1598 = vadd.f32 %v1420, %v1597
      %1599 = vmatmul.bf16.gmra.mxu0 %v1361
      %v1600 = vpop.f32.mrf.mxu0
      %v1601 = vadd.f32 %v1420, %v1600
      %v1602 = vpop.f32.mrf.mxu0
      %v1603 = vadd.f32 %v1420, %v1602
      %1604 = vmatmul.bf16.gmra.mxu0 %v1364
      %v1605 = vpop.f32.mrf.mxu0
      %v1606 = vadd.f32 %v1420, %v1605
      %v1607 = vpop.f32.mrf.mxu0
      %v1608 = vadd.f32 %v1420, %v1607
      %1609 = vmatmul.bf16.gmra.mxu0 %v1367
      %v1610 = vpop.f32.mrf.mxu0
      %v1611 = vadd.f32 %v1420, %v1610
      %v1612 = vpop.f32.mrf.mxu0
      %v1613 = vadd.f32 %v1420, %v1612
      %1614 = vdwg.mxu0
      %1615 = vmatpush.bf16.msra.mxu0 %v1533
      %1616 = vmatpush.bf16.msra.mxu0 %v1532
      %1617 = vmatpush.bf16.msra.mxu0 %v1531
      %1618 = vmatpush.bf16.msra.mxu0 %v1530
      %1619 = vmatpush.bf16.msra.mxu0 %v1529
      %1620 = vmatpush.bf16.msra.mxu0 %v1528
      %1621 = vmatpush.bf16.msra.mxu0 %v1527
      %1622 = vmatpush.bf16.msra.mxu0 %v1526
      %1623 = vmatmul.bf16.gmra.mxu0 %v1347
      %v1624 = vpop.f32.mrf.mxu0
      %v1625 = vadd.f32 %v1576, %v1624
      %v1626 = vpop.f32.mrf.mxu0
      %v1627 = vadd.f32 %v1578, %v1626
      %1628 = vmatmul.bf16.gmra.mxu0 %v1350
      %v1629 = vpop.f32.mrf.mxu0
      %v1630 = vadd.f32 %v1581, %v1629
      %v1631 = vpop.f32.mrf.mxu0
      %v1632 = vadd.f32 %v1583, %v1631
      %1633 = vmatmul.bf16.gmra.mxu0 %v1353
      %v1634 = vpop.f32.mrf.mxu0
      %v1635 = vadd.f32 %v1586, %v1634
      %v1636 = vpop.f32.mrf.mxu0
      %v1637 = vadd.f32 %v1588, %v1636
      %1638 = vmatmul.bf16.gmra.mxu0 %v1356
      %v1639 = vpop.f32.mrf.mxu0
      %v1640 = vadd.f32 %v1591, %v1639
      %v1641 = vpop.f32.mrf.mxu0
      %v1642 = vadd.f32 %v1593, %v1641
      %1643 = vmatmul.bf16.gmra.mxu0 %v1359
      %v1644 = vpop.f32.mrf.mxu0
      %v1645 = vadd.f32 %v1596, %v1644
      %v1646 = vpop.f32.mrf.mxu0
      %v1647 = vadd.f32 %v1598, %v1646
      %1648 = vmatmul.bf16.gmra.mxu0 %v1362
      %v1649 = vpop.f32.mrf.mxu0
      %v1650 = vadd.f32 %v1601, %v1649
      %v1651 = vpop.f32.mrf.mxu0
      %v1652 = vadd.f32 %v1603, %v1651
      %1653 = vmatmul.bf16.gmra.mxu0 %v1365
      %v1654 = vpop.f32.mrf.mxu0
      %v1655 = vadd.f32 %v1606, %v1654
      %v1656 = vpop.f32.mrf.mxu0
      %v1657 = vadd.f32 %v1608, %v1656
      %1658 = vmatmul.bf16.gmra.mxu0 %v1368
      %v1659 = vpop.f32.mrf.mxu0
      %v1660 = vadd.f32 %v1611, %v1659
      %v1661 = vpop.f32.mrf.mxu0
      %v1662 = vadd.f32 %v1613, %v1661
      %1663 = vdwg.mxu0
      %1664 = vmatpush.bf16.msra.mxu0 %v1541
      %1665 = vmatpush.bf16.msra.mxu0 %v1540
      %1666 = vmatpush.bf16.msra.mxu0 %v1539
      %1667 = vmatpush.bf16.msra.mxu0 %v1538
      %1668 = vmatpush.bf16.msra.mxu0 %v1537
      %1669 = vmatpush.bf16.msra.mxu0 %v1536
      %1670 = vmatpush.bf16.msra.mxu0 %v1535
      %1671 = vmatpush.bf16.msra.mxu0 %v1534
      %1672 = vmatmul.bf16.gmra.mxu0 %v1348
      %v1673 = vpop.f32.mrf.mxu0
      %v1674 = vadd.f32 %v1625, %v1673
      %v1675 = vpop.f32.mrf.mxu0
      %v1676 = vadd.f32 %v1627, %v1675
      %1677 = vmatmul.bf16.gmra.mxu0 %v1351
      %v1678 = vpop.f32.mrf.mxu0
      %v1679 = vadd.f32 %v1630, %v1678
      %v1680 = vpop.f32.mrf.mxu0
      %v1681 = vadd.f32 %v1632, %v1680
      %1682 = vmatmul.bf16.gmra.mxu0 %v1354
      %v1683 = vpop.f32.mrf.mxu0
      %v1684 = vadd.f32 %v1635, %v1683
      %v1685 = vpop.f32.mrf.mxu0
      %v1686 = vadd.f32 %v1637, %v1685
      %1687 = vmatmul.bf16.gmra.mxu0 %v1357
      %v1688 = vpop.f32.mrf.mxu0
      %v1689 = vadd.f32 %v1640, %v1688
      %v1690 = vpop.f32.mrf.mxu0
      %v1691 = vadd.f32 %v1642, %v1690
      %1692 = vmatmul.bf16.gmra.mxu0 %v1360
      %v1693 = vpop.f32.mrf.mxu0
      %v1694 = vadd.f32 %v1645, %v1693
      %v1695 = vpop.f32.mrf.mxu0
      %v1696 = vadd.f32 %v1647, %v1695
      %1697 = vmatmul.bf16.gmra.mxu0 %v1363
      %v1698 = vpop.f32.mrf.mxu0
      %v1699 = vadd.f32 %v1650, %v1698
      %v1700 = vpop.f32.mrf.mxu0
      %v1701 = vadd.f32 %v1652, %v1700
      %1702 = vmatmul.bf16.gmra.mxu0 %v1366
      %v1703 = vpop.f32.mrf.mxu0
      %v1704 = vadd.f32 %v1655, %v1703
      %v1705 = vpop.f32.mrf.mxu0
      %v1706 = vadd.f32 %v1657, %v1705
      %1707 = vmatmul.bf16.gmra.mxu0 %v1369
      %v1708 = vpop.f32.mrf.mxu0
      %v1709 = vadd.f32 %v1660, %v1708
      %v1710 = vpop.f32.mrf.mxu0
      %v1711 = vadd.f32 %v1662, %v1710
      %1712 = vdwg.mxu0
      %vm1713 = vcmp.gt.f32.partialorder %v1674, 0.0
      %vm1714 = vcmp.gt.f32.partialorder %v1676, 0.0
      %vm1715 = vcmp.gt.f32.partialorder %v1679, 0.0
      %vm1716 = vcmp.gt.f32.partialorder %v1681, 0.0
      %vm1717 = vcmp.gt.f32.partialorder %v1684, 0.0
      %vm1718 = vcmp.gt.f32.partialorder %v1686, 0.0
      %vm1719 = vcmp.gt.f32.partialorder %v1689, 0.0
      %vm1720 = vcmp.gt.f32.partialorder %v1691, 0.0
      %vm1721 = vcmp.gt.f32.partialorder %v1694, 0.0
      %vm1722 = vcmp.gt.f32.partialorder %v1696, 0.0
      %vm1723 = vcmp.gt.f32.partialorder %v1699, 0.0
      %vm1724 = vcmp.gt.f32.partialorder %v1701, 0.0
      %vm1725 = vcmp.gt.f32.partialorder %v1704, 0.0
      %vm1726 = vcmp.gt.f32.partialorder %v1706, 0.0
      %vm1727 = vcmp.gt.f32.partialorder %v1709, 0.0
      %vm1728 = vcmp.gt.f32.partialorder %v1711, 0.0
      %v1729 = vmul.f32 %v1674, 0.1
      %v1730 = vmul.f32 %v1676, 0.1
      %v1731 = vmul.f32 %v1679, 0.1
      %v1732 = vmul.f32 %v1681, 0.1
      %v1733 = vmul.f32 %v1684, 0.1
      %v1734 = vmul.f32 %v1686, 0.1
      %v1735 = vmul.f32 %v1689, 0.1
      %v1736 = vmul.f32 %v1691, 0.1
      %v1737 = vmul.f32 %v1694, 0.1
      %v1738 = vmul.f32 %v1696, 0.1
      %v1739 = vmul.f32 %v1699, 0.1
      %v1740 = vmul.f32 %v1701, 0.1
      %v1741 = vmul.f32 %v1704, 0.1
      %v1742 = vmul.f32 %v1706, 0.1
      %v1743 = vmul.f32 %v1709, 0.1
      %v1744 = vmul.f32 %v1711, 0.1
      %v1745 = vsel %vm1713, %v1674, %v1729
      %v1746 = vsel %vm1714, %v1676, %v1730
      %v1747 = vsel %vm1715, %v1679, %v1731
      %v1748 = vsel %vm1716, %v1681, %v1732
      %v1749 = vsel %vm1717, %v1684, %v1733
      %v1750 = vsel %vm1718, %v1686, %v1734
      %v1751 = vsel %vm1719, %v1689, %v1735
      %v1752 = vsel %vm1720, %v1691, %v1736
      %v1753 = vsel %vm1721, %v1694, %v1737
      %v1754 = vsel %vm1722, %v1696, %v1738
      %v1755 = vsel %vm1723, %v1699, %v1739
      %v1756 = vsel %vm1724, %v1701, %v1740
      %v1757 = vsel %vm1725, %v1704, %v1741
      %v1758 = vsel %vm1726, %v1706, %v1742
      %v1759 = vsel %vm1727, %v1709, %v1743
      %v1760 = vsel %vm1728, %v1711, %v1744
      %v1761 = vld [vmem:[%s11] sm:$0xff]
      %v1762 = vld [vmem:[%s11 + $0x8] sm:$0xff]
      %v1763 = vld [vmem:[%s11 + $0x10] sm:$0xff]
      %v1764 = vld [vmem:[%s11 + $0x18] sm:$0xff]
      %v1765 = vld [vmem:[%s11 + $0x20] sm:$0xff]
      %v1766 = vld [vmem:[%s11 + $0x28] sm:$0xff]
      %v1767 = vld [vmem:[%s12] sm:$0x1]
      %v1769 = vperm.slane %v1767, 0
      %vm1771 = vcmask 392192
      %v1773 = vsel %vm1771, %v1745, 0
      %v1776 = vsel %vm1771, %v1746, 0
      %v1779 = vsel %vm1771, %v1747, 0
      %v1782 = vsel %vm1771, %v1748, 0
      %v1785 = vsel %vm1771, %v1749, 0
      %v1788 = vsel %vm1771, %v1750, 0
      %v1791 = vsel %vm1771, %v1751, 0
      %v1794 = vsel %vm1771, %v1752, 0
      %v1797 = vsel %vm1771, %v1753, 0
      %v1800 = vsel %vm1771, %v1754, 0
      %v1803 = vsel %vm1771, %v1755, 0
      %v1806 = vsel %vm1771, %v1756, 0
      %v1809 = vsel %vm1771, %v1757, 0
      %v1812 = vsel %vm1771, %v1758, 0
      %v1815 = vsel %vm1771, %v1759, 0
      %v1818 = vsel %vm1771, %v1760, 0
      %1820 = vmatpush.msra.mxu0 0.0
      %1821 = vmatpush.msra.mxu0 0.0
      %1822 = vmatpush.msra.mxu0 0.0
      %1823 = vmatpush.msra.mxu0 0.0
      %1824 = vmatpush.msra.mxu0 0.0
      %1825 = vmatpush.msra.mxu0 0.0
      %1826 = vmatpush.msra.mxu0 0.0
      %1827 = vmatpush.msra.mxu0 0.0
      %1828 = vmatpush.msra.mxu0 0.0
      %1829 = vmatpush.msra.mxu0 0.0
      %1830 = vmatpush.msra.mxu0 %v1766
      %1831 = vmatpush.msra.mxu0 %v1765
      %1832 = vmatpush.msra.mxu0 %v1764
      %1833 = vmatpush.msra.mxu0 %v1763
      %1834 = vmatpush.msra.mxu0 %v1762
      %1835 = vmatpush.msra.mxu0 %v1761
      %1836 = vmatmul.f32.gmra.mxu0 %v1773
      %v1837 = vpop.f32.mrf.mxu0
      %v1838 = vadd.f32 %v1769, %v1837
      %1839 = vmatmul.f32.gmra.mxu0 %v1776
      %v1840 = vpop.f32.mrf.mxu0
      %v1841 = vadd.f32 %v1769, %v1840
      %1842 = vmatmul.f32.gmra.mxu0 %v1779
      %v1843 = vpop.f32.mrf.mxu0
      %v1844 = vadd.f32 %v1769, %v1843
      %1845 = vmatmul.f32.gmra.mxu0 %v1782
      %v1846 = vpop.f32.mrf.mxu0
      %v1847 = vadd.f32 %v1769, %v1846
      %1848 = vmatmul.f32.gmra.mxu0 %v1785
      %v1849 = vpop.f32.mrf.mxu0
      %v1850 = vadd.f32 %v1769, %v1849
      %1851 = vmatmul.f32.gmra.mxu0 %v1788
      %v1852 = vpop.f32.mrf.mxu0
      %v1853 = vadd.f32 %v1769, %v1852
      %1854 = vmatmul.f32.gmra.mxu0 %v1791
      %v1855 = vpop.f32.mrf.mxu0
      %v1856 = vadd.f32 %v1769, %v1855
      %1857 = vmatmul.f32.gmra.mxu0 %v1794
      %v1858 = vpop.f32.mrf.mxu0
      %v1859 = vadd.f32 %v1769, %v1858
      %1860 = vmatmul.f32.gmra.mxu0 %v1797
      %v1861 = vpop.f32.mrf.mxu0
      %v1862 = vadd.f32 %v1769, %v1861
      %1863 = vmatmul.f32.gmra.mxu0 %v1800
      %v1864 = vpop.f32.mrf.mxu0
      %v1865 = vadd.f32 %v1769, %v1864
      %1866 = vmatmul.f32.gmra.mxu0 %v1803
      %v1867 = vpop.f32.mrf.mxu0
      %v1868 = vadd.f32 %v1769, %v1867
      %1869 = vmatmul.f32.gmra.mxu0 %v1806
      %v1870 = vpop.f32.mrf.mxu0
      %v1871 = vadd.f32 %v1769, %v1870
      %1872 = vmatmul.f32.gmra.mxu0 %v1809
      %v1873 = vpop.f32.mrf.mxu0
      %v1874 = vadd.f32 %v1769, %v1873
      %1875 = vmatmul.f32.gmra.mxu0 %v1812
      %v1876 = vpop.f32.mrf.mxu0
      %v1877 = vadd.f32 %v1769, %v1876
      %1878 = vmatmul.f32.gmra.mxu0 %v1815
      %v1879 = vpop.f32.mrf.mxu0
      %v1880 = vadd.f32 %v1769, %v1879
      %1881 = vmatmul.f32.gmra.mxu0 %v1818
      %v1882 = vpop.f32.mrf.mxu0
      %v1883 = vadd.f32 %v1769, %v1882
      %1884 = vdwg.mxu0
      %vm1885 = vcmask 23552
      %v1886 = vsel %vm1885, %v1838, -inf
      %1887 = vmax.xlane.f32.xlu0 %v1886
      %v1888 = vpop.xlane.xlu0 %1887
      %v1889 = vsel %vm1885, %v1841, -inf
      %1890 = vmax.xlane.f32.xlu0 %v1889
      %v1891 = vpop.xlane.xlu0 %1890
      %v1892 = vsel %vm1885, %v1844, -inf
      %1893 = vmax.xlane.f32.xlu0 %v1892
      %v1894 = vpop.xlane.xlu0 %1893
      %v1895 = vsel %vm1885, %v1847, -inf
      %1896 = vmax.xlane.f32.xlu0 %v1895
      %v1897 = vpop.xlane.xlu0 %1896
      %v1898 = vsel %vm1885, %v1850, -inf
      %1899 = vmax.xlane.f32.xlu0 %v1898
      %v1900 = vpop.xlane.xlu0 %1899
      %v1901 = vsel %vm1885, %v1853, -inf
      %1902 = vmax.xlane.f32.xlu0 %v1901
      %v1903 = vpop.xlane.xlu0 %1902
      %v1904 = vsel %vm1885, %v1856, -inf
      %1905 = vmax.xlane.f32.xlu0 %v1904
      %v1906 = vpop.xlane.xlu0 %1905
      %v1907 = vsel %vm1885, %v1859, -inf
      %1908 = vmax.xlane.f32.xlu0 %v1907
      %v1909 = vpop.xlane.xlu0 %1908
      %v1910 = vsel %vm1885, %v1862, -inf
      %1911 = vmax.xlane.f32.xlu0 %v1910
      %v1912 = vpop.xlane.xlu0 %1911
      %v1913 = vsel %vm1885, %v1865, -inf
      %1914 = vmax.xlane.f32.xlu0 %v1913
      %v1915 = vpop.xlane.xlu0 %1914
      %v1916 = vsel %vm1885, %v1868, -inf
      %1917 = vmax.xlane.f32.xlu0 %v1916
      %v1918 = vpop.xlane.xlu0 %1917
      %v1919 = vsel %vm1885, %v1871, -inf
      %1920 = vmax.xlane.f32.xlu0 %v1919
      %v1921 = vpop.xlane.xlu0 %1920
      %v1922 = vsel %vm1885, %v1874, -inf
      %1923 = vmax.xlane.f32.xlu0 %v1922
      %v1924 = vpop.xlane.xlu0 %1923
      %v1925 = vsel %vm1885, %v1877, -inf
      %1926 = vmax.xlane.f32.xlu0 %v1925
      %v1927 = vpop.xlane.xlu0 %1926
      %v1928 = vsel %vm1885, %v1880, -inf
      %1929 = vmax.xlane.f32.xlu0 %v1928
      %v1930 = vpop.xlane.xlu0 %1929
      %v1931 = vsel %vm1885, %v1883, -inf
      %1932 = vmax.xlane.f32.xlu0 %v1931
      %v1933 = vpop.xlane.xlu0 %1932
      %v1934 = vsub.f32 %v1838, %v1888
      %v1935 = vsub.f32 %v1841, %v1891
      %v1936 = vsub.f32 %v1844, %v1894
      %v1937 = vsub.f32 %v1847, %v1897
      %v1938 = vsub.f32 %v1850, %v1900
      %v1939 = vsub.f32 %v1853, %v1903
      %v1940 = vsub.f32 %v1856, %v1906
      %v1941 = vsub.f32 %v1859, %v1909
      %v1942 = vsub.f32 %v1862, %v1912
      %v1943 = vsub.f32 %v1865, %v1915
      %v1944 = vsub.f32 %v1868, %v1918
      %v1945 = vsub.f32 %v1871, %v1921
      %v1946 = vsub.f32 %v1874, %v1924
      %v1947 = vsub.f32 %v1877, %v1927
      %v1948 = vsub.f32 %v1880, %v1930
      %v1949 = vsub.f32 %v1883, %v1933
      %v1950 = vmul.f32 %v1934, 1.442695
      %v1951 = vpow.pop %v1950
      %v1952 = vmul.f32 %v1935, 1.442695
      %v1953 = vpow.pop %v1952
      %v1954 = vmul.f32 %v1936, 1.442695
      %v1955 = vpow.pop %v1954
      %v1956 = vmul.f32 %v1937, 1.442695
      %v1957 = vpow.pop %v1956
      %v1958 = vmul.f32 %v1938, 1.442695
      %v1959 = vpow.pop %v1958
      %v1960 = vmul.f32 %v1939, 1.442695
      %v1961 = vpow.pop %v1960
      %v1962 = vmul.f32 %v1940, 1.442695
      %v1963 = vpow.pop %v1962
      %v1964 = vmul.f32 %v1941, 1.442695
      %v1965 = vpow.pop %v1964
      %v1966 = vmul.f32 %v1942, 1.442695
      %v1967 = vpow.pop %v1966
      %v1968 = vmul.f32 %v1943, 1.442695
      %v1969 = vpow.pop %v1968
      %v1970 = vmul.f32 %v1944, 1.442695
      %v1971 = vpow.pop %v1970
      %v1972 = vmul.f32 %v1945, 1.442695
      %v1973 = vpow.pop %v1972
      %v1974 = vmul.f32 %v1946, 1.442695
      %v1975 = vpow.pop %v1974
      %v1976 = vmul.f32 %v1947, 1.442695
      %v1977 = vpow.pop %v1976
      %v1978 = vmul.f32 %v1948, 1.442695
      %v1979 = vpow.pop %v1978
      %v1980 = vmul.f32 %v1949, 1.442695
      %v1981 = vpow.pop %v1980
      %v1982 = vsel %vm1885, %v1951, 0.0
      %1983 = vadd.xlane.f32.xlu0 %v1982
      %v1984 = vpop.xlane.xlu0 %1983
      %v1985 = vsel %vm1885, %v1953, 0.0
      %1986 = vadd.xlane.f32.xlu0 %v1985
      %v1987 = vpop.xlane.xlu0 %1986
      %v1988 = vsel %vm1885, %v1955, 0.0
      %1989 = vadd.xlane.f32.xlu0 %v1988
      %v1990 = vpop.xlane.xlu0 %1989
      %v1991 = vsel %vm1885, %v1957, 0.0
      %1992 = vadd.xlane.f32.xlu0 %v1991
      %v1993 = vpop.xlane.xlu0 %1992
      %v1994 = vsel %vm1885, %v1959, 0.0
      %1995 = vadd.xlane.f32.xlu0 %v1994
      %v1996 = vpop.xlane.xlu0 %1995
      %v1997 = vsel %vm1885, %v1961, 0.0
      %1998 = vadd.xlane.f32.xlu0 %v1997
      %v1999 = vpop.xlane.xlu0 %1998
      %v2000 = vsel %vm1885, %v1963, 0.0
      %2001 = vadd.xlane.f32.xlu0 %v2000
      %v2002 = vpop.xlane.xlu0 %2001
      %v2003 = vsel %vm1885, %v1965, 0.0
      %2004 = vadd.xlane.f32.xlu0 %v2003
      %v2005 = vpop.xlane.xlu0 %2004
      %v2006 = vsel %vm1885, %v1967, 0.0
      %2007 = vadd.xlane.f32.xlu0 %v2006
      %v2008 = vpop.xlane.xlu0 %2007
      %v2009 = vsel %vm1885, %v1969, 0.0
      %2010 = vadd.xlane.f32.xlu0 %v2009
      %v2011 = vpop.xlane.xlu0 %2010
      %v2012 = vsel %vm1885, %v1971, 0.0
      %2013 = vadd.xlane.f32.xlu0 %v2012
      %v2014 = vpop.xlane.xlu0 %2013
      %v2015 = vsel %vm1885, %v1973, 0.0
      %2016 = vadd.xlane.f32.xlu0 %v2015
      %v2017 = vpop.xlane.xlu0 %2016
      %v2018 = vsel %vm1885, %v1975, 0.0
      %2019 = vadd.xlane.f32.xlu0 %v2018
      %v2020 = vpop.xlane.xlu0 %2019
      %v2021 = vsel %vm1885, %v1977, 0.0
      %2022 = vadd.xlane.f32.xlu0 %v2021
      %v2023 = vpop.xlane.xlu0 %2022
      %v2024 = vsel %vm1885, %v1979, 0.0
      %2025 = vadd.xlane.f32.xlu0 %v2024
      %v2026 = vpop.xlane.xlu0 %2025
      %v2027 = vsel %vm1885, %v1981, 0.0
      %2028 = vadd.xlane.f32.xlu0 %v2027
      %v2029 = vpop.xlane.xlu0 %2028
      %v2030 = vrcp.pop %v1984
      %v2031 = vrcp.pop %v1987
      %v2032 = vrcp.pop %v1990
      %v2033 = vrcp.pop %v1993
      %v2034 = vrcp.pop %v1996
      %v2035 = vrcp.pop %v1999
      %v2036 = vrcp.pop %v2002
      %v2037 = vrcp.pop %v2005
      %v2038 = vrcp.pop %v2008
      %v2039 = vrcp.pop %v2011
      %v2040 = vrcp.pop %v2014
      %v2041 = vrcp.pop %v2017
      %v2042 = vrcp.pop %v2020
      %v2043 = vrcp.pop %v2023
      %v2044 = vrcp.pop %v2026
      %v2045 = vrcp.pop %v2029
      %v2046 = vmul.f32 %v1951, %v2030
      %v2047 = vmul.f32 %v1953, %v2031
      %v2048 = vmul.f32 %v1955, %v2032
      %v2049 = vmul.f32 %v1957, %v2033
      %v2050 = vmul.f32 %v1959, %v2034
      %v2051 = vmul.f32 %v1961, %v2035
      %v2052 = vmul.f32 %v1963, %v2036
      %v2053 = vmul.f32 %v1965, %v2037
      %v2054 = vmul.f32 %v1967, %v2038
      %v2055 = vmul.f32 %v1969, %v2039
      %v2056 = vmul.f32 %v1971, %v2040
      %v2057 = vmul.f32 %v1973, %v2041
      %v2058 = vmul.f32 %v1975, %v2042
      %v2059 = vmul.f32 %v1977, %v2043
      %v2060 = vmul.f32 %v1979, %v2044
      %v2061 = vmul.f32 %v1981, %v2045
      %2063 = vset.pattern.permute.xlu0 0
      %2064 = vperm.xlu0 %2063, %v2046
      %v2065 = vpop.permute.xlu0 %2064
      %2068 = vset.pattern.permute.xlu0 0
      %2069 = vperm.xlu0 %2068, %v2047
      %v2070 = vpop.permute.xlu0 %2069
      %2073 = vset.pattern.permute.xlu0 0
      %2074 = vperm.xlu0 %2073, %v2048
      %v2075 = vpop.permute.xlu0 %2074
      %2078 = vset.pattern.permute.xlu0 0
      %2079 = vperm.xlu0 %2078, %v2049
      %v2080 = vpop.permute.xlu0 %2079
      %2083 = vset.pattern.permute.xlu0 0
      %2084 = vperm.xlu0 %2083, %v2050
      %v2085 = vpop.permute.xlu0 %2084
      %2088 = vset.pattern.permute.xlu0 0
      %2089 = vperm.xlu0 %2088, %v2051
      %v2090 = vpop.permute.xlu0 %2089
      %2093 = vset.pattern.permute.xlu0 0
      %2094 = vperm.xlu0 %2093, %v2052
      %v2095 = vpop.permute.xlu0 %2094
      %2098 = vset.pattern.permute.xlu0 0
      %2099 = vperm.xlu0 %2098, %v2053
      %v2100 = vpop.permute.xlu0 %2099
      %2103 = vset.pattern.permute.xlu0 0
      %2104 = vperm.xlu0 %2103, %v2054
      %v2105 = vpop.permute.xlu0 %2104
      %2108 = vset.pattern.permute.xlu0 0
      %2109 = vperm.xlu0 %2108, %v2055
      %v2110 = vpop.permute.xlu0 %2109
      %2113 = vset.pattern.permute.xlu0 0
      %2114 = vperm.xlu0 %2113, %v2056
      %v2115 = vpop.permute.xlu0 %2114
      %2118 = vset.pattern.permute.xlu0 0
      %2119 = vperm.xlu0 %2118, %v2057
      %v2120 = vpop.permute.xlu0 %2119
      %2123 = vset.pattern.permute.xlu0 0
      %2124 = vperm.xlu0 %2123, %v2058
      %v2125 = vpop.permute.xlu0 %2124
      %2128 = vset.pattern.permute.xlu0 0
      %2129 = vperm.xlu0 %2128, %v2059
      %v2130 = vpop.permute.xlu0 %2129
      %2133 = vset.pattern.permute.xlu0 0
      %2134 = vperm.xlu0 %2133, %v2060
      %v2135 = vpop.permute.xlu0 %2134
      %2138 = vset.pattern.permute.xlu0 0
      %2139 = vperm.xlu0 %2138, %v2061
      %v2140 = vpop.permute.xlu0 %2139
      %v2142 = vmul.f32 %v1169, %v2065
      %v2143 = vmul.f32 %v1172, %v2070
      %v2144 = vmul.f32 %v1175, %v2075
      %v2145 = vmul.f32 %v1178, %v2080
      %v2146 = vmul.f32 %v1181, %v2085
      %v2147 = vmul.f32 %v1184, %v2090
      %v2148 = vmul.f32 %v1187, %v2095
      %v2149 = vmul.f32 %v1190, %v2100
      %v2150 = vmul.f32 %v1193, %v2105
      %v2151 = vmul.f32 %v1196, %v2110
      %v2152 = vmul.f32 %v1199, %v2115
      %v2153 = vmul.f32 %v1202, %v2120
      %v2154 = vmul.f32 %v1205, %v2125
      %v2155 = vmul.f32 %v1208, %v2130
      %v2156 = vmul.f32 %v1211, %v2135
      %v2157 = vmul.f32 %v1214, %v2140
      %2158 = vset.pattern.permute.xlu0 1
      %2159 = vperm.xlu0 %2158, %v2046
      %v2160 = vpop.permute.xlu0 %2159
      %2162 = vset.pattern.permute.xlu0 1
      %2163 = vperm.xlu0 %2162, %v2047
      %v2164 = vpop.permute.xlu0 %2163
      %2166 = vset.pattern.permute.xlu0 1
      %2167 = vperm.xlu0 %2166, %v2048
      %v2168 = vpop.permute.xlu0 %2167
      %2170 = vset.pattern.permute.xlu0 1
      %2171 = vperm.xlu0 %2170, %v2049
      %v2172 = vpop.permute.xlu0 %2171
      %2174 = vset.pattern.permute.xlu0 1
      %2175 = vperm.xlu0 %2174, %v2050
      %v2176 = vpop.permute.xlu0 %2175
      %2178 = vset.pattern.permute.xlu0 1
      %2179 = vperm.xlu0 %2178, %v2051
      %v2180 = vpop.permute.xlu0 %2179
      %2182 = vset.pattern.permute.xlu0 1
      %2183 = vperm.xlu0 %2182, %v2052
      %v2184 = vpop.permute.xlu0 %2183
      %2186 = vset.pattern.permute.xlu0 1
      %2187 = vperm.xlu0 %2186, %v2053
      %v2188 = vpop.permute.xlu0 %2187
      %2190 = vset.pattern.permute.xlu0 1
      %2191 = vperm.xlu0 %2190, %v2054
      %v2192 = vpop.permute.xlu0 %2191
      %2194 = vset.pattern.permute.xlu0 1
      %2195 = vperm.xlu0 %2194, %v2055
      %v2196 = vpop.permute.xlu0 %2195
      %2198 = vset.pattern.permute.xlu0 1
      %2199 = vperm.xlu0 %2198, %v2056
      %v2200 = vpop.permute.xlu0 %2199
      %2202 = vset.pattern.permute.xlu0 1
      %2203 = vperm.xlu0 %2202, %v2057
      %v2204 = vpop.permute.xlu0 %2203
      %2206 = vset.pattern.permute.xlu0 1
      %2207 = vperm.xlu0 %2206, %v2058
      %v2208 = vpop.permute.xlu0 %2207
      %2210 = vset.pattern.permute.xlu0 1
      %2211 = vperm.xlu0 %2210, %v2059
      %v2212 = vpop.permute.xlu0 %2211
      %2214 = vset.pattern.permute.xlu0 1
      %2215 = vperm.xlu0 %2214, %v2060
      %v2216 = vpop.permute.xlu0 %2215
      %2218 = vset.pattern.permute.xlu0 1
      %2219 = vperm.xlu0 %2218, %v2061
      %v2220 = vpop.permute.xlu0 %2219
      %v2222 = vmul.f32 %v1299, %v2160
      %v2223 = vmul.f32 %v1302, %v2164
      %v2224 = vmul.f32 %v1305, %v2168
      %v2225 = vmul.f32 %v1308, %v2172
      %v2226 = vmul.f32 %v1311, %v2176
      %v2227 = vmul.f32 %v1314, %v2180
      %v2228 = vmul.f32 %v1317, %v2184
      %v2229 = vmul.f32 %v1320, %v2188
      %v2230 = vmul.f32 %v1323, %v2192
      %v2231 = vmul.f32 %v1326, %v2196
      %v2232 = vmul.f32 %v1329, %v2200
      %v2233 = vmul.f32 %v1332, %v2204
      %v2234 = vmul.f32 %v1335, %v2208
      %v2235 = vmul.f32 %v1338, %v2212
      %v2236 = vmul.f32 %v1341, %v2216
      %v2237 = vmul.f32 %v1344, %v2220
      %v2238 = vadd.f32 %v2142, %v2222
      %v2239 = vadd.f32 %v2143, %v2223
      %v2240 = vadd.f32 %v2144, %v2224
      %v2241 = vadd.f32 %v2145, %v2225
      %v2242 = vadd.f32 %v2146, %v2226
      %v2243 = vadd.f32 %v2147, %v2227
      %v2244 = vadd.f32 %v2148, %v2228
      %v2245 = vadd.f32 %v2149, %v2229
      %v2246 = vadd.f32 %v2150, %v2230
      %v2247 = vadd.f32 %v2151, %v2231
      %v2248 = vadd.f32 %v2152, %v2232
      %v2249 = vadd.f32 %v2153, %v2233
      %v2250 = vadd.f32 %v2154, %v2234
      %v2251 = vadd.f32 %v2155, %v2235
      %v2252 = vadd.f32 %v2156, %v2236
      %v2253 = vadd.f32 %v2157, %v2237
      %2254 = vset.pattern.permute.xlu0 2
      %2255 = vperm.xlu0 %2254, %v2046
      %v2256 = vpop.permute.xlu0 %2255
      %2258 = vset.pattern.permute.xlu0 2
      %2259 = vperm.xlu0 %2258, %v2047
      %v2260 = vpop.permute.xlu0 %2259
      %2262 = vset.pattern.permute.xlu0 2
      %2263 = vperm.xlu0 %2262, %v2048
      %v2264 = vpop.permute.xlu0 %2263
      %2266 = vset.pattern.permute.xlu0 2
      %2267 = vperm.xlu0 %2266, %v2049
      %v2268 = vpop.permute.xlu0 %2267
      %2270 = vset.pattern.permute.xlu0 2
      %2271 = vperm.xlu0 %2270, %v2050
      %v2272 = vpop.permute.xlu0 %2271
      %2274 = vset.pattern.permute.xlu0 2
      %2275 = vperm.xlu0 %2274, %v2051
      %v2276 = vpop.permute.xlu0 %2275
      %2278 = vset.pattern.permute.xlu0 2
      %2279 = vperm.xlu0 %2278, %v2052
      %v2280 = vpop.permute.xlu0 %2279
      %2282 = vset.pattern.permute.xlu0 2
      %2283 = vperm.xlu0 %2282, %v2053
      %v2284 = vpop.permute.xlu0 %2283
      %2286 = vset.pattern.permute.xlu0 2
      %2287 = vperm.xlu0 %2286, %v2054
      %v2288 = vpop.permute.xlu0 %2287
      %2290 = vset.pattern.permute.xlu0 2
      %2291 = vperm.xlu0 %2290, %v2055
      %v2292 = vpop.permute.xlu0 %2291
      %2294 = vset.pattern.permute.xlu0 2
      %2295 = vperm.xlu0 %2294, %v2056
      %v2296 = vpop.permute.xlu0 %2295
      %2298 = vset.pattern.permute.xlu0 2
      %2299 = vperm.xlu0 %2298, %v2057
      %v2300 = vpop.permute.xlu0 %2299
      %2302 = vset.pattern.permute.xlu0 2
      %2303 = vperm.xlu0 %2302, %v2058
      %v2304 = vpop.permute.xlu0 %2303
      %2306 = vset.pattern.permute.xlu0 2
      %2307 = vperm.xlu0 %2306, %v2059
      %v2308 = vpop.permute.xlu0 %2307
      %2310 = vset.pattern.permute.xlu0 2
      %2311 = vperm.xlu0 %2310, %v2060
      %v2312 = vpop.permute.xlu0 %2311
      %2314 = vset.pattern.permute.xlu0 2
      %2315 = vperm.xlu0 %2314, %v2061
      %v2316 = vpop.permute.xlu0 %2315
      %v2318 = vmul.f32 %v1070, %v2256
      %v2319 = vmul.f32 %v1071, %v2260
      %v2320 = vmul.f32 %v1072, %v2264
      %v2321 = vmul.f32 %v1073, %v2268
      %v2322 = vmul.f32 %v1074, %v2272
      %v2323 = vmul.f32 %v1075, %v2276
      %v2324 = vmul.f32 %v1076, %v2280
      %v2325 = vmul.f32 %v1077, %v2284
      %v2326 = vmul.f32 %v1078, %v2288
      %v2327 = vmul.f32 %v1079, %v2292
      %v2328 = vmul.f32 %v1080, %v2296
      %v2329 = vmul.f32 %v1081, %v2300
      %v2330 = vmul.f32 %v1082, %v2304
      %v2331 = vmul.f32 %v1083, %v2308
      %v2332 = vmul.f32 %v1084, %v2312
      %v2333 = vmul.f32 %v1085, %v2316
      %v2334 = vadd.f32 %v2238, %v2318
      %v2335 = vadd.f32 %v2239, %v2319
      %v2336 = vadd.f32 %v2240, %v2320
      %v2337 = vadd.f32 %v2241, %v2321
      %v2338 = vadd.f32 %v2242, %v2322
      %v2339 = vadd.f32 %v2243, %v2323
      %v2340 = vadd.f32 %v2244, %v2324
      %v2341 = vadd.f32 %v2245, %v2325
      %v2342 = vadd.f32 %v2246, %v2326
      %v2343 = vadd.f32 %v2247, %v2327
      %v2344 = vadd.f32 %v2248, %v2328
      %v2345 = vadd.f32 %v2249, %v2329
      %v2346 = vadd.f32 %v2250, %v2330
      %v2347 = vadd.f32 %v2251, %v2331
      %v2348 = vadd.f32 %v2252, %v2332
      %v2349 = vadd.f32 %v2253, %v2333
      %2350 = vst [vmem:[%s551] sm:$0xff] %v2334
      %2351 = vst [vmem:[%s551 + $0x8] sm:$0xff] %v2335
      %2352 = vst [vmem:[%s551 + $0x10] sm:$0xff] %v2336
      %2353 = vst [vmem:[%s551 + $0x18] sm:$0xff] %v2337
      %2354 = vst [vmem:[%s551 + $0x20] sm:$0xff] %v2338
      %2355 = vst [vmem:[%s551 + $0x28] sm:$0xff] %v2339
      %2356 = vst [vmem:[%s551 + $0x30] sm:$0xff] %v2340
      %2357 = vst [vmem:[%s551 + $0x38] sm:$0xff] %v2341
      %2358 = vst [vmem:[%s551 + $0x40] sm:$0xff] %v2342
      %2359 = vst [vmem:[%s551 + $0x48] sm:$0xff] %v2343
      %2360 = vst [vmem:[%s551 + $0x50] sm:$0xff] %v2344
      %2361 = vst [vmem:[%s551 + $0x58] sm:$0xff] %v2345
      %2362 = vst [vmem:[%s551 + $0x60] sm:$0xff] %v2346
      %2363 = vst [vmem:[%s551 + $0x68] sm:$0xff] %v2347
      %2364 = vst [vmem:[%s551 + $0x70] sm:$0xff] %v2348
      %2365 = vst [vmem:[%s551 + $0x78] sm:$0xff] %v2349
      %s2366 = smul.u32 16, %s29
      %p2367 = scmp.lt.s32.totalorder %s28, 1
      %s2368 = scalar_select %p2367, %s28, 1
      %p2369 = scmp.lt.s32.totalorder %s2366, 31
      %s2370 = scalar_select %p2369, %s2366, 31
      %s2371 = smul.addr %s2368, 32
      %s2372 = sadd.s32 %s2370, %s2371
      %s2373 = smul.addr %s2372, 8
      %s2374 = scalar_lea.vmem %s13, %s2373
      // Predicated region
      $region73: #{asff_level2_forward.2} parent=71 // pred_check
        %p2375 = pneg %p350
      $region74: #{asff_level2_forward.2} parent=71 // pred_check_branch
        %2377 = sbr.rel (%p2375) target = $region76
      $region75: #{asff_level2_forward.2} parent=71 // pred_region
        %s2378 = smul.u32 16, %s29
      $region76: #{asff_level2_forward.2} parent=71 // pred_fallthru
        _
    $region72: #{asff_level2_forward.2} parent=5 // pred_fallthru
      _
    %p2379 = scmp.le.s32.totalorder 2, %s19
    // Predicated region
    $region77: #{asff_level2_forward.2} parent=5 // pred_check
      %p2380 = pneg %p2379
    $region78: #{asff_level2_forward.2} parent=5 // pred_check_branch
      %2382 = sbr.rel (%p2380) target = $region80
    $region79: #{asff_level2_forward.2} parent=5 // pred_region
      %s2383 = ssub.s32 %s19, 2
      // Predicated region
      $region81: #{asff_level2_forward.2} parent=79 // pred_check
        %p2384 = pneg %p356
      $region82: #{asff_level2_forward.2} parent=79 // pred_check_branch
        %2386 = sbr.rel (%p2384) target = $region84
      $region83: #{asff_level2_forward.2} parent=79 // pred_region
        %s2387 = smul.u32 16, %s31
        %p2388 = scmp.lt.s32.totalorder %s30, 1
        %s2389 = scalar_select %p2388, %s30, 1
        %p2390 = scmp.lt.s32.totalorder %s2387, 31
        %s2391 = scalar_select %p2390, %s2387, 31
        %s2392 = smul.addr %s2389, 32
        %s2393 = sadd.s32 %s2391, %s2392
        %s2394 = smul.addr %s2393, 8
        %s2395 = scalar_lea.vmem %s13, %s2394
      $region84: #{asff_level2_forward.2} parent=79 // pred_fallthru
        _
    $region80: #{asff_level2_forward.2} parent=5 // pred_fallthru
      _
  $region6: #{asff_level2_forward.2} parent=0 // loop_footer
    %s23 = sadd.s32 1, %s19
  $region7: #{asff_level2_forward.2} parent=0 // loop_footer_branch
    %18 = sbr.rel target = $region3
  $region8: #{asff_level2_forward.2} parent=0 // loop_exit
    _

// kernel: asff_level2_forward.3
$region0: #{asff_level2_forward.3}
  #allocation0 [shape = 'u32[]', space=smem, size = 0x4, offset = 0x4, fixed_abs, tag = 'smem constant byte address 0x4 - core index']
  #allocation1 [shape = 'u32[72,128]{1,0:T(1,128)}', space=vmem, size = 0x9000, scoped, tag = 'internal scratch']
  #allocation2 [shape = 'f32[18,16,384]{2,1,0:T(8,128)}', space=vmem, size = 0x6c000, scoped, tag = 'scratch operand']
  %s0 = inlined_call_operand.vmem [shape: f32[2,16,16,128], index: 0, kind: input, shape index: {}]
  %s1 = inlined_call_operand.vmem [shape: bf16[3,384,128], index: 1, kind: input, shape index: {}]
  %s2 = inlined_call_operand.vmem [shape: f32[1,128], index: 2, kind: input, shape index: {}]
  %s3 = inlined_call_operand.hbm [shape: f32[2,16,16,128], index: 3, kind: output, shape index: {}]
  %s4 = sld [smem:[#allocation0]]
  $region49: #{asff_level2_forward.3} parent=0
    _
  %s6 = ssub.s32 1, %s4
  %s7 = scalar_select 0, %s6, %s4
  $region1: #{asff_level2_forward.3} parent=0
    #allocation3 [shape = 'u8[131072]{0}', space=vmem, size = 0x20000, scoped, tag = 'output window, operand 0']
    #allocation4 [shape = 's32[2]{0}', space=sflag, size = 0x8, scoped, tag = 'scoped memory for asff_level2_forward.3']
    %8 = vsyncpa [#allocation4], 0
    %s9 = scalar_lea.sflag [#allocation4], 1
    %10 = vsyncpa %s9, 0
    loop: start=0, step=1, limit=6
    $region2: #{asff_level2_forward.3} parent=1 // loop_pre_header
      _
    $region3: #{asff_level2_forward.3} parent=1 // loop_header
      %s12 = sphi 0, %s16
      %p13 = scmp.ge.s32.totalorder %s12, 6
      %s19 = sphi 0, %s31
      %s20 = sphi 0, %s27
      %s21 = sphi 0, %s19
      %s22 = sphi 0, %s20
      %s23 = sphi 0, %s21
      %s24 = sphi 0, %s22
      %s34 = sphi 0, %s36
      %s37 = sphi 0, %s34
      %s38 = sphi 0, %s37
      %s54 = sphi 0, %s38
      %s58 = sphi 0, %s58
      %s60 = sphi 0, %s58
      %s61 = sphi 0, %s60
      %s75 = sphi 0, %s61
      %s79 = sphi 0, %s79
      %s81 = sphi 0, %s79
      %s82 = sphi 0, %s81
      %s96 = sphi 0, %s82
      %s104 = sphi 0, %s106
      %s107 = sphi 0, %s104
      %s108 = sphi 0, %s107
      %s124 = sphi 0, %s108
    $region4: #{asff_level2_forward.3} parent=1 // loop_header_branch
      %15 = sbr.rel (%p13) target = $region8
    $region5: #{asff_level2_forward.3} parent=1 // loop_body
      %s17 = ssub.s32 %s12, 1
      %s18 = ssub.s32 %s12, 2
      %s25 = sadd.s32 1, %s20
      %p26 = scmp.ge.s32.totalorder %s25, 2
      %s27 = scalar_select %p26, 0, %s25
      %s28 = sadd.s32 1, %s19
      %s29 = scalar_select %p26, %s28, %s19
      %p30 = scmp.ge.s32.totalorder %s29, 2
      %s31 = scalar_select %p30, 0, %s29
      %s32 = ssub.s32 %s19, %s31
      %p33 = scmp.eq.s32.totalorder %s32, 0
      %s35 = sadd.s32 %s34, 1
      %s36 = scalar_select %p33, %s34, %s35
      %p39 = pneg %p33
      %p40 = scmp.eq.s32.totalorder %s12, 3
      %p41 = por %p39, %p40
      %p42 = scmp.ne.s32.totalorder %s34, %s37
      %p43 = scmp.eq.s32.totalorder %s12, 0
      %p44 = por %p42, %p43
      %p45 = scmp.ne.s32.totalorder %s34, %s37
      %p46 = scmp.eq.s32.totalorder %s17, 3
      %p47 = por %p45, %p46
      %p48 = scmp.ne.s32.totalorder %s37, %s38
      %p49 = scmp.eq.s32.totalorder %s17, 0
      %p50 = por %p48, %p49
      %p51 = scmp.ne.s32.totalorder %s37, %s38
      %p52 = scmp.eq.s32.totalorder %s18, 3
      %p53 = por %p51, %p52
      %p55 = scmp.ne.s32.totalorder %s38, %s54
      %p56 = scmp.eq.s32.totalorder %s18, 0
      %p57 = por %p55, %p56
      %s59 = sadd.s32 %s58, 1
      %p62 = scmp.eq.s32.totalorder %s12, 3
      %p63 = scmp.ne.s32.totalorder %s58, %s60
      %p64 = scmp.eq.s32.totalorder %s12, 0
      %p65 = por %p63, %p64
      %p66 = scmp.ne.s32.totalorder %s58, %s60
      %p67 = scmp.eq.s32.totalorder %s17, 3
      %p68 = por %p66, %p67
      %p69 = scmp.ne.s32.totalorder %s60, %s61
      %p70 = scmp.eq.s32.totalorder %s17, 0
      %p71 = por %p69, %p70
      %p72 = scmp.ne.s32.totalorder %s60, %s61
      %p73 = scmp.eq.s32.totalorder %s18, 3
      %p74 = por %p72, %p73
      %p76 = scmp.ne.s32.totalorder %s61, %s75
      %p77 = scmp.eq.s32.totalorder %s18, 0
      %p78 = por %p76, %p77
      %s80 = sadd.s32 %s79, 1
      %p83 = scmp.eq.s32.totalorder %s12, 3
      %p84 = scmp.ne.s32.totalorder %s79, %s81
      %p85 = scmp.eq.s32.totalorder %s12, 0
      %p86 = por %p84, %p85
      %p87 = scmp.ne.s32.totalorder %s79, %s81
      %p88 = scmp.eq.s32.totalorder %s17, 3
      %p89 = por %p87, %p88
      %p90 = scmp.ne.s32.totalorder %s81, %s82
      %p91 = scmp.eq.s32.totalorder %s17, 0
      %p92 = por %p90, %p91
      %p93 = scmp.ne.s32.totalorder %s81, %s82
      %p94 = scmp.eq.s32.totalorder %s18, 3
      %p95 = por %p93, %p94
      %p97 = scmp.ne.s32.totalorder %s82, %s96
      %p98 = scmp.eq.s32.totalorder %s18, 0
      %p99 = por %p97, %p98
      %s100 = ssub.s32 %s19, %s31
      %s101 = ssub.s32 %s20, %s27
      %s102 = sor.u32 %s100, %s101
      %p103 = scmp.eq.s32.totalorder %s102, 0
      %s105 = sadd.s32 %s104, 1
      %s106 = scalar_select %p103, %s104, %s105
      %p109 = pneg %p103
      %p110 = scmp.eq.s32.totalorder %s12, 3
      %p111 = por %p109, %p110
      %p112 = scmp.ne.s32.totalorder %s104, %s107
      %p113 = scmp.eq.s32.totalorder %s12, 0
      %p114 = por %p112, %p113
      %p115 = scmp.ne.s32.totalorder %s104, %s107
      %p116 = scmp.eq.s32.totalorder %s17, 3
      %p117 = por %p115, %p116
      %p118 = scmp.ne.s32.totalorder %s107, %s108
      %p119 = scmp.eq.s32.totalorder %s17, 0
      %p120 = por %p118, %p119
      %p121 = scmp.ne.s32.totalorder %s107, %s108
      %p122 = scmp.eq.s32.totalorder %s18, 3
      %p123 = por %p121, %p122
      %p125 = scmp.ne.s32.totalorder %s108, %s124
      %p126 = scmp.eq.s32.totalorder %s18, 0
      %p127 = por %p125, %p126
      %p128 = scmp.le.s32.totalorder 1, %s12
      %p129 = scmp.lt.s32.totalorder %s12, 5
      %p130 = pnand %p128, %p129
      %p131 = pneg %p130
      // Predicated region
      $region9: #{asff_level2_forward.3} parent=5 // pred_check
        _
      $region10: #{asff_level2_forward.3} parent=5 // pred_check_branch
        %133 = sbr.rel (%p130) target = $region12
      $region11: #{asff_level2_forward.3} parent=5 // pred_region
        %s134 = ssub.s32 %s12, 1
        // Predicated region
        $region13: #{asff_level2_forward.3} parent=11 // pred_check
          %p135 = pneg %p71
        $region14: #{asff_level2_forward.3} parent=11 // pred_check_branch
          %137 = sbr.rel (%p135) target = $region16
        $region15: #{asff_level2_forward.3} parent=11 // pred_region
          _
        $region16: #{asff_level2_forward.3} parent=11 // pred_fallthru
          _
        // Predicated region
        $region17: #{asff_level2_forward.3} parent=11 // pred_check
          %p138 = pneg %p92
        $region18: #{asff_level2_forward.3} parent=11 // pred_check_branch
          %140 = sbr.rel (%p138) target = $region20
        $region19: #{asff_level2_forward.3} parent=11 // pred_region
          _
        $region20: #{asff_level2_forward.3} parent=11 // pred_fallthru
          _
      $region12: #{asff_level2_forward.3} parent=5 // pred_fallthru
        _
      %p141 = scmp.lt.s32.totalorder %s12, 4
      // Predicated region
      $region21: #{asff_level2_forward.3} parent=5 // pred_check
        %p142 = pneg %p141
      $region22: #{asff_level2_forward.3} parent=5 // pred_check_branch
        %144 = sbr.rel (%p142) target = $region24
      $region23: #{asff_level2_forward.3} parent=5 // pred_region
        // Predicated region
        $region25: #{asff_level2_forward.3} parent=23 // pred_check
          %p145 = pneg %p44
        $region26: #{asff_level2_forward.3} parent=23 // pred_check_branch
          %147 = sbr.rel (%p145) target = $region28
        $region27: #{asff_level2_forward.3} parent=23 // pred_region
          %p148 = scmp.lt.s32.totalorder %s19, 1
          %s149 = scalar_select %p148, %s19, 1
          %s150 = smul.addr %s149, 32
          %s151 = smul.addr %s150, 8
          %s152 = scalar_lea.vmem %s0, %s151
        $region28: #{asff_level2_forward.3} parent=23 // pred_fallthru
          _
      $region24: #{asff_level2_forward.3} parent=5 // pred_fallthru
        _
      %p153 = scmp.le.s32.totalorder 1, %s12
      %p154 = scmp.lt.s32.totalorder %s12, 5
      %p155 = pnand %p153, %p154
      %p156 = pneg %p155
      // Predicated region
      $region29: #{asff_level2_forward.3} parent=5 // pred_check
        _
      $region30: #{asff_level2_forward.3} parent=5 // pred_check_branch
        %158 = sbr.rel (%p155) target = $region32
      $region31: #{asff_level2_forward.3} parent=5 // pred_region
        %s159 = ssub.s32 %s12, 1
        %p160 = scmp.lt.s32.totalorder %s21, 1
        %s161 = scalar_select %p160, %s21, 1
        %s162 = smul.addr %s161, 32
        %s163 = smul.addr %s162, 8
        %s164 = scalar_lea.vmem %s0, %s163
        %p165 = pneg %p50
        %p166 = pneg %p47
        %p167 = pneg %p71
        %p168 = pneg %p68
        %p169 = pneg %p92
        %p170 = pneg %p89
        %p171 = pneg %p120
        %p172 = pneg %p117
        %s173 = sand.u32 %s107, 1
        %s174 = scalar_lea.sflag [#allocation4], %s173
        %s175 = sand.u32 %s107, 1
        %s176 = smul.addr %s175, 128
        %s177 = scalar_lea.vmem [#allocation3], %s176
        %p178 = scmp.lt.s32.totalorder %s21, 1
        %s179 = scalar_select %p178, %s21, 1
        %s180 = smul.addr %s179, 32
        %s181 = smul.addr %s180, 8
        %s182 = scalar_lea.vmem %s0, %s181
        %s183 = smul.u32 8, %s22
        %p184 = scmp.eq.s32.totalorder %s22, 0
        // Predicated region
        $region33: #{asff_level2_forward.3} parent=31 // pred_check
          %p185 = pneg %p184
        $region34: #{asff_level2_forward.3} parent=31 // pred_check_branch
          %187 = sbr.rel (%p185) target = $region36
        $region35: #{asff_level2_forward.3} parent=31 // pred_region
          %v188 = vld [vmem:[%s182] sm:$0xff]
          %v189 = vld [vmem:[%s182 + $0x8] sm:$0xff]
          %v190 = vld [vmem:[%s182 + $0x10] sm:$0xff]
          %v191 = vld [vmem:[%s182 + $0x18] sm:$0xff]
          %v192 = vld [vmem:[%s182 + $0x20] sm:$0xff]
          %v193 = vld [vmem:[%s182 + $0x28] sm:$0xff]
          %v194 = vld [vmem:[%s182 + $0x30] sm:$0xff]
          %v195 = vld [vmem:[%s182 + $0x38] sm:$0xff]
          %v196 = vld [vmem:[%s182 + $0x40] sm:$0xff]
          %v197 = vld [vmem:[%s182 + $0x48] sm:$0xff]
          %v198 = vld [vmem:[%s182 + $0x50] sm:$0xff]
          %v199 = vld [vmem:[%s182 + $0x58] sm:$0xff]
          %v200 = vld [vmem:[%s182 + $0x60] sm:$0xff]
          %v201 = vld [vmem:[%s182 + $0x68] sm:$0xff]
          %v202 = vld [vmem:[%s182 + $0x70] sm:$0xff]
          %v203 = vld [vmem:[%s182 + $0x78] sm:$0xff]
          %v204 = vld [vmem:[%s182 + $0x80] sm:$0xff]
          %v205 = vld [vmem:[%s182 + $0x88] sm:$0xff]
          %v206 = vld [vmem:[%s182 + $0x90] sm:$0xff]
          %v207 = vld [vmem:[%s182 + $0x98] sm:$0xff]
          %v208 = vld [vmem:[%s182 + $0xa0] sm:$0xff]
          %v209 = vld [vmem:[%s182 + $0xa8] sm:$0xff]
          %v210 = vld [vmem:[%s182 + $0xb0] sm:$0xff]
          %v211 = vld [vmem:[%s182 + $0xb8] sm:$0xff]
          %v212 = vld [vmem:[%s182 + $0xc0] sm:$0xff]
          %v213 = vld [vmem:[%s182 + $0xc8] sm:$0xff]
          %v214 = vld [vmem:[%s182 + $0xd0] sm:$0xff]
          %v215 = vld [vmem:[%s182 + $0xd8] sm:$0xff]
          %v216 = vld [vmem:[%s182 + $0xe0] sm:$0xff]
          %v217 = vld [vmem:[%s182 + $0xe8] sm:$0xff]
          %v218 = vld [vmem:[%s182 + $0xf0] sm:$0xff]
          %v219 = vld [vmem:[%s182 + $0xf8] sm:$0xff]
          %220 = vst [vmem:[#allocation2] sm:$0xff] 0.0
          %221 = vst [vmem:[#allocation2 + $0x8] sm:$0xff] 0.0
          %222 = vst [vmem:[#allocation2 + $0x10] sm:$0xff] 0.0
          %223 = vst [vmem:[#allocation2 + $0x18] sm:$0xff] 0.0
          %224 = vst [vmem:[#allocation2 + $0x20] sm:$0xff] 0.0
          %225 = vst [vmem:[#allocation2 + $0x28] sm:$0xff] 0.0
          %s226 = scalar_lea.vmem [#allocation2], 816
          %227 = vst [vmem:[%s226] sm:$0xff] 0.0
          %228 = vst [vmem:[%s226 + $0x8] sm:$0xff] 0.0
          %229 = vst [vmem:[%s226 + $0x10] sm:$0xff] 0.0
          %230 = vst [vmem:[%s226 + $0x18] sm:$0xff] 0.0
          %231 = vst [vmem:[%s226 + $0x20] sm:$0xff] 0.0
          %232 = vst [vmem:[%s226 + $0x28] sm:$0xff] 0.0
          %v233 = vlaneseq
          %v234 = vshrl.u32 %v233, 7
          %v235 = vadd.s32 %v234, 8
          %vm236 = vcmp.ge.s32.totalorder %v234, 1
          %vm237 = vcmp.ge.s32.totalorder %v235, 1
          %v238 = vrot.slane %v188, 7
          %v239 = vrot.slane %v190, 7
          %v240 = vrot.slane %v192, 7
          %v241 = vrot.slane %v194, 7
          %v242 = vrot.slane %v196, 7
          %v243 = vrot.slane %v198, 7
          %v244 = vrot.slane %v200, 7
          %v245 = vrot.slane %v202, 7
          %v246 = vrot.slane %v204, 7
          %v247 = vrot.slane %v206, 7
          %v248 = vrot.slane %v208, 7
          %v249 = vrot.slane %v210, 7
          %v250 = vrot.slane %v212, 7
          %v251 = vrot.slane %v214, 7
          %v252 = vrot.slane %v216, 7
          %v253 = vrot.slane %v218, 7
          %v254 = vrot.slane %v189, 7
          %v255 = vrot.slane %v191, 7
          %v256 = vrot.slane %v193, 7
          %v257 = vrot.slane %v195, 7
          %v258 = vrot.slane %v197, 7
          %v259 = vrot.slane %v199, 7
          %v260 = vrot.slane %v201, 7
          %v261 = vrot.slane %v203, 7
          %v262 = vrot.slane %v205, 7
          %v263 = vrot.slane %v207, 7
          %v264 = vrot.slane %v209, 7
          %v265 = vrot.slane %v211, 7
          %v266 = vrot.slane %v213, 7
          %v267 = vrot.slane %v215, 7
          %v268 = vrot.slane %v217, 7
          %v269 = vrot.slane %v219, 7
          %vm270 = vcmp.lt.s32.totalorder %v234, 1
          %v271 = vsel %vm270, %v238, %v254
          %v272 = vsel %vm270, %v239, %v255
          %v273 = vsel %vm270, %v240, %v256
          %v274 = vsel %vm270, %v241, %v257
          %v275 = vsel %vm270, %v242, %v258
          %v276 = vsel %vm270, %v243, %v259
          %v277 = vsel %vm270, %v244, %v260
          %v278 = vsel %vm270, %v245, %v261
          %v279 = vsel %vm270, %v246, %v262
          %v280 = vsel %vm270, %v247, %v263
          %v281 = vsel %vm270, %v248, %v264
          %v282 = vsel %vm270, %v249, %v265
          %v283 = vsel %vm270, %v250, %v266
          %v284 = vsel %vm270, %v251, %v267
          %v285 = vsel %vm270, %v252, %v268
          %v286 = vsel %vm270, %v253, %v269
          %v287 = vsel %vm270, %v254, %v238
          %v288 = vsel %vm270, %v255, %v239
          %v289 = vsel %vm270, %v256, %v240
          %v290 = vsel %vm270, %v257, %v241
          %v291 = vsel %vm270, %v258, %v242
          %v292 = vsel %vm270, %v259, %v243
          %v293 = vsel %vm270, %v260, %v244
          %v294 = vsel %vm270, %v261, %v245
          %v295 = vsel %vm270, %v262, %v246
          %v296 = vsel %vm270, %v263, %v247
          %v297 = vsel %vm270, %v264, %v248
          %v298 = vsel %vm270, %v265, %v249
          %v299 = vsel %vm270, %v266, %v250
          %v300 = vsel %vm270, %v267, %v251
          %v301 = vsel %vm270, %v268, %v252
          %v302 = vsel %vm270, %v269, %v253
          %v303 = vsel %vm236, %v287, 0.0
          %v304 = vsel %vm237, %v271, 0.0
          %v305 = vsel %vm236, %v288, 0.0
          %v306 = vsel %vm237, %v272, 0.0
          %v307 = vsel %vm236, %v289, 0.0
          %v308 = vsel %vm237, %v273, 0.0
          %v309 = vsel %vm236, %v290, 0.0
          %v310 = vsel %vm237, %v274, 0.0
          %v311 = vsel %vm236, %v291, 0.0
          %v312 = vsel %vm237, %v275, 0.0
          %v313 = vsel %vm236, %v292, 0.0
          %v314 = vsel %vm237, %v276, 0.0
          %v315 = vsel %vm236, %v293, 0.0
          %v316 = vsel %vm237, %v277, 0.0
          %v317 = vsel %vm236, %v294, 0.0
          %v318 = vsel %vm237, %v278, 0.0
          %v319 = vsel %vm236, %v295, 0.0
          %v320 = vsel %vm237, %v279, 0.0
          %v321 = vsel %vm236, %v296, 0.0
          %v322 = vsel %vm237, %v280, 0.0
          %v323 = vsel %vm236, %v297, 0.0
          %v324 = vsel %vm237, %v281, 0.0
          %v325 = vsel %vm236, %v298, 0.0
          %v326 = vsel %vm237, %v282, 0.0
          %v327 = vsel %vm236, %v299, 0.0
          %v328 = vsel %vm237, %v283, 0.0
          %v329 = vsel %vm236, %v300, 0.0
          %v330 = vsel %vm237, %v284, 0.0
          %v331 = vsel %vm236, %v301, 0.0
          %v332 = vsel %vm237, %v285, 0.0
          %v333 = vsel %vm236, %v302, 0.0
          %v334 = vsel %vm237, %v286, 0.0
          %vm335 = vcmp.le.s32.totalorder %v234, 14
          %vm336 = vcmp.le.s32.totalorder %v235, 14
          %v337 = vrot.slane %v188, 1
          %v338 = vrot.slane %v190, 1
          %v339 = vrot.slane %v192, 1
          %v340 = vrot.slane %v194, 1
          %v341 = vrot.slane %v196, 1
          %v342 = vrot.slane %v198, 1
          %v343 = vrot.slane %v200, 1
          %v344 = vrot.slane %v202, 1
          %v345 = vrot.slane %v204, 1
          %v346 = vrot.slane %v206, 1
          %v347 = vrot.slane %v208, 1
          %v348 = vrot.slane %v210, 1
          %v349 = vrot.slane %v212, 1
          %v350 = vrot.slane %v214, 1
          %v351 = vrot.slane %v216, 1
          %v352 = vrot.slane %v218, 1
          %v353 = vrot.slane %v189, 1
          %v354 = vrot.slane %v191, 1
          %v355 = vrot.slane %v193, 1
          %v356 = vrot.slane %v195, 1
          %v357 = vrot.slane %v197, 1
          %v358 = vrot.slane %v199, 1
          %v359 = vrot.slane %v201, 1
          %v360 = vrot.slane %v203, 1
          %v361 = vrot.slane %v205, 1
          %v362 = vrot.slane %v207, 1
          %v363 = vrot.slane %v209, 1
          %v364 = vrot.slane %v211, 1
          %v365 = vrot.slane %v213, 1
          %v366 = vrot.slane %v215, 1
          %v367 = vrot.slane %v217, 1
          %v368 = vrot.slane %v219, 1
          %vm369 = vcmp.lt.s32.totalorder %v234, 7
          %v370 = vsel %vm369, %v337, %v353
          %v371 = vsel %vm369, %v338, %v354
          %v372 = vsel %vm369, %v339, %v355
          %v373 = vsel %vm369, %v340, %v356
          %v374 = vsel %vm369, %v341, %v357
          %v375 = vsel %vm369, %v342, %v358
          %v376 = vsel %vm369, %v343, %v359
          %v377 = vsel %vm369, %v344, %v360
          %v378 = vsel %vm369, %v345, %v361
          %v379 = vsel %vm369, %v346, %v362
          %v380 = vsel %vm369, %v347, %v363
          %v381 = vsel %vm369, %v348, %v364
          %v382 = vsel %vm369, %v349, %v365
          %v383 = vsel %vm369, %v350, %v366
          %v384 = vsel %vm369, %v351, %v367
          %v385 = vsel %vm369, %v352, %v368
          %v386 = vsel %vm369, %v353, %v337
          %v387 = vsel %vm369, %v354, %v338
          %v388 = vsel %vm369, %v355, %v339
          %v389 = vsel %vm369, %v356, %v340
          %v390 = vsel %vm369, %v357, %v341
          %v391 = vsel %vm369, %v358, %v342
          %v392 = vsel %vm369, %v359, %v343
          %v393 = vsel %vm369, %v360, %v344
          %v394 = vsel %vm369, %v361, %v345
          %v395 = vsel %vm369, %v362, %v346
          %v396 = vsel %vm369, %v363, %v347
          %v397 = vsel %vm369, %v364, %v348
          %v398 = vsel %vm369, %v365, %v349
          %v399 = vsel %vm369, %v366, %v350
          %v400 = vsel %vm369, %v367, %v351
          %v401 = vsel %vm369, %v368, %v352
          %v402 = vsel %vm335, %v370, 0.0
          %v403 = vsel %vm336, %v386, 0.0
          %v404 = vsel %vm335, %v371, 0.0
          %v405 = vsel %vm336, %v387, 0.0
          %v406 = vsel %vm335, %v372, 0.0
          %v407 = vsel %vm336, %v388, 0.0
          %v408 = vsel %vm335, %v373, 0.0
          %v409 = vsel %vm336, %v389, 0.0
          %v410 = vsel %vm335, %v374, 0.0
          %v411 = vsel %vm336, %v390, 0.0
          %v412 = vsel %vm335, %v375, 0.0
          %v413 = vsel %vm336, %v391, 0.0
          %v414 = vsel %vm335, %v376, 0.0
          %v415 = vsel %vm336, %v392, 0.0
          %v416 = vsel %vm335, %v377, 0.0
          %v417 = vsel %vm336, %v393, 0.0
          %v418 = vsel %vm335, %v378, 0.0
          %v419 = vsel %vm336, %v394, 0.0
          %v420 = vsel %vm335, %v379, 0.0
          %v421 = vsel %vm336, %v395, 0.0
          %v422 = vsel %vm335, %v380, 0.0
          %v423 = vsel %vm336, %v396, 0.0
          %v424 = vsel %vm335, %v381, 0.0
          %v425 = vsel %vm336, %v397, 0.0
          %v426 = vsel %vm335, %v382, 0.0
          %v427 = vsel %vm336, %v398, 0.0
          %v428 = vsel %vm335, %v383, 0.0
          %v429 = vsel %vm336, %v399, 0.0
          %v430 = vsel %vm335, %v384, 0.0
          %v431 = vsel %vm336, %v400, 0.0
          %v432 = vsel %vm335, %v385, 0.0
          %v433 = vsel %vm336, %v401, 0.0
          %s434 = scalar_lea.vmem [#allocation2], 48
          %435 = vst [vmem:[%s434] sm:$0xff] %v303
          %436 = vst [vmem:[%s434 + $0x18] sm:$0xff] %v304
          %437 = vst [vmem:[%s434 + $0x30] sm:$0xff] %v305
          %438 = vst [vmem:[%s434 + $0x48] sm:$0xff] %v306
          %439 = vst [vmem:[%s434 + $0x60] sm:$0xff] %v307
          %440 = vst [vmem:[%s434 + $0x78] sm:$0xff] %v308
          %441 = vst [vmem:[%s434 + $0x90] sm:$0xff] %v309
          %442 = vst [vmem:[%s434 + $0xa8] sm:$0xff] %v310
          %443 = vst [vmem:[%s434 + $0xc0] sm:$0xff] %v311
          %444 = vst [vmem:[%s434 + $0xd8] sm:$0xff] %v312
          %445 = vst [vmem:[%s434 + $0xf0] sm:$0xff] %v313
          %446 = vst [vmem:[%s434 + $0x108] sm:$0xff] %v314
          %447 = vst [vmem:[%s434 + $0x120] sm:$0xff] %v315
          %448 = vst [vmem:[%s434 + $0x138] sm:$0xff] %v316
          %449 = vst [vmem:[%s434 + $0x150] sm:$0xff] %v317
          %450 = vst [vmem:[%s434 + $0x168] sm:$0xff] %v318
          %451 = vst [vmem:[%s434 + $0x180] sm:$0xff] %v319
          %452 = vst [vmem:[%s434 + $0x198] sm:$0xff] %v320
          %453 = vst [vmem:[%s434 + $0x1b0] sm:$0xff] %v321
          %454 = vst [vmem:[%s434 + $0x1c8] sm:$0xff] %v322
          %455 = vst [vmem:[%s434 + $0x1e0] sm:$0xff] %v323
          %456 = vst [vmem:[%s434 + $0x1f8] sm:$0xff] %v324
          %457 = vst [vmem:[%s434 + $0x210] sm:$0xff] %v325
          %458 = vst [vmem:[%s434 + $0x228] sm:$0xff] %v326
          %459 = vst [vmem:[%s434 + $0x240] sm:$0xff] %v327
          %460 = vst [vmem:[%s434 + $0x258] sm:$0xff] %v328
          %461 = vst [vmem:[%s434 + $0x270] sm:$0xff] %v329
          %462 = vst [vmem:[%s434 + $0x288] sm:$0xff] %v330
          %463 = vst [vmem:[%s434 + $0x2a0] sm:$0xff] %v331
          %464 = vst [vmem:[%s434 + $0x2b8] sm:$0xff] %v332
          %465 = vst [vmem:[%s434 + $0x2d0] sm:$0xff] %v333
          %466 = vst [vmem:[%s434 + $0x2e8] sm:$0xff] %v334
          %467 = vst [vmem:[%s434 + $0x8] sm:$0xff] %v188
          %468 = vst [vmem:[%s434 + $0x20] sm:$0xff] %v189
          %469 = vst [vmem:[%s434 + $0x38] sm:$0xff] %v190
          %470 = vst [vmem:[%s434 + $0x50] sm:$0xff] %v191
          %471 = vst [vmem:[%s434 + $0x68] sm:$0xff] %v192
          %472 = vst [vmem:[%s434 + $0x80] sm:$0xff] %v193
          %473 = vst [vmem:[%s434 + $0x98] sm:$0xff] %v194
          %474 = vst [vmem:[%s434 + $0xb0] sm:$0xff] %v195
          %475 = vst [vmem:[%s434 + $0xc8] sm:$0xff] %v196
          %476 = vst [vmem:[%s434 + $0xe0] sm:$0xff] %v197
          %477 = vst [vmem:[%s434 + $0xf8] sm:$0xff] %v198
          %478 = vst [vmem:[%s434 + $0x110] sm:$0xff] %v199
          %479 = vst [vmem:[%s434 + $0x128] sm:$0xff] %v200
          %480 = vst [vmem:[%s434 + $0x140] sm:$0xff] %v201
          %481 = vst [vmem:[%s434 + $0x158] sm:$0xff] %v202
          %482 = vst [vmem:[%s434 + $0x170] sm:$0xff] %v203
          %483 = vst [vmem:[%s434 + $0x188] sm:$0xff] %v204
          %484 = vst [vmem:[%s434 + $0x1a0] sm:$0xff] %v205
          %485 = vst [vmem:[%s434 + $0x1b8] sm:$0xff] %v206
          %486 = vst [vmem:[%s434 + $0x1d0] sm:$0xff] %v207
          %487 = vst [vmem:[%s434 + $0x1e8] sm:$0xff] %v208
          %488 = vst [vmem:[%s434 + $0x200] sm:$0xff] %v209
          %489 = vst [vmem:[%s434 + $0x218] sm:$0xff] %v210
          %490 = vst [vmem:[%s434 + $0x230] sm:$0xff] %v211
          %491 = vst [vmem:[%s434 + $0x248] sm:$0xff] %v212
          %492 = vst [vmem:[%s434 + $0x260] sm:$0xff] %v213
          %493 = vst [vmem:[%s434 + $0x278] sm:$0xff] %v214
          %494 = vst [vmem:[%s434 + $0x290] sm:$0xff] %v215
          %495 = vst [vmem:[%s434 + $0x2a8] sm:$0xff] %v216
          %496 = vst [vmem:[%s434 + $0x2c0] sm:$0xff] %v217
          %497 = vst [vmem:[%s434 + $0x2d8] sm:$0xff] %v218
          %498 = vst [vmem:[%s434 + $0x2f0] sm:$0xff] %v219
          %499 = vst [vmem:[%s434 + $0x10] sm:$0xff] %v402
          %500 = vst [vmem:[%s434 + $0x28] sm:$0xff] %v403
          %501 = vst [vmem:[%s434 + $0x40] sm:$0xff] %v404
          %502 = vst [vmem:[%s434 + $0x58] sm:$0xff] %v405
          %503 = vst [vmem:[%s434 + $0x70] sm:$0xff] %v406
          %504 = vst [vmem:[%s434 + $0x88] sm:$0xff] %v407
          %505 = vst [vmem:[%s434 + $0xa0] sm:$0xff] %v408
          %506 = vst [vmem:[%s434 + $0xb8] sm:$0xff] %v409
          %507 = vst [vmem:[%s434 + $0xd0] sm:$0xff] %v410
          %508 = vst [vmem:[%s434 + $0xe8] sm:$0xff] %v411
          %509 = vst [vmem:[%s434 + $0x100] sm:$0xff] %v412
          %510 = vst [vmem:[%s434 + $0x118] sm:$0xff] %v413
          %511 = vst [vmem:[%s434 + $0x130] sm:$0xff] %v414
          %512 = vst [vmem:[%s434 + $0x148] sm:$0xff] %v415
          %513 = vst [vmem:[%s434 + $0x160] sm:$0xff] %v416
          %514 = vst [vmem:[%s434 + $0x178] sm:$0xff] %v417
          %515 = vst [vmem:[%s434 + $0x190] sm:$0xff] %v418
          %516 = vst [vmem:[%s434 + $0x1a8] sm:$0xff] %v419
          %517 = vst [vmem:[%s434 + $0x1c0] sm:$0xff] %v420
          %518 = vst [vmem:[%s434 + $0x1d8] sm:$0xff] %v421
          %519 = vst [vmem:[%s434 + $0x1f0] sm:$0xff] %v422
          %520 = vst [vmem:[%s434 + $0x208] sm:$0xff] %v423
          %521 = vst [vmem:[%s434 + $0x220] sm:$0xff] %v424
          %522 = vst [vmem:[%s434 + $0x238] sm:$0xff] %v425
          %523 = vst [vmem:[%s434 + $0x250] sm:$0xff] %v426
          %524 = vst [vmem:[%s434 + $0x268] sm:$0xff] %v427
          %525 = vst [vmem:[%s434 + $0x280] sm:$0xff] %v428
          %526 = vst [vmem:[%s434 + $0x298] sm:$0xff] %v429
          %527 = vst [vmem:[%s434 + $0x2b0] sm:$0xff] %v430
          %528 = vst [vmem:[%s434 + $0x2c8] sm:$0xff] %v431
          %529 = vst [vmem:[%s434 + $0x2e0] sm:$0xff] %v432
          %530 = vst [vmem:[%s434 + $0x2f8] sm:$0xff] %v433
        $region36: #{asff_level2_forward.3} parent=31 // pred_fallthru
          _
        %s531 = smul.u32 %s22, 8
        %s532 = smul.u32 %s531, 6
        %s533 = smul.addr %s532, 8
        %s534 = scalar_lea.vmem [#allocation2], %s533
        %v535 = vld [vmem:[%s534] sm:$0xff]
        %v536 = vld [vmem:[%s534 + $0x8] sm:$0xff]
        %v537 = vld [vmem:[%s534 + $0x10] sm:$0xff]
        %v538 = vld [vmem:[%s534 + $0x18] sm:$0xff]
        %v539 = vld [vmem:[%s534 + $0x20] sm:$0xff]
        %v540 = vld [vmem:[%s534 + $0x28] sm:$0xff]
        %v541 = vld [vmem:[%s534 + $0x30] sm:$0xff]
        %v542 = vld [vmem:[%s534 + $0x38] sm:$0xff]
        %v543 = vld [vmem:[%s534 + $0x40] sm:$0xff]
        %v544 = vld [vmem:[%s534 + $0x48] sm:$0xff]
        %v545 = vld [vmem:[%s534 + $0x50] sm:$0xff]
        %v546 = vld [vmem:[%s534 + $0x58] sm:$0xff]
        %v547 = vld [vmem:[%s534 + $0x60] sm:$0xff]
        %v548 = vld [vmem:[%s534 + $0x68] sm:$0xff]
        %v549 = vld [vmem:[%s534 + $0x70] sm:$0xff]
        %v550 = vld [vmem:[%s534 + $0x78] sm:$0xff]
        %v551 = vld [vmem:[%s534 + $0x80] sm:$0xff]
        %v552 = vld [vmem:[%s534 + $0x88] sm:$0xff]
        %v553 = vld [vmem:[%s534 + $0x90] sm:$0xff]
        %v554 = vld [vmem:[%s534 + $0x98] sm:$0xff]
        %v555 = vld [vmem:[%s534 + $0xa0] sm:$0xff]
        %v556 = vld [vmem:[%s534 + $0xa8] sm:$0xff]
        %v557 = vld [vmem:[%s534 + $0xb0] sm:$0xff]
        %v558 = vld [vmem:[%s534 + $0xb8] sm:$0xff]
        %v559 = vld [vmem:[%s534 + $0xc0] sm:$0xff]
        %v560 = vld [vmem:[%s534 + $0xc8] sm:$0xff]
        %v561 = vld [vmem:[%s534 + $0xd0] sm:$0xff]
        %v562 = vld [vmem:[%s534 + $0xd8] sm:$0xff]
        %v563 = vld [vmem:[%s534 + $0xe0] sm:$0xff]
        %v564 = vld [vmem:[%s534 + $0xe8] sm:$0xff]
        %v565 = vld [vmem:[%s534 + $0xf0] sm:$0xff]
        %v566 = vld [vmem:[%s534 + $0xf8] sm:$0xff]
        %v567 = vld [vmem:[%s534 + $0x100] sm:$0xff]
        %v568 = vld [vmem:[%s534 + $0x108] sm:$0xff]
        %v569 = vld [vmem:[%s534 + $0x110] sm:$0xff]
        %v570 = vld [vmem:[%s534 + $0x118] sm:$0xff]
        %v571 = vld [vmem:[%s534 + $0x120] sm:$0xff]
        %v572 = vld [vmem:[%s534 + $0x128] sm:$0xff]
        %v573 = vld [vmem:[%s534 + $0x130] sm:$0xff]
        %v574 = vld [vmem:[%s534 + $0x138] sm:$0xff]
        %v575 = vld [vmem:[%s534 + $0x140] sm:$0xff]
        %v576 = vld [vmem:[%s534 + $0x148] sm:$0xff]
        %v577 = vld [vmem:[%s534 + $0x150] sm:$0xff]
        %v578 = vld [vmem:[%s534 + $0x158] sm:$0xff]
        %v579 = vld [vmem:[%s534 + $0x160] sm:$0xff]
        %v580 = vld [vmem:[%s534 + $0x168] sm:$0xff]
        %v581 = vld [vmem:[%s534 + $0x170] sm:$0xff]
        %v582 = vld [vmem:[%s534 + $0x178] sm:$0xff]
        %v583 = vpack.c.bf16 %v538, %v535
        %v584 = vpack.c.bf16 %v539, %v536
        %v585 = vpack.c.bf16 %v540, %v537
        %v586 = vpack.c.bf16 %v544, %v541
        %v587 = vpack.c.bf16 %v545, %v542
        %v588 = vpack.c.bf16 %v546, %v543
        %v589 = vpack.c.bf16 %v550, %v547
        %v590 = vpack.c.bf16 %v551, %v548
        %v591 = vpack.c.bf16 %v552, %v549
        %v592 = vpack.c.bf16 %v556, %v553
        %v593 = vpack.c.bf16 %v557, %v554
        %v594 = vpack.c.bf16 %v558, %v555
        %v595 = vpack.c.bf16 %v562, %v559
        %v596 = vpack.c.bf16 %v563, %v560
        %v597 = vpack.c.bf16 %v564, %v561
        %v598 = vpack.c.bf16 %v568, %v565
        %v599 = vpack.c.bf16 %v569, %v566
        %v600 = vpack.c.bf16 %v570, %v567
        %v601 = vpack.c.bf16 %v574, %v571
        %v602 = vpack.c.bf16 %v575, %v572
        %v603 = vpack.c.bf16 %v576, %v573
        %v604 = vpack.c.bf16 %v580, %v577
        %v605 = vpack.c.bf16 %v581, %v578
        %v606 = vpack.c.bf16 %v582, %v579
        %v607 = vld [vmem:[%s1] sm:$0xf]
        %v608 = vld [vmem:[%s1 + $0x4] sm:$0xf]
        %v609 = vld [vmem:[%s1 + $0x8] sm:$0xf]
        %v610 = vld [vmem:[%s1 + $0xc] sm:$0xf]
        %v611 = vld [vmem:[%s1 + $0x10] sm:$0xf]
        %v612 = vld [vmem:[%s1 + $0x14] sm:$0xf]
        %v613 = vld [vmem:[%s1 + $0x18] sm:$0xf]
        %v614 = vld [vmem:[%s1 + $0x1c] sm:$0xf]
        %v615 = vld [vmem:[%s1 + $0x20] sm:$0xf]
        %v616 = vld [vmem:[%s1 + $0x24] sm:$0xf]
        %v617 = vld [vmem:[%s1 + $0x28] sm:$0xf]
        %v618 = vld [vmem:[%s1 + $0x2c] sm:$0xf]
        %v619 = vld [vmem:[%s1 + $0x30] sm:$0xf]
        %v620 = vld [vmem:[%s1 + $0x34] sm:$0xf]
        %v621 = vld [vmem:[%s1 + $0x38] sm:$0xf]
        %v622 = vld [vmem:[%s1 + $0x3c] sm:$0xf]
        %v623 = vld [vmem:[%s1 + $0x40] sm:$0xf]
        %v624 = vld [vmem:[%s1 + $0x44] sm:$0xf]
        %v625 = vld [vmem:[%s1 + $0x48] sm:$0xf]
        %v626 = vld [vmem:[%s1 + $0x4c] sm:$0xf]
        %v627 = vld [vmem:[%s1 + $0x50] sm:$0xf]
        %v628 = vld [vmem:[%s1 + $0x54] sm:$0xf]
        %v629 = vld [vmem:[%s1 + $0x58] sm:$0xf]
        %v630 = vld [vmem:[%s1 + $0x5c] sm:$0xf]
        %v631 = vld [vmem:[%s1 + $0x60] sm:$0xf]
        %v632 = vld [vmem:[%s1 + $0x64] sm:$0xf]
        %v633 = vld [vmem:[%s1 + $0x68] sm:$0xf]
        %v634 = vld [vmem:[%s1 + $0x6c] sm:$0xf]
        %v635 = vld [vmem:[%s1 + $0x70] sm:$0xf]
        %v636 = vld [vmem:[%s1 + $0x74] sm:$0xf]
        %v637 = vld [vmem:[%s1 + $0x78] sm:$0xf]
        %v638 = vld [vmem:[%s1 + $0x7c] sm:$0xf]
        %v639 = vld [vmem:[%s1 + $0x80] sm:$0xf]
        %v640 = vld [vmem:[%s1 + $0x84] sm:$0xf]
        %v641 = vld [vmem:[%s1 + $0x88] sm:$0xf]
        %v642 = vld [vmem:[%s1 + $0x8c] sm:$0xf]
        %v643 = vld [vmem:[%s1 + $0x90] sm:$0xf]
        %v644 = vld [vmem:[%s1 + $0x94] sm:$0xf]
        %v645 = vld [vmem:[%s1 + $0x98] sm:$0xf]
        %v646 = vld [vmem:[%s1 + $0x9c] sm:$0xf]
        %v647 = vld [vmem:[%s1 + $0xa0] sm:$0xf]
        %v648 = vld [vmem:[%s1 + $0xa4] sm:$0xf]
        %v649 = vld [vmem:[%s1 + $0xa8] sm:$0xf]
        %v650 = vld [vmem:[%s1 + $0xac] sm:$0xf]
        %v651 = vld [vmem:[%s1 + $0xb0] sm:$0xf]
        %v652 = vld [vmem:[%s1 + $0xb4] sm:$0xf]
        %v653 = vld [vmem:[%s1 + $0xb8] sm:$0xf]
        %v654 = vld [vmem:[%s1 + $0xbc] sm:$0xf]
        %s655 = sadd.s32 %s531, 1
        %s656 = smul.u32 %s655, 6
        %s657 = smul.addr %s656, 8
        %s658 = scalar_lea.vmem [#allocation2], %s657
        %v659 = vld [vmem:[%s658] sm:$0xff]
        %v660 = vld [vmem:[%s658 + $0x8] sm:$0xff]
        %v661 = vld [vmem:[%s658 + $0x10] sm:$0xff]
        %v662 = vld [vmem:[%s658 + $0x18] sm:$0xff]
        %v663 = vld [vmem:[%s658 + $0x20] sm:$0xff]
        %v664 = vld [vmem:[%s658 + $0x28] sm:$0xff]
        %v665 = vld [vmem:[%s658 + $0x30] sm:$0xff]
        %v666 = vld [vmem:[%s658 + $0x38] sm:$0xff]
        %v667 = vld [vmem:[%s658 + $0x40] sm:$0xff]
        %v668 = vld [vmem:[%s658 + $0x48] sm:$0xff]
        %v669 = vld [vmem:[%s658 + $0x50] sm:$0xff]
        %v670 = vld [vmem:[%s658 + $0x58] sm:$0xff]
        %v671 = vld [vmem:[%s658 + $0x60] sm:$0xff]
        %v672 = vld [vmem:[%s658 + $0x68] sm:$0xff]
        %v673 = vld [vmem:[%s658 + $0x70] sm:$0xff]
        %v674 = vld [vmem:[%s658 + $0x78] sm:$0xff]
        %v675 = vld [vmem:[%s658 + $0x80] sm:$0xff]
        %v676 = vld [vmem:[%s658 + $0x88] sm:$0xff]
        %v677 = vld [vmem:[%s658 + $0x90] sm:$0xff]
        %v678 = vld [vmem:[%s658 + $0x98] sm:$0xff]
        %v679 = vld [vmem:[%s658 + $0xa0] sm:$0xff]
        %v680 = vld [vmem:[%s658 + $0xa8] sm:$0xff]
        %v681 = vld [vmem:[%s658 + $0xb0] sm:$0xff]
        %v682 = vld [vmem:[%s658 + $0xb8] sm:$0xff]
        %v683 = vld [vmem:[%s658 + $0xc0] sm:$0xff]
        %v684 = vld [vmem:[%s658 + $0xc8] sm:$0xff]
        %v685 = vld [vmem:[%s658 + $0xd0] sm:$0xff]
        %v686 = vld [vmem:[%s658 + $0xd8] sm:$0xff]
        %v687 = vld [vmem:[%s658 + $0xe0] sm:$0xff]
        %v688 = vld [vmem:[%s658 + $0xe8] sm:$0xff]
        %v689 = vld [vmem:[%s658 + $0xf0] sm:$0xff]
        %v690 = vld [vmem:[%s658 + $0xf8] sm:$0xff]
        %v691 = vld [vmem:[%s658 + $0x100] sm:$0xff]
        %v692 = vld [vmem:[%s658 + $0x108] sm:$0xff]
        %v693 = vld [vmem:[%s658 + $0x110] sm:$0xff]
        %v694 = vld [vmem:[%s658 + $0x118] sm:$0xff]
        %v695 = vld [vmem:[%s658 + $0x120] sm:$0xff]
        %v696 = vld [vmem:[%s658 + $0x128] sm:$0xff]
        %v697 = vld [vmem:[%s658 + $0x130] sm:$0xff]
        %v698 = vld [vmem:[%s658 + $0x138] sm:$0xff]
        %v699 = vld [vmem:[%s658 + $0x140] sm:$0xff]
        %v700 = vld [vmem:[%s658 + $0x148] sm:$0xff]
        %v701 = vld [vmem:[%s658 + $0x150] sm:$0xff]
        %v702 = vld [vmem:[%s658 + $0x158] sm:$0xff]
        %v703 = vld [vmem:[%s658 + $0x160] sm:$0xff]
        %v704 = vld [vmem:[%s658 + $0x168] sm:$0xff]
        %v705 = vld [vmem:[%s658 + $0x170] sm:$0xff]
        %v706 = vld [vmem:[%s658 + $0x178] sm:$0xff]
        %v707 = vpack.c.bf16 %v662, %v659
        %v708 = vpack.c.bf16 %v663, %v660
        %v709 = vpack.c.bf16 %v664, %v661
        %v710 = vpack.c.bf16 %v668, %v665
        %v711 = vpack.c.bf16 %v669, %v666
        %v712 = vpack.c.bf16 %v670, %v667
        %v713 = vpack.c.bf16 %v674, %v671
        %v714 = vpack.c.bf16 %v675, %v672
        %v715 = vpack.c.bf16 %v676, %v673
        %v716 = vpack.c.bf16 %v680, %v677
        %v717 = vpack.c.bf16 %v681, %v678
        %v718 = vpack.c.bf16 %v682, %v679
        %v719 = vpack.c.bf16 %v686, %v683
        %v720 = vpack.c.bf16 %v687, %v684
        %v721 = vpack.c.bf16 %v688, %v685
        %v722 = vpack.c.bf16 %v692, %v689
        %v723 = vpack.c.bf16 %v693, %v690
        %v724 = vpack.c.bf16 %v694, %v691
        %v725 = vpack.c.bf16 %v698, %v695
        %v726 = vpack.c.bf16 %v699, %v696
        %v727 = vpack.c.bf16 %v700, %v697
        %v728 = vpack.c.bf16 %v704, %v701
        %v729 = vpack.c.bf16 %v705, %v702
        %v730 = vpack.c.bf16 %v706, %v703
        %s731 = scalar_lea.vmem %s1, 192
        %v732 = vld [vmem:[%s731] sm:$0xf]
        %v733 = vld [vmem:[%s731 + $0x4] sm:$0xf]
        %v734 = vld [vmem:[%s731 + $0x8] sm:$0xf]
        %v735 = vld [vmem:[%s731 + $0xc] sm:$0xf]
        %v736 = vld [vmem:[%s731 + $0x10] sm:$0xf]
        %v737 = vld [vmem:[%s731 + $0x14] sm:$0xf]
        %v738 = vld [vmem:[%s731 + $0x18] sm:$0xf]
        %v739 = vld [vmem:[%s731 + $0x1c] sm:$0xf]
        %v740 = vld [vmem:[%s731 + $0x20] sm:$0xf]
        %v741 = vld [vmem:[%s731 + $0x24] sm:$0xf]
        %v742 = vld [vmem:[%s731 + $0x28] sm:$0xf]
        %v743 = vld [vmem:[%s731 + $0x2c] sm:$0xf]
        %v744 = vld [vmem:[%s731 + $0x30] sm:$0xf]
        %v745 = vld [vmem:[%s731 + $0x34] sm:$0xf]
        %v746 = vld [vmem:[%s731 + $0x38] sm:$0xf]
        %v747 = vld [vmem:[%s731 + $0x3c] sm:$0xf]
        %v748 = vld [vmem:[%s731 + $0x40] sm:$0xf]
        %v749 = vld [vmem:[%s731 + $0x44] sm:$0xf]
        %v750 = vld [vmem:[%s731 + $0x48] sm:$0xf]
        %v751 = vld [vmem:[%s731 + $0x4c] sm:$0xf]
        %v752 = vld [vmem:[%s731 + $0x50] sm:$0xf]
        %v753 = vld [vmem:[%s731 + $0x54] sm:$0xf]
        %v754 = vld [vmem:[%s731 + $0x58] sm:$0xf]
        %v755 = vld [vmem:[%s731 + $0x5c] sm:$0xf]
        %v756 = vld [vmem:[%s731 + $0x60] sm:$0xf]
        %v757 = vld [vmem:[%s731 + $0x64] sm:$0xf]
        %v758 = vld [vmem:[%s731 + $0x68] sm:$0xf]
        %v759 = vld [vmem:[%s731 + $0x6c] sm:$0xf]
        %v760 = vld [vmem:[%s731 + $0x70] sm:$0xf]
        %v761 = vld [vmem:[%s731 + $0x74] sm:$0xf]
        %v762 = vld [vmem:[%s731 + $0x78] sm:$0xf]
        %v763 = vld [vmem:[%s731 + $0x7c] sm:$0xf]
        %v764 = vld [vmem:[%s731 + $0x80] sm:$0xf]
        %v765 = vld [vmem:[%s731 + $0x84] sm:$0xf]
        %v766 = vld [vmem:[%s731 + $0x88] sm:$0xf]
        %v767 = vld [vmem:[%s731 + $0x8c] sm:$0xf]
        %v768 = vld [vmem:[%s731 + $0x90] sm:$0xf]
        %v769 = vld [vmem:[%s731 + $0x94] sm:$0xf]
        %v770 = vld [vmem:[%s731 + $0x98] sm:$0xf]
        %v771 = vld [vmem:[%s731 + $0x9c] sm:$0xf]
        %v772 = vld [vmem:[%s731 + $0xa0] sm:$0xf]
        %v773 = vld [vmem:[%s731 + $0xa4] sm:$0xf]
        %v774 = vld [vmem:[%s731 + $0xa8] sm:$0xf]
        %v775 = vld [vmem:[%s731 + $0xac] sm:$0xf]
        %v776 = vld [vmem:[%s731 + $0xb0] sm:$0xf]
        %v777 = vld [vmem:[%s731 + $0xb4] sm:$0xf]
        %v778 = vld [vmem:[%s731 + $0xb8] sm:$0xf]
        %v779 = vld [vmem:[%s731 + $0xbc] sm:$0xf]
        %v828 = vunpack.c.l.b16 %v732
        %v829 = vunpack.c.l.b16 %v733
        %v830 = vunpack.c.l.b16 %v734
        %v831 = vunpack.c.l.b16 %v735
        %v832 = vunpack.c.l.b16 %v736
        %v833 = vunpack.c.l.b16 %v737
        %v834 = vunpack.c.l.b16 %v738
        %v835 = vunpack.c.l.b16 %v739
        %v836 = vunpack.c.l.b16 %v740
        %v837 = vunpack.c.l.b16 %v741
        %v838 = vunpack.c.l.b16 %v742
        %v839 = vunpack.c.l.b16 %v743
        %v840 = vunpack.c.l.b16 %v744
        %v841 = vunpack.c.l.b16 %v745
        %v842 = vunpack.c.l.b16 %v746
        %v843 = vunpack.c.l.b16 %v747
        %v844 = vunpack.c.l.b16 %v748
        %v845 = vunpack.c.l.b16 %v749
        %v846 = vunpack.c.l.b16 %v750
        %v847 = vunpack.c.l.b16 %v751
        %v848 = vunpack.c.l.b16 %v752
        %v849 = vunpack.c.l.b16 %v753
        %v850 = vunpack.c.l.b16 %v754
        %v851 = vunpack.c.l.b16 %v755
        %v852 = vunpack.c.l.b16 %v756
        %v853 = vunpack.c.l.b16 %v757
        %v854 = vunpack.c.l.b16 %v758
        %v855 = vunpack.c.l.b16 %v759
        %v856 = vunpack.c.l.b16 %v760
        %v857 = vunpack.c.l.b16 %v761
        %v858 = vunpack.c.l.b16 %v762
        %v859 = vunpack.c.l.b16 %v763
        %v860 = vunpack.c.l.b16 %v764
        %v861 = vunpack.c.l.b16 %v765
        %v862 = vunpack.c.l.b16 %v766
        %v863 = vunpack.c.l.b16 %v767
        %v864 = vunpack.c.l.b16 %v768
        %v865 = vunpack.c.l.b16 %v769
        %v866 = vunpack.c.l.b16 %v770
        %v867 = vunpack.c.l.b16 %v771
        %v868 = vunpack.c.l.b16 %v772
        %v869 = vunpack.c.l.b16 %v773
        %v870 = vunpack.c.l.b16 %v774
        %v871 = vunpack.c.l.b16 %v775
        %v872 = vunpack.c.l.b16 %v776
        %v873 = vunpack.c.l.b16 %v777
        %v874 = vunpack.c.l.b16 %v778
        %v875 = vunpack.c.l.b16 %v779
        %v876 = vpack.c.b16 %v829, %v828
        %v877 = vpack.c.b16 %v831, %v830
        %v878 = vpack.c.b16 %v833, %v832
        %v879 = vpack.c.b16 %v835, %v834
        %v880 = vpack.c.b16 %v837, %v836
        %v881 = vpack.c.b16 %v839, %v838
        %v882 = vpack.c.b16 %v841, %v840
        %v883 = vpack.c.b16 %v843, %v842
        %v884 = vpack.c.b16 %v845, %v844
        %v885 = vpack.c.b16 %v847, %v846
        %v886 = vpack.c.b16 %v849, %v848
        %v887 = vpack.c.b16 %v851, %v850
        %v888 = vpack.c.b16 %v853, %v852
        %v889 = vpack.c.b16 %v855, %v854
        %v890 = vpack.c.b16 %v857, %v856
        %v891 = vpack.c.b16 %v859, %v858
        %v892 = vpack.c.b16 %v861, %v860
        %v893 = vpack.c.b16 %v863, %v862
        %v894 = vpack.c.b16 %v865, %v864
        %v895 = vpack.c.b16 %v867, %v866
        %v896 = vpack.c.b16 %v869, %v868
        %v897 = vpack.c.b16 %v871, %v870
        %v898 = vpack.c.b16 %v873, %v872
        %v899 = vpack.c.b16 %v875, %v874
        %924 = vmatpush.bf16.msra.mxu0 %v883
        %925 = vmatpush.bf16.msra.mxu0 %v882
        %926 = vmatpush.bf16.msra.mxu0 %v881
        %927 = vmatpush.bf16.msra.mxu0 %v880
        %928 = vmatpush.bf16.msra.mxu0 %v879
        %929 = vmatpush.bf16.msra.mxu0 %v878
        %930 = vmatpush.bf16.msra.mxu0 %v877
        %931 = vmatpush.bf16.msra.mxu0 %v876
        %932 = vmatmul.bf16.gmra.mxu0 %v707
        %v933 = vpop.f32.mrf.mxu0
        %v934 = vadd.f32 0.0, %v933
        %v935 = vpop.f32.mrf.mxu0
        %v936 = vadd.f32 0.0, %v935
        %937 = vmatmul.bf16.gmra.mxu0 %v710
        %v938 = vpop.f32.mrf.mxu0
        %v939 = vadd.f32 0.0, %v938
        %v940 = vpop.f32.mrf.mxu0
        %v941 = vadd.f32 0.0, %v940
        %942 = vmatmul.bf16.gmra.mxu0 %v713
        %v943 = vpop.f32.mrf.mxu0
        %v944 = vadd.f32 0.0, %v943
        %v945 = vpop.f32.mrf.mxu0
        %v946 = vadd.f32 0.0, %v945
        %947 = vmatmul.bf16.gmra.mxu0 %v716
        %v948 = vpop.f32.mrf.mxu0
        %v949 = vadd.f32 0.0, %v948
        %v950 = vpop.f32.mrf.mxu0
        %v951 = vadd.f32 0.0, %v950
        %952 = vmatmul.bf16.gmra.mxu0 %v719
        %v953 = vpop.f32.mrf.mxu0
        %v954 = vadd.f32 0.0, %v953
        %v955 = vpop.f32.mrf.mxu0
        %v956 = vadd.f32 0.0, %v955
        %957 = vmatmul.bf16.gmra.mxu0 %v722
        %v958 = vpop.f32.mrf.mxu0
        %v959 = vadd.f32 0.0, %v958
        %v960 = vpop.f32.mrf.mxu0
        %v961 = vadd.f32 0.0, %v960
        %962 = vmatmul.bf16.gmra.mxu0 %v725
        %v963 = vpop.f32.mrf.mxu0
        %v964 = vadd.f32 0.0, %v963
        %v965 = vpop.f32.mrf.mxu0
        %v966 = vadd.f32 0.0, %v965
        %967 = vmatmul.bf16.gmra.mxu0 %v728
        %v968 = vpop.f32.mrf.mxu0
        %v969 = vadd.f32 0.0, %v968
        %v970 = vpop.f32.mrf.mxu0
        %v971 = vadd.f32 0.0, %v970
        %972 = vdwg.mxu0
        %973 = vmatpush.bf16.msra.mxu0 %v891
        %974 = vmatpush.bf16.msra.mxu0 %v890
        %975 = vmatpush.bf16.msra.mxu0 %v889
        %976 = vmatpush.bf16.msra.mxu0 %v888
        %977 = vmatpush.bf16.msra.mxu0 %v887
        %978 = vmatpush.bf16.msra.mxu0 %v886
        %979 = vmatpush.bf16.msra.mxu0 %v885
        %980 = vmatpush.bf16.msra.mxu0 %v884
        %981 = vmatmul.bf16.gmra.mxu0 %v708
        %v982 = vpop.f32.mrf.mxu0
        %v983 = vadd.f32 %v934, %v982
        %v984 = vpop.f32.mrf.mxu0
        %v985 = vadd.f32 %v936, %v984
        %986 = vmatmul.bf16.gmra.mxu0 %v711
        %v987 = vpop.f32.mrf.mxu0
        %v988 = vadd.f32 %v939, %v987
        %v989 = vpop.f32.mrf.mxu0
        %v990 = vadd.f32 %v941, %v989
        %991 = vmatmul.bf16.gmra.mxu0 %v714
        %v992 = vpop.f32.mrf.mxu0
        %v993 = vadd.f32 %v944, %v992
        %v994 = vpop.f32.mrf.mxu0
        %v995 = vadd.f32 %v946, %v994
        %996 = vmatmul.bf16.gmra.mxu0 %v717
        %v997 = vpop.f32.mrf.mxu0
        %v998 = vadd.f32 %v949, %v997
        %v999 = vpop.f32.mrf.mxu0
        %v1000 = vadd.f32 %v951, %v999
        %1001 = vmatmul.bf16.gmra.mxu0 %v720
        %v1002 = vpop.f32.mrf.mxu0
        %v1003 = vadd.f32 %v954, %v1002
        %v1004 = vpop.f32.mrf.mxu0
        %v1005 = vadd.f32 %v956, %v1004
        %1006 = vmatmul.bf16.gmra.mxu0 %v723
        %v1007 = vpop.f32.mrf.mxu0
        %v1008 = vadd.f32 %v959, %v1007
        %v1009 = vpop.f32.mrf.mxu0
        %v1010 = vadd.f32 %v961, %v1009
        %1011 = vmatmul.bf16.gmra.mxu0 %v726
        %v1012 = vpop.f32.mrf.mxu0
        %v1013 = vadd.f32 %v964, %v1012
        %v1014 = vpop.f32.mrf.mxu0
        %v1015 = vadd.f32 %v966, %v1014
        %1016 = vmatmul.bf16.gmra.mxu0 %v729
        %v1017 = vpop.f32.mrf.mxu0
        %v1018 = vadd.f32 %v969, %v1017
        %v1019 = vpop.f32.mrf.mxu0
        %v1020 = vadd.f32 %v971, %v1019
        %1021 = vdwg.mxu0
        %1022 = vmatpush.bf16.msra.mxu0 %v899
        %1023 = vmatpush.bf16.msra.mxu0 %v898
        %1024 = vmatpush.bf16.msra.mxu0 %v897
        %1025 = vmatpush.bf16.msra.mxu0 %v896
        %1026 = vmatpush.bf16.msra.mxu0 %v895
        %1027 = vmatpush.bf16.msra.mxu0 %v894
        %1028 = vmatpush.bf16.msra.mxu0 %v893
        %1029 = vmatpush.bf16.msra.mxu0 %v892
        %1030 = vmatmul.bf16.gmra.mxu0 %v709
        %v1031 = vpop.f32.mrf.mxu0
        %v1032 = vadd.f32 %v983, %v1031
        %v1033 = vpop.f32.mrf.mxu0
        %v1034 = vadd.f32 %v985, %v1033
        %1035 = vmatmul.bf16.gmra.mxu0 %v712
        %v1036 = vpop.f32.mrf.mxu0
        %v1037 = vadd.f32 %v988, %v1036
        %v1038 = vpop.f32.mrf.mxu0
        %v1039 = vadd.f32 %v990, %v1038
        %1040 = vmatmul.bf16.gmra.mxu0 %v715
        %v1041 = vpop.f32.mrf.mxu0
        %v1042 = vadd.f32 %v993, %v1041
        %v1043 = vpop.f32.mrf.mxu0
        %v1044 = vadd.f32 %v995, %v1043
        %1045 = vmatmul.bf16.gmra.mxu0 %v718
        %v1046 = vpop.f32.mrf.mxu0
        %v1047 = vadd.f32 %v998, %v1046
        %v1048 = vpop.f32.mrf.mxu0
        %v1049 = vadd.f32 %v1000, %v1048
        %1050 = vmatmul.bf16.gmra.mxu0 %v721
        %v1051 = vpop.f32.mrf.mxu0
        %v1052 = vadd.f32 %v1003, %v1051
        %v1053 = vpop.f32.mrf.mxu0
        %v1054 = vadd.f32 %v1005, %v1053
        %1055 = vmatmul.bf16.gmra.mxu0 %v724
        %v1056 = vpop.f32.mrf.mxu0
        %v1057 = vadd.f32 %v1008, %v1056
        %v1058 = vpop.f32.mrf.mxu0
        %v1059 = vadd.f32 %v1010, %v1058
        %1060 = vmatmul.bf16.gmra.mxu0 %v727
        %v1061 = vpop.f32.mrf.mxu0
        %v1062 = vadd.f32 %v1013, %v1061
        %v1063 = vpop.f32.mrf.mxu0
        %v1064 = vadd.f32 %v1015, %v1063
        %1065 = vmatmul.bf16.gmra.mxu0 %v730
        %v1066 = vpop.f32.mrf.mxu0
        %v1067 = vadd.f32 %v1018, %v1066
        %v1068 = vpop.f32.mrf.mxu0
        %v1069 = vadd.f32 %v1020, %v1068
        %1070 = vdwg.mxu0
        %v1119 = vunpack.c.l.b16 %v607
        %v1120 = vunpack.c.l.b16 %v608
        %v1121 = vunpack.c.l.b16 %v609
        %v1122 = vunpack.c.l.b16 %v610
        %v1123 = vunpack.c.l.b16 %v611
        %v1124 = vunpack.c.l.b16 %v612
        %v1125 = vunpack.c.l.b16 %v613
        %v1126 = vunpack.c.l.b16 %v614
        %v1127 = vunpack.c.l.b16 %v615
        %v1128 = vunpack.c.l.b16 %v616
        %v1129 = vunpack.c.l.b16 %v617
        %v1130 = vunpack.c.l.b16 %v618
        %v1131 = vunpack.c.l.b16 %v619
        %v1132 = vunpack.c.l.b16 %v620
        %v1133 = vunpack.c.l.b16 %v621
        %v1134 = vunpack.c.l.b16 %v622
        %v1135 = vunpack.c.l.b16 %v623
        %v1136 = vunpack.c.l.b16 %v624
        %v1137 = vunpack.c.l.b16 %v625
        %v1138 = vunpack.c.l.b16 %v626
        %v1139 = vunpack.c.l.b16 %v627
        %v1140 = vunpack.c.l.b16 %v628
        %v1141 = vunpack.c.l.b16 %v629
        %v1142 = vunpack.c.l.b16 %v630
        %v1143 = vunpack.c.l.b16 %v631
        %v1144 = vunpack.c.l.b16 %v632
        %v1145 = vunpack.c.l.b16 %v633
        %v1146 = vunpack.c.l.b16 %v634
        %v1147 = vunpack.c.l.b16 %v635
        %v1148 = vunpack.c.l.b16 %v636
        %v1149 = vunpack.c.l.b16 %v637
        %v1150 = vunpack.c.l.b16 %v638
        %v1151 = vunpack.c.l.b16 %v639
        %v1152 = vunpack.c.l.b16 %v640
        %v1153 = vunpack.c.l.b16 %v641
        %v1154 = vunpack.c.l.b16 %v642
        %v1155 = vunpack.c.l.b16 %v643
        %v1156 = vunpack.c.l.b16 %v644
        %v1157 = vunpack.c.l.b16 %v645
        %v1158 = vunpack.c.l.b16 %v646
        %v1159 = vunpack.c.l.b16 %v647
        %v1160 = vunpack.c.l.b16 %v648
        %v1161 = vunpack.c.l.b16 %v649
        %v1162 = vunpack.c.l.b16 %v650
        %v1163 = vunpack.c.l.b16 %v651
        %v1164 = vunpack.c.l.b16 %v652
        %v1165 = vunpack.c.l.b16 %v653
        %v1166 = vunpack.c.l.b16 %v654
        %v1167 = vpack.c.b16 %v1120, %v1119
        %v1168 = vpack.c.b16 %v1122, %v1121
        %v1169 = vpack.c.b16 %v1124, %v1123
        %v1170 = vpack.c.b16 %v1126, %v1125
        %v1171 = vpack.c.b16 %v1128, %v1127
        %v1172 = vpack.c.b16 %v1130, %v1129
        %v1173 = vpack.c.b16 %v1132, %v1131
        %v1174 = vpack.c.b16 %v1134, %v1133
        %v1175 = vpack.c.b16 %v1136, %v1135
        %v1176 = vpack.c.b16 %v1138, %v1137
        %v1177 = vpack.c.b16 %v1140, %v1139
        %v1178 = vpack.c.b16 %v1142, %v1141
        %v1179 = vpack.c.b16 %v1144, %v1143
        %v1180 = vpack.c.b16 %v1146, %v1145
        %v1181 = vpack.c.b16 %v1148, %v1147
        %v1182 = vpack.c.b16 %v1150, %v1149
        %v1183 = vpack.c.b16 %v1152, %v1151
        %v1184 = vpack.c.b16 %v1154, %v1153
        %v1185 = vpack.c.b16 %v1156, %v1155
        %v1186 = vpack.c.b16 %v1158, %v1157
        %v1187 = vpack.c.b16 %v1160, %v1159
        %v1188 = vpack.c.b16 %v1162, %v1161
        %v1189 = vpack.c.b16 %v1164, %v1163
        %v1190 = vpack.c.b16 %v1166, %v1165
        %1215 = vmatpush.bf16.msra.mxu0 %v1174
        %1216 = vmatpush.bf16.msra.mxu0 %v1173
        %1217 = vmatpush.bf16.msra.mxu0 %v1172
        %1218 = vmatpush.bf16.msra.mxu0 %v1171
        %1219 = vmatpush.bf16.msra.mxu0 %v1170
        %1220 = vmatpush.bf16.msra.mxu0 %v1169
        %1221 = vmatpush.bf16.msra.mxu0 %v1168
        %1222 = vmatpush.bf16.msra.mxu0 %v1167
        %1223 = vmatmul.bf16.gmra.mxu0 %v583
        %v1224 = vpop.f32.mrf.mxu0
        %v1225 = vadd.f32 %v1032, %v1224
        %v1226 = vpop.f32.mrf.mxu0
        %v1227 = vadd.f32 %v1034, %v1226
        %1228 = vmatmul.bf16.gmra.mxu0 %v586
        %v1229 = vpop.f32.mrf.mxu0
        %v1230 = vadd.f32 %v1037, %v1229
        %v1231 = vpop.f32.mrf.mxu0
        %v1232 = vadd.f32 %v1039, %v1231
        %1233 = vmatmul.bf16.gmra.mxu0 %v589
        %v1234 = vpop.f32.mrf.mxu0
        %v1235 = vadd.f32 %v1042, %v1234
        %v1236 = vpop.f32.mrf.mxu0
        %v1237 = vadd.f32 %v1044, %v1236
        %1238 = vmatmul.bf16.gmra.mxu0 %v592
        %v1239 = vpop.f32.mrf.mxu0
        %v1240 = vadd.f32 %v1047, %v1239
        %v1241 = vpop.f32.mrf.mxu0
        %v1242 = vadd.f32 %v1049, %v1241
        %1243 = vmatmul.bf16.gmra.mxu0 %v595
        %v1244 = vpop.f32.mrf.mxu0
        %v1245 = vadd.f32 %v1052, %v1244
        %v1246 = vpop.f32.mrf.mxu0
        %v1247 = vadd.f32 %v1054, %v1246
        %1248 = vmatmul.bf16.gmra.mxu0 %v598
        %v1249 = vpop.f32.mrf.mxu0
        %v1250 = vadd.f32 %v1057, %v1249
        %v1251 = vpop.f32.mrf.mxu0
        %v1252 = vadd.f32 %v1059, %v1251
        %1253 = vmatmul.bf16.gmra.mxu0 %v601
        %v1254 = vpop.f32.mrf.mxu0
        %v1255 = vadd.f32 %v1062, %v1254
        %v1256 = vpop.f32.mrf.mxu0
        %v1257 = vadd.f32 %v1064, %v1256
        %1258 = vmatmul.bf16.gmra.mxu0 %v604
        %v1259 = vpop.f32.mrf.mxu0
        %v1260 = vadd.f32 %v1067, %v1259
        %v1261 = vpop.f32.mrf.mxu0
        %v1262 = vadd.f32 %v1069, %v1261
        %1263 = vdwg.mxu0
        %1264 = vmatpush.bf16.msra.mxu0 %v1182
        %1265 = vmatpush.bf16.msra.mxu0 %v1181
        %1266 = vmatpush.bf16.msra.mxu0 %v1180
        %1267 = vmatpush.bf16.msra.mxu0 %v1179
        %1268 = vmatpush.bf16.msra.mxu0 %v1178
        %1269 = vmatpush.bf16.msra.mxu0 %v1177
        %1270 = vmatpush.bf16.msra.mxu0 %v1176
        %1271 = vmatpush.bf16.msra.mxu0 %v1175
        %1272 = vmatmul.bf16.gmra.mxu0 %v584
        %v1273 = vpop.f32.mrf.mxu0
        %v1274 = vadd.f32 %v1225, %v1273
        %v1275 = vpop.f32.mrf.mxu0
        %v1276 = vadd.f32 %v1227, %v1275
        %1277 = vmatmul.bf16.gmra.mxu0 %v587
        %v1278 = vpop.f32.mrf.mxu0
        %v1279 = vadd.f32 %v1230, %v1278
        %v1280 = vpop.f32.mrf.mxu0
        %v1281 = vadd.f32 %v1232, %v1280
        %1282 = vmatmul.bf16.gmra.mxu0 %v590
        %v1283 = vpop.f32.mrf.mxu0
        %v1284 = vadd.f32 %v1235, %v1283
        %v1285 = vpop.f32.mrf.mxu0
        %v1286 = vadd.f32 %v1237, %v1285
        %1287 = vmatmul.bf16.gmra.mxu0 %v593
        %v1288 = vpop.f32.mrf.mxu0
        %v1289 = vadd.f32 %v1240, %v1288
        %v1290 = vpop.f32.mrf.mxu0
        %v1291 = vadd.f32 %v1242, %v1290
        %1292 = vmatmul.bf16.gmra.mxu0 %v596
        %v1293 = vpop.f32.mrf.mxu0
        %v1294 = vadd.f32 %v1245, %v1293
        %v1295 = vpop.f32.mrf.mxu0
        %v1296 = vadd.f32 %v1247, %v1295
        %1297 = vmatmul.bf16.gmra.mxu0 %v599
        %v1298 = vpop.f32.mrf.mxu0
        %v1299 = vadd.f32 %v1250, %v1298
        %v1300 = vpop.f32.mrf.mxu0
        %v1301 = vadd.f32 %v1252, %v1300
        %1302 = vmatmul.bf16.gmra.mxu0 %v602
        %v1303 = vpop.f32.mrf.mxu0
        %v1304 = vadd.f32 %v1255, %v1303
        %v1305 = vpop.f32.mrf.mxu0
        %v1306 = vadd.f32 %v1257, %v1305
        %1307 = vmatmul.bf16.gmra.mxu0 %v605
        %v1308 = vpop.f32.mrf.mxu0
        %v1309 = vadd.f32 %v1260, %v1308
        %v1310 = vpop.f32.mrf.mxu0
        %v1311 = vadd.f32 %v1262, %v1310
        %1312 = vdwg.mxu0
        %1313 = vmatpush.bf16.msra.mxu0 %v1190
        %1314 = vmatpush.bf16.msra.mxu0 %v1189
        %1315 = vmatpush.bf16.msra.mxu0 %v1188
        %1316 = vmatpush.bf16.msra.mxu0 %v1187
        %1317 = vmatpush.bf16.msra.mxu0 %v1186
        %1318 = vmatpush.bf16.msra.mxu0 %v1185
        %1319 = vmatpush.bf16.msra.mxu0 %v1184
        %1320 = vmatpush.bf16.msra.mxu0 %v1183
        %1321 = vmatmul.bf16.gmra.mxu0 %v585
        %v1322 = vpop.f32.mrf.mxu0
        %v1323 = vadd.f32 %v1274, %v1322
        %v1324 = vpop.f32.mrf.mxu0
        %v1325 = vadd.f32 %v1276, %v1324
        %1326 = vmatmul.bf16.gmra.mxu0 %v588
        %v1327 = vpop.f32.mrf.mxu0
        %v1328 = vadd.f32 %v1279, %v1327
        %v1329 = vpop.f32.mrf.mxu0
        %v1330 = vadd.f32 %v1281, %v1329
        %1331 = vmatmul.bf16.gmra.mxu0 %v591
        %v1332 = vpop.f32.mrf.mxu0
        %v1333 = vadd.f32 %v1284, %v1332
        %v1334 = vpop.f32.mrf.mxu0
        %v1335 = vadd.f32 %v1286, %v1334
        %1336 = vmatmul.bf16.gmra.mxu0 %v594
        %v1337 = vpop.f32.mrf.mxu0
        %v1338 = vadd.f32 %v1289, %v1337
        %v1339 = vpop.f32.mrf.mxu0
        %v1340 = vadd.f32 %v1291, %v1339
        %1341 = vmatmul.bf16.gmra.mxu0 %v597
        %v1342 = vpop.f32.mrf.mxu0
        %v1343 = vadd.f32 %v1294, %v1342
        %v1344 = vpop.f32.mrf.mxu0
        %v1345 = vadd.f32 %v1296, %v1344
        %1346 = vmatmul.bf16.gmra.mxu0 %v600
        %v1347 = vpop.f32.mrf.mxu0
        %v1348 = vadd.f32 %v1299, %v1347
        %v1349 = vpop.f32.mrf.mxu0
        %v1350 = vadd.f32 %v1301, %v1349
        %1351 = vmatmul.bf16.gmra.mxu0 %v603
        %v1352 = vpop.f32.mrf.mxu0
        %v1353 = vadd.f32 %v1304, %v1352
        %v1354 = vpop.f32.mrf.mxu0
        %v1355 = vadd.f32 %v1306, %v1354
        %1356 = vmatmul.bf16.gmra.mxu0 %v606
        %v1357 = vpop.f32.mrf.mxu0
        %v1358 = vadd.f32 %v1309, %v1357
        %v1359 = vpop.f32.mrf.mxu0
        %v1360 = vadd.f32 %v1311, %v1359
        %1361 = vdwg.mxu0
        %s1362 = sadd.s32 %s531, 2
        %s1363 = smul.u32 %s1362, 6
        %s1364 = smul.addr %s1363, 8
        %s1365 = scalar_lea.vmem [#allocation2], %s1364
        %v1366 = vld [vmem:[%s1365] sm:$0xff]
        %v1367 = vld [vmem:[%s1365 + $0x8] sm:$0xff]
        %v1368 = vld [vmem:[%s1365 + $0x10] sm:$0xff]
        %v1369 = vld [vmem:[%s1365 + $0x18] sm:$0xff]
        %v1370 = vld [vmem:[%s1365 + $0x20] sm:$0xff]
        %v1371 = vld [vmem:[%s1365 + $0x28] sm:$0xff]
        %v1372 = vld [vmem:[%s1365 + $0x30] sm:$0xff]
        %v1373 = vld [vmem:[%s1365 + $0x38] sm:$0xff]
        %v1374 = vld [vmem:[%s1365 + $0x40] sm:$0xff]
        %v1375 = vld [vmem:[%s1365 + $0x48] sm:$0xff]
        %v1376 = vld [vmem:[%s1365 + $0x50] sm:$0xff]
        %v1377 = vld [vmem:[%s1365 + $0x58] sm:$0xff]
        %v1378 = vld [vmem:[%s1365 + $0x60] sm:$0xff]
        %v1379 = vld [vmem:[%s1365 + $0x68] sm:$0xff]
        %v1380 = vld [vmem:[%s1365 + $0x70] sm:$0xff]
        %v1381 = vld [vmem:[%s1365 + $0x78] sm:$0xff]
        %v1382 = vld [vmem:[%s1365 + $0x80] sm:$0xff]
        %v1383 = vld [vmem:[%s1365 + $0x88] sm:$0xff]
        %v1384 = vld [vmem:[%s1365 + $0x90] sm:$0xff]
        %v1385 = vld [vmem:[%s1365 + $0x98] sm:$0xff]
        %v1386 = vld [vmem:[%s1365 + $0xa0] sm:$0xff]
        %v1387 = vld [vmem:[%s1365 + $0xa8] sm:$0xff]
        %v1388 = vld [vmem:[%s1365 + $0xb0] sm:$0xff]
        %v1389 = vld [vmem:[%s1365 + $0xb8] sm:$0xff]
        %v1390 = vld [vmem:[%s1365 + $0xc0] sm:$0xff]
        %v1391 = vld [vmem:[%s1365 + $0xc8] sm:$0xff]
        %v1392 = vld [vmem:[%s1365 + $0xd0] sm:$0xff]
        %v1393 = vld [vmem:[%s1365 + $0xd8] sm:$0xff]
        %v1394 = vld [vmem:[%s1365 + $0xe0] sm:$0xff]
        %v1395 = vld [vmem:[%s1365 + $0xe8] sm:$0xff]
        %v1396 = vld [vmem:[%s1365 + $0xf0] sm:$0xff]
        %v1397 = vld [vmem:[%s1365 + $0xf8] sm:$0xff]
        %v1398 = vld [vmem:[%s1365 + $0x100] sm:$0xff]
        %v1399 = vld [vmem:[%s1365 + $0x108] sm:$0xff]
        %v1400 = vld [vmem:[%s1365 + $0x110] sm:$0xff]
        %v1401 = vld [vmem:[%s1365 + $0x118] sm:$0xff]
        %v1402 = vld [vmem:[%s1365 + $0x120] sm:$0xff]
        %v1403 = vld [vmem:[%s1365 + $0x128] sm:$0xff]
        %v1404 = vld [vmem:[%s1365 + $0x130] sm:$0xff]
        %v1405 = vld [vmem:[%s1365 + $0x138] sm:$0xff]
        %v1406 = vld [vmem:[%s1365 + $0x140] sm:$0xff]
        %v1407 = vld [vmem:[%s1365 + $0x148] sm:$0xff]
        %v1408 = vld [vmem:[%s1365 + $0x150] sm:$0xff]
        %v1409 = vld [vmem:[%s1365 + $0x158] sm:$0xff]
        %v1410 = vld [vmem:[%s1365 + $0x160] sm:$0xff]
        %v1411 = vld [vmem:[%s1365 + $0x168] sm:$0xff]
        %v1412 = vld [vmem:[%s1365 + $0x170] sm:$0xff]
        %v1413 = vld [vmem:[%s1365 + $0x178] sm:$0xff]
        %v1414 = vpack.c.bf16 %v1369, %v1366
        %v1415 = vpack.c.bf16 %v1370, %v1367
        %v1416 = vpack.c.bf16 %v1371, %v1368
        %v1417 = vpack.c.bf16 %v1375, %v1372
        %v1418 = vpack.c.bf16 %v1376, %v1373
        %v1419 = vpack.c.bf16 %v1377, %v1374
        %v1420 = vpack.c.bf16 %v1381, %v1378
        %v1421 = vpack.c.bf16 %v1382, %v1379
        %v1422 = vpack.c.bf16 %v1383, %v1380
        %v1423 = vpack.c.bf16 %v1387, %v1384
        %v1424 = vpack.c.bf16 %v1388, %v1385
        %v1425 = vpack.c.bf16 %v1389, %v1386
        %v1426 = vpack.c.bf16 %v1393, %v1390
        %v1427 = vpack.c.bf16 %v1394, %v1391
        %v1428 = vpack.c.bf16 %v1395, %v1392
        %v1429 = vpack.c.bf16 %v1399, %v1396
        %v1430 = vpack.c.bf16 %v1400, %v1397
        %v1431 = vpack.c.bf16 %v1401, %v1398
        %v1432 = vpack.c.bf16 %v1405, %v1402
        %v1433 = vpack.c.bf16 %v1406, %v1403
        %v1434 = vpack.c.bf16 %v1407, %v1404
        %v1435 = vpack.c.bf16 %v1411, %v1408
        %v1436 = vpack.c.bf16 %v1412, %v1409
        %v1437 = vpack.c.bf16 %v1413, %v1410
        %s1438 = scalar_lea.vmem %s1, 384
        %v1439 = vld [vmem:[%s1438] sm:$0xf]
        %v1440 = vld [vmem:[%s1438 + $0x4] sm:$0xf]
        %v1441 = vld [vmem:[%s1438 + $0x8] sm:$0xf]
        %v1442 = vld [vmem:[%s1438 + $0xc] sm:$0xf]
        %v1443 = vld [vmem:[%s1438 + $0x10] sm:$0xf]
        %v1444 = vld [vmem:[%s1438 + $0x14] sm:$0xf]
        %v1445 = vld [vmem:[%s1438 + $0x18] sm:$0xf]
        %v1446 = vld [vmem:[%s1438 + $0x1c] sm:$0xf]
        %v1447 = vld [vmem:[%s1438 + $0x20] sm:$0xf]
        %v1448 = vld [vmem:[%s1438 + $0x24] sm:$0xf]
        %v1449 = vld [vmem:[%s1438 + $0x28] sm:$0xf]
        %v1450 = vld [vmem:[%s1438 + $0x2c] sm:$0xf]
        %v1451 = vld [vmem:[%s1438 + $0x30] sm:$0xf]
        %v1452 = vld [vmem:[%s1438 + $0x34] sm:$0xf]
        %v1453 = vld [vmem:[%s1438 + $0x38] sm:$0xf]
        %v1454 = vld [vmem:[%s1438 + $0x3c] sm:$0xf]
        %v1455 = vld [vmem:[%s1438 + $0x40] sm:$0xf]
        %v1456 = vld [vmem:[%s1438 + $0x44] sm:$0xf]
        %v1457 = vld [vmem:[%s1438 + $0x48] sm:$0xf]
        %v1458 = vld [vmem:[%s1438 + $0x4c] sm:$0xf]
        %v1459 = vld [vmem:[%s1438 + $0x50] sm:$0xf]
        %v1460 = vld [vmem:[%s1438 + $0x54] sm:$0xf]
        %v1461 = vld [vmem:[%s1438 + $0x58] sm:$0xf]
        %v1462 = vld [vmem:[%s1438 + $0x5c] sm:$0xf]
        %v1463 = vld [vmem:[%s1438 + $0x60] sm:$0xf]
        %v1464 = vld [vmem:[%s1438 + $0x64] sm:$0xf]
        %v1465 = vld [vmem:[%s1438 + $0x68] sm:$0xf]
        %v1466 = vld [vmem:[%s1438 + $0x6c] sm:$0xf]
        %v1467 = vld [vmem:[%s1438 + $0x70] sm:$0xf]
        %v1468 = vld [vmem:[%s1438 + $0x74] sm:$0xf]
        %v1469 = vld [vmem:[%s1438 + $0x78] sm:$0xf]
        %v1470 = vld [vmem:[%s1438 + $0x7c] sm:$0xf]
        %v1471 = vld [vmem:[%s1438 + $0x80] sm:$0xf]
        %v1472 = vld [vmem:[%s1438 + $0x84] sm:$0xf]
        %v1473 = vld [vmem:[%s1438 + $0x88] sm:$0xf]
        %v1474 = vld [vmem:[%s1438 + $0x8c] sm:$0xf]
        %v1475 = vld [vmem:[%s1438 + $0x90] sm:$0xf]
        %v1476 = vld [vmem:[%s1438 + $0x94] sm:$0xf]
        %v1477 = vld [vmem:[%s1438 + $0x98] sm:$0xf]
        %v1478 = vld [vmem:[%s1438 + $0x9c] sm:$0xf]
        %v1479 = vld [vmem:[%s1438 + $0xa0] sm:$0xf]
        %v1480 = vld [vmem:[%s1438 + $0xa4] sm:$0xf]
        %v1481 = vld [vmem:[%s1438 + $0xa8] sm:$0xf]
        %v1482 = vld [vmem:[%s1438 + $0xac] sm:$0xf]
        %v1483 = vld [vmem:[%s1438 + $0xb0] sm:$0xf]
        %v1484 = vld [vmem:[%s1438 + $0xb4] sm:$0xf]
        %v1485 = vld [vmem:[%s1438 + $0xb8] sm:$0xf]
        %v1486 = vld [vmem:[%s1438 + $0xbc] sm:$0xf]
        %v1535 = vunpack.c.l.b16 %v1439
        %v1536 = vunpack.c.l.b16 %v1440
        %v1537 = vunpack.c.l.b16 %v1441
        %v1538 = vunpack.c.l.b16 %v1442
        %v1539 = vunpack.c.l.b16 %v1443
        %v1540 = vunpack.c.l.b16 %v1444
        %v1541 = vunpack.c.l.b16 %v1445
        %v1542 = vunpack.c.l.b16 %v1446
        %v1543 = vunpack.c.l.b16 %v1447
        %v1544 = vunpack.c.l.b16 %v1448
        %v1545 = vunpack.c.l.b16 %v1449
        %v1546 = vunpack.c.l.b16 %v1450
        %v1547 = vunpack.c.l.b16 %v1451
        %v1548 = vunpack.c.l.b16 %v1452
        %v1549 = vunpack.c.l.b16 %v1453
        %v1550 = vunpack.c.l.b16 %v1454
        %v1551 = vunpack.c.l.b16 %v1455
        %v1552 = vunpack.c.l.b16 %v1456
        %v1553 = vunpack.c.l.b16 %v1457
        %v1554 = vunpack.c.l.b16 %v1458
        %v1555 = vunpack.c.l.b16 %v1459
        %v1556 = vunpack.c.l.b16 %v1460
        %v1557 = vunpack.c.l.b16 %v1461
        %v1558 = vunpack.c.l.b16 %v1462
        %v1559 = vunpack.c.l.b16 %v1463
        %v1560 = vunpack.c.l.b16 %v1464
        %v1561 = vunpack.c.l.b16 %v1465
        %v1562 = vunpack.c.l.b16 %v1466
        %v1563 = vunpack.c.l.b16 %v1467
        %v1564 = vunpack.c.l.b16 %v1468
        %v1565 = vunpack.c.l.b16 %v1469
        %v1566 = vunpack.c.l.b16 %v1470
        %v1567 = vunpack.c.l.b16 %v1471
        %v1568 = vunpack.c.l.b16 %v1472
        %v1569 = vunpack.c.l.b16 %v1473
        %v1570 = vunpack.c.l.b16 %v1474
        %v1571 = vunpack.c.l.b16 %v1475
        %v1572 = vunpack.c.l.b16 %v1476
        %v1573 = vunpack.c.l.b16 %v1477
        %v1574 = vunpack.c.l.b16 %v1478
        %v1575 = vunpack.c.l.b16 %v1479
        %v1576 = vunpack.c.l.b16 %v1480
        %v1577 = vunpack.c.l.b16 %v1481
        %v1578 = vunpack.c.l.b16 %v1482
        %v1579 = vunpack.c.l.b16 %v1483
        %v1580 = vunpack.c.l.b16 %v1484
        %v1581 = vunpack.c.l.b16 %v1485
        %v1582 = vunpack.c.l.b16 %v1486
        %v1583 = vpack.c.b16 %v1536, %v1535
        %v1584 = vpack.c.b16 %v1538, %v1537
        %v1585 = vpack.c.b16 %v1540, %v1539
        %v1586 = vpack.c.b16 %v1542, %v1541
        %v1587 = vpack.c.b16 %v1544, %v1543
        %v1588 = vpack.c.b16 %v1546, %v1545
        %v1589 = vpack.c.b16 %v1548, %v1547
        %v1590 = vpack.c.b16 %v1550, %v1549
        %v1591 = vpack.c.b16 %v1552, %v1551
        %v1592 = vpack.c.b16 %v1554, %v1553
        %v1593 = vpack.c.b16 %v1556, %v1555
        %v1594 = vpack.c.b16 %v1558, %v1557
        %v1595 = vpack.c.b16 %v1560, %v1559
        %v1596 = vpack.c.b16 %v1562, %v1561
        %v1597 = vpack.c.b16 %v1564, %v1563
        %v1598 = vpack.c.b16 %v1566, %v1565
        %v1599 = vpack.c.b16 %v1568, %v1567
        %v1600 = vpack.c.b16 %v1570, %v1569
        %v1601 = vpack.c.b16 %v1572, %v1571
        %v1602 = vpack.c.b16 %v1574, %v1573
        %v1603 = vpack.c.b16 %v1576, %v1575
        %v1604 = vpack.c.b16 %v1578, %v1577
        %v1605 = vpack.c.b16 %v1580, %v1579
        %v1606 = vpack.c.b16 %v1582, %v1581
        %1631 = vmatpush.bf16.msra.mxu0 %v1590
        %1632 = vmatpush.bf16.msra.mxu0 %v1589
        %1633 = vmatpush.bf16.msra.mxu0 %v1588
        %1634 = vmatpush.bf16.msra.mxu0 %v1587
        %1635 = vmatpush.bf16.msra.mxu0 %v1586
        %1636 = vmatpush.bf16.msra.mxu0 %v1585
        %1637 = vmatpush.bf16.msra.mxu0 %v1584
        %1638 = vmatpush.bf16.msra.mxu0 %v1583
        %1639 = vmatmul.bf16.gmra.mxu0 %v1414
        %v1640 = vpop.f32.mrf.mxu0
        %v1641 = vadd.f32 0.0, %v1640
        %v1642 = vpop.f32.mrf.mxu0
        %v1643 = vadd.f32 0.0, %v1642
        %1644 = vmatmul.bf16.gmra.mxu0 %v1417
        %v1645 = vpop.f32.mrf.mxu0
        %v1646 = vadd.f32 0.0, %v1645
        %v1647 = vpop.f32.mrf.mxu0
        %v1648 = vadd.f32 0.0, %v1647
        %1649 = vmatmul.bf16.gmra.mxu0 %v1420
        %v1650 = vpop.f32.mrf.mxu0
        %v1651 = vadd.f32 0.0, %v1650
        %v1652 = vpop.f32.mrf.mxu0
        %v1653 = vadd.f32 0.0, %v1652
        %1654 = vmatmul.bf16.gmra.mxu0 %v1423
        %v1655 = vpop.f32.mrf.mxu0
        %v1656 = vadd.f32 0.0, %v1655
        %v1657 = vpop.f32.mrf.mxu0
        %v1658 = vadd.f32 0.0, %v1657
        %1659 = vmatmul.bf16.gmra.mxu0 %v1426
        %v1660 = vpop.f32.mrf.mxu0
        %v1661 = vadd.f32 0.0, %v1660
        %v1662 = vpop.f32.mrf.mxu0
        %v1663 = vadd.f32 0.0, %v1662
        %1664 = vmatmul.bf16.gmra.mxu0 %v1429
        %v1665 = vpop.f32.mrf.mxu0
        %v1666 = vadd.f32 0.0, %v1665
        %v1667 = vpop.f32.mrf.mxu0
        %v1668 = vadd.f32 0.0, %v1667
        %1669 = vmatmul.bf16.gmra.mxu0 %v1432
        %v1670 = vpop.f32.mrf.mxu0
        %v1671 = vadd.f32 0.0, %v1670
        %v1672 = vpop.f32.mrf.mxu0
        %v1673 = vadd.f32 0.0, %v1672
        %1674 = vmatmul.bf16.gmra.mxu0 %v1435
        %v1675 = vpop.f32.mrf.mxu0
        %v1676 = vadd.f32 0.0, %v1675
        %v1677 = vpop.f32.mrf.mxu0
        %v1678 = vadd.f32 0.0, %v1677
        %1679 = vdwg.mxu0
        %1680 = vmatpush.bf16.msra.mxu0 %v1598
        %1681 = vmatpush.bf16.msra.mxu0 %v1597
        %1682 = vmatpush.bf16.msra.mxu0 %v1596
        %1683 = vmatpush.bf16.msra.mxu0 %v1595
        %1684 = vmatpush.bf16.msra.mxu0 %v1594
        %1685 = vmatpush.bf16.msra.mxu0 %v1593
        %1686 = vmatpush.bf16.msra.mxu0 %v1592
        %1687 = vmatpush.bf16.msra.mxu0 %v1591
        %1688 = vmatmul.bf16.gmra.mxu0 %v1415
        %v1689 = vpop.f32.mrf.mxu0
        %v1690 = vadd.f32 %v1641, %v1689
        %v1691 = vpop.f32.mrf.mxu0
        %v1692 = vadd.f32 %v1643, %v1691
        %1693 = vmatmul.bf16.gmra.mxu0 %v1418
        %v1694 = vpop.f32.mrf.mxu0
        %v1695 = vadd.f32 %v1646, %v1694
        %v1696 = vpop.f32.mrf.mxu0
        %v1697 = vadd.f32 %v1648, %v1696
        %1698 = vmatmul.bf16.gmra.mxu0 %v1421
        %v1699 = vpop.f32.mrf.mxu0
        %v1700 = vadd.f32 %v1651, %v1699
        %v1701 = vpop.f32.mrf.mxu0
        %v1702 = vadd.f32 %v1653, %v1701
        %1703 = vmatmul.bf16.gmra.mxu0 %v1424
        %v1704 = vpop.f32.mrf.mxu0
        %v1705 = vadd.f32 %v1656, %v1704
        %v1706 = vpop.f32.mrf.mxu0
        %v1707 = vadd.f32 %v1658, %v1706
        %1708 = vmatmul.bf16.gmra.mxu0 %v1427
        %v1709 = vpop.f32.mrf.mxu0
        %v1710 = vadd.f32 %v1661, %v1709
        %v1711 = vpop.f32.mrf.mxu0
        %v1712 = vadd.f32 %v1663, %v1711
        %1713 = vmatmul.bf16.gmra.mxu0 %v1430
        %v1714 = vpop.f32.mrf.mxu0
        %v1715 = vadd.f32 %v1666, %v1714
        %v1716 = vpop.f32.mrf.mxu0
        %v1717 = vadd.f32 %v1668, %v1716
        %1718 = vmatmul.bf16.gmra.mxu0 %v1433
        %v1719 = vpop.f32.mrf.mxu0
        %v1720 = vadd.f32 %v1671, %v1719
        %v1721 = vpop.f32.mrf.mxu0
        %v1722 = vadd.f32 %v1673, %v1721
        %1723 = vmatmul.bf16.gmra.mxu0 %v1436
        %v1724 = vpop.f32.mrf.mxu0
        %v1725 = vadd.f32 %v1676, %v1724
        %v1726 = vpop.f32.mrf.mxu0
        %v1727 = vadd.f32 %v1678, %v1726
        %1728 = vdwg.mxu0
        %1729 = vmatpush.bf16.msra.mxu0 %v1606
        %1730 = vmatpush.bf16.msra.mxu0 %v1605
        %1731 = vmatpush.bf16.msra.mxu0 %v1604
        %1732 = vmatpush.bf16.msra.mxu0 %v1603
        %1733 = vmatpush.bf16.msra.mxu0 %v1602
        %1734 = vmatpush.bf16.msra.mxu0 %v1601
        %1735 = vmatpush.bf16.msra.mxu0 %v1600
        %1736 = vmatpush.bf16.msra.mxu0 %v1599
        %1737 = vmatmul.bf16.gmra.mxu0 %v1416
        %v1738 = vpop.f32.mrf.mxu0
        %v1739 = vadd.f32 %v1690, %v1738
        %v1740 = vpop.f32.mrf.mxu0
        %v1741 = vadd.f32 %v1692, %v1740
        %1742 = vmatmul.bf16.gmra.mxu0 %v1419
        %v1743 = vpop.f32.mrf.mxu0
        %v1744 = vadd.f32 %v1695, %v1743
        %v1745 = vpop.f32.mrf.mxu0
        %v1746 = vadd.f32 %v1697, %v1745
        %1747 = vmatmul.bf16.gmra.mxu0 %v1422
        %v1748 = vpop.f32.mrf.mxu0
        %v1749 = vadd.f32 %v1700, %v1748
        %v1750 = vpop.f32.mrf.mxu0
        %v1751 = vadd.f32 %v1702, %v1750
        %1752 = vmatmul.bf16.gmra.mxu0 %v1425
        %v1753 = vpop.f32.mrf.mxu0
        %v1754 = vadd.f32 %v1705, %v1753
        %v1755 = vpop.f32.mrf.mxu0
        %v1756 = vadd.f32 %v1707, %v1755
        %1757 = vmatmul.bf16.gmra.mxu0 %v1428
        %v1758 = vpop.f32.mrf.mxu0
        %v1759 = vadd.f32 %v1710, %v1758
        %v1760 = vpop.f32.mrf.mxu0
        %v1761 = vadd.f32 %v1712, %v1760
        %1762 = vmatmul.bf16.gmra.mxu0 %v1431
        %v1763 = vpop.f32.mrf.mxu0
        %v1764 = vadd.f32 %v1715, %v1763
        %v1765 = vpop.f32.mrf.mxu0
        %v1766 = vadd.f32 %v1717, %v1765
        %1767 = vmatmul.bf16.gmra.mxu0 %v1434
        %v1768 = vpop.f32.mrf.mxu0
        %v1769 = vadd.f32 %v1720, %v1768
        %v1770 = vpop.f32.mrf.mxu0
        %v1771 = vadd.f32 %v1722, %v1770
        %1772 = vmatmul.bf16.gmra.mxu0 %v1437
        %v1773 = vpop.f32.mrf.mxu0
        %v1774 = vadd.f32 %v1725, %v1773
        %v1775 = vpop.f32.mrf.mxu0
        %v1776 = vadd.f32 %v1727, %v1775
        %1777 = vdwg.mxu0
        %v1778 = vadd.f32 %v1323, %v1739
        %v1779 = vadd.f32 %v1325, %v1741
        %v1780 = vadd.f32 %v1328, %v1744
        %v1781 = vadd.f32 %v1330, %v1746
        %v1782 = vadd.f32 %v1333, %v1749
        %v1783 = vadd.f32 %v1335, %v1751
        %v1784 = vadd.f32 %v1338, %v1754
        %v1785 = vadd.f32 %v1340, %v1756
        %v1786 = vadd.f32 %v1343, %v1759
        %v1787 = vadd.f32 %v1345, %v1761
        %v1788 = vadd.f32 %v1348, %v1764
        %v1789 = vadd.f32 %v1350, %v1766
        %v1790 = vadd.f32 %v1353, %v1769
        %v1791 = vadd.f32 %v1355, %v1771
        %v1792 = vadd.f32 %v1358, %v1774
        %v1793 = vadd.f32 %v1360, %v1776
        %v1794 = vld [vmem:[%s2] sm:$0x1]
        %v1796 = vperm.slane %v1794, 0
        %v1798 = vadd.f32 %v1778, %v1796
        %v1799 = vadd.f32 %v1779, %v1796
        %v1800 = vadd.f32 %v1780, %v1796
        %v1801 = vadd.f32 %v1781, %v1796
        %v1802 = vadd.f32 %v1782, %v1796
        %v1803 = vadd.f32 %v1783, %v1796
        %v1804 = vadd.f32 %v1784, %v1796
        %v1805 = vadd.f32 %v1785, %v1796
        %v1806 = vadd.f32 %v1786, %v1796
        %v1807 = vadd.f32 %v1787, %v1796
        %v1808 = vadd.f32 %v1788, %v1796
        %v1809 = vadd.f32 %v1789, %v1796
        %v1810 = vadd.f32 %v1790, %v1796
        %v1811 = vadd.f32 %v1791, %v1796
        %v1812 = vadd.f32 %v1792, %v1796
        %v1813 = vadd.f32 %v1793, %v1796
        %vm1814 = vcmp.gt.f32.partialorder %v1798, 0.0
        %vm1815 = vcmp.gt.f32.partialorder %v1799, 0.0
        %vm1816 = vcmp.gt.f32.partialorder %v1800, 0.0
        %vm1817 = vcmp.gt.f32.partialorder %v1801, 0.0
        %vm1818 = vcmp.gt.f32.partialorder %v1802, 0.0
        %vm1819 = vcmp.gt.f32.partialorder %v1803, 0.0
        %vm1820 = vcmp.gt.f32.partialorder %v1804, 0.0
        %vm1821 = vcmp.gt.f32.partialorder %v1805, 0.0
        %vm1822 = vcmp.gt.f32.partialorder %v1806, 0.0
        %vm1823 = vcmp.gt.f32.partialorder %v1807, 0.0
        %vm1824 = vcmp.gt.f32.partialorder %v1808, 0.0
        %vm1825 = vcmp.gt.f32.partialorder %v1809, 0.0
        %vm1826 = vcmp.gt.f32.partialorder %v1810, 0.0
        %vm1827 = vcmp.gt.f32.partialorder %v1811, 0.0
        %vm1828 = vcmp.gt.f32.partialorder %v1812, 0.0
        %vm1829 = vcmp.gt.f32.partialorder %v1813, 0.0
        %v1830 = vmul.f32 %v1798, 0.1
        %v1831 = vmul.f32 %v1799, 0.1
        %v1832 = vmul.f32 %v1800, 0.1
        %v1833 = vmul.f32 %v1801, 0.1
        %v1834 = vmul.f32 %v1802, 0.1
        %v1835 = vmul.f32 %v1803, 0.1
        %v1836 = vmul.f32 %v1804, 0.1
        %v1837 = vmul.f32 %v1805, 0.1
        %v1838 = vmul.f32 %v1806, 0.1
        %v1839 = vmul.f32 %v1807, 0.1
        %v1840 = vmul.f32 %v1808, 0.1
        %v1841 = vmul.f32 %v1809, 0.1
        %v1842 = vmul.f32 %v1810, 0.1
        %v1843 = vmul.f32 %v1811, 0.1
        %v1844 = vmul.f32 %v1812, 0.1
        %v1845 = vmul.f32 %v1813, 0.1
        %v1846 = vsel %vm1814, %v1798, %v1830
        %v1847 = vsel %vm1815, %v1799, %v1831
        %v1848 = vsel %vm1816, %v1800, %v1832
        %v1849 = vsel %vm1817, %v1801, %v1833
        %v1850 = vsel %vm1818, %v1802, %v1834
        %v1851 = vsel %vm1819, %v1803, %v1835
        %v1852 = vsel %vm1820, %v1804, %v1836
        %v1853 = vsel %vm1821, %v1805, %v1837
        %v1854 = vsel %vm1822, %v1806, %v1838
        %v1855 = vsel %vm1823, %v1807, %v1839
        %v1856 = vsel %vm1824, %v1808, %v1840
        %v1857 = vsel %vm1825, %v1809, %v1841
        %v1858 = vsel %vm1826, %v1810, %v1842
        %v1859 = vsel %vm1827, %v1811, %v1843
        %v1860 = vsel %vm1828, %v1812, %v1844
        %v1861 = vsel %vm1829, %v1813, %v1845
        %1862 = vst [vmem:[%s177] sm:$0xff] %v1846
        %1863 = vst [vmem:[%s177 + $0x8] sm:$0xff] %v1847
        %1864 = vst [vmem:[%s177 + $0x10] sm:$0xff] %v1848
        %1865 = vst [vmem:[%s177 + $0x18] sm:$0xff] %v1849
        %1866 = vst [vmem:[%s177 + $0x20] sm:$0xff] %v1850
        %1867 = vst [vmem:[%s177 + $0x28] sm:$0xff] %v1851
        %1868 = vst [vmem:[%s177 + $0x30] sm:$0xff] %v1852
        %1869 = vst [vmem:[%s177 + $0x38] sm:$0xff] %v1853
        %1870 = vst [vmem:[%s177 + $0x40] sm:$0xff] %v1854
        %1871 = vst [vmem:[%s177 + $0x48] sm:$0xff] %v1855
        %1872 = vst [vmem:[%s177 + $0x50] sm:$0xff] %v1856
        %1873 = vst [vmem:[%s177 + $0x58] sm:$0xff] %v1857
        %1874 = vst [vmem:[%s177 + $0x60] sm:$0xff] %v1858
        %1875 = vst [vmem:[%s177 + $0x68] sm:$0xff] %v1859
        %1876 = vst [vmem:[%s177 + $0x70] sm:$0xff] %v1860
        %1877 = vst [vmem:[%s177 + $0x78] sm:$0xff] %v1861
        %s1878 = sand.u32 %s107, 1
        %s1879 = scalar_lea.sflag [#allocation4], %s1878
        %s1880 = sand.u32 %s107, 1
        %s1881 = smul.addr %s1880, 128
        %s1882 = scalar_lea.vmem [#allocation3], %s1881
        // Predicated region
        $region37: #{asff_level2_forward.3} parent=31 // pred_check
          %p1883 = pneg %p117
        $region38: #{asff_level2_forward.3} parent=31 // pred_check_branch
          %1885 = sbr.rel (%p1883) target = $region40
        $region39: #{asff_level2_forward.3} parent=31 // pred_region
          %s1886 = smul.u32 8, %s22
          %1888 = vsyncadd %s1879, 0
          %s1889 = smul.addr %s1886, 2
          %s1890 = smul.addr %s21, 32
          %s1891 = sadd.s32 %s1889, %s1890
          %s1892 = smul.addr %s1891, 8
          %s1893 = scalar_lea.hbm %s3, %s1892
          %s1894 = sshll.u32 %s1882, 4
          %s1895 = int_to_ptr.vmem [resolvable:$true] %s1894
          %s1896 = sshll.u32 %s1893, 4
          %s1897 = int_to_ptr.hbm [resolvable:$true] %s1896
          %1902 = dma.vmem_to_hbm [thread:$0]  %s1895, 2048, %s1897, %s1879, 128, 128, 8
        $region40: #{asff_level2_forward.3} parent=31 // pred_fallthru
          _
      $region32: #{asff_level2_forward.3} parent=5 // pred_fallthru
        _
      %p1903 = scmp.le.s32.totalorder 2, %s12
      // Predicated region
      $region41: #{asff_level2_forward.3} parent=5 // pred_check
        %p1904 = pneg %p1903
      $region42: #{asff_level2_forward.3} parent=5 // pred_check_branch
        %1906 = sbr.rel (%p1904) target = $region44
      $region43: #{asff_level2_forward.3} parent=5 // pred_region
        %s1907 = ssub.s32 %s12, 2
        // Predicated region
        $region45: #{asff_level2_forward.3} parent=43 // pred_check
          %p1908 = pneg %p123
        $region46: #{asff_level2_forward.3} parent=43 // pred_check_branch
          %1910 = sbr.rel (%p1908) target = $region48
        $region47: #{asff_level2_forward.3} parent=43 // pred_region
          %s1911 = sand.u32 %s108, 1
          %s1912 = scalar_lea.sflag [#allocation4], %s1911
          %s1913 = sand.u32 %s108, 1
          %s1914 = smul.addr %s1913, 128
          %s1915 = scalar_lea.vmem [#allocation3], %s1914
          %1917 = dma.done %s1912, 2048
        $region48: #{asff_level2_forward.3} parent=43 // pred_fallthru
          _
      $region44: #{asff_level2_forward.3} parent=5 // pred_fallthru
        _
    $region6: #{asff_level2_forward.3} parent=1 // loop_footer
      %s16 = sadd.s32 1, %s12
    $region7: #{asff_level2_forward.3} parent=1 // loop_footer_branch
      %11 = sbr.rel target = $region3
    $region8: #{asff_level2_forward.3} parent=1 // loop_exit
      _
    %1918 = vsyncpa [#allocation4], 1
    %s1919 = scalar_lea.sflag [#allocation4], 1
    %1920 = vsyncpa %s1919, 1

</llo_original>
